<compile_context>
chip_gen: v5e
topology: v5e:2x2
jax: 0.10.0
libtpu: 0.0.40
codegen_flags: <defaults>
</compile_context>

<pallas_src>
import functools

import numpy as np
import jax
import jax.numpy as jnp
from jax import lax
from jax.experimental import pallas as pl
from jax.experimental.pallas import tpu as pltpu


def _round_up(x, m):
    return -(-x // m) * m


def _padded_bytes(shape, itemsize):
    """Generous VMEM size estimate with (8,128) padding of the minor dims."""
    shape = list(shape)
    if len(shape) == 1:
        shape = [1] + shape
    shape[-1] = _round_up(shape[-1], 128)
    shape[-2] = _round_up(shape[-2], 8)
    n = itemsize
    for d in shape:
        n *= d
    return n


def _residual_group_kernel(x_ref, w_ref, b_ref, m_ref, o_ref,
                           act_ref, cur_ref, *,
                           C, Wp, slab_rows, tile_rows, M,
                           n_resblocks, n_convs, out_conv, short_skip,
                           res_scale):
    """Whole ResidualGroup for one (batch, row-tile) slab in padded-flat layout.

    Layout: activations are (C, L) with L = slab_rows*Wp; lane q = r*Wp + c
    indexes the zero-padded slab.  A 3x3 tap (kh, kw) is a constant lane shift
    by (kh-1)*Wp + (kw-1), i.e. a static slice of the bf16 shadow act_ref.
    The slab carries n_convs halo rows per side; slab-edge garbage propagates
    one row inward per conv and never reaches the tile_rows rows written out.
    """
    L = slab_rows * Wp

    # Zero the lane margins unconditionally every grid step (NOT gated on
    # program_id == 0): under ("parallel","parallel") megacore sharding the
    # second core never sees program 0, and stale VMEM bits could be Inf/NaN
    # which would poison the border-mask multiply (inf * 0 = NaN).
    act_ref[:, :M] = jnp.zeros((C, M), act_ref.dtype)
    act_ref[:, M + L:] = jnp.zeros((C, M), act_ref.dtype)

    mask = m_ref[0]                        # (1, L): 1 inside image, 0 outside
    x = x_ref[0]                           # (C, L) f32 slab (with halo rows)
    cur_ref[...] = x                       # f32 residual stream
    act_ref[:, M:M + L] = x.astype(act_ref.dtype)   # bf16 conv-input shadow

    def conv(k):
        """3x3 same conv of the current bf16 shadow; returns f32 (C,L)+bias.

        Nine accumulated K=C MXU matmuls read lane-shifted slices of act_ref
        directly — no im2col materialization, so no (9C, L) store traffic.
        """
        acc = None
        for kh in range(3):
            for kw in range(3):
                off = (kh - 1) * Wp + (kw - 1)
                a = act_ref[:, M + off:M + off + L]        # (C, L) bf16 view
                d = jnp.dot(w_ref[k * 9 + kh * 3 + kw], a,
                            preferred_element_type=jnp.float32)
                acc = d if acc is None else acc + d
        return acc + b_ref[k]              # (C, L) + (C, 1)

    def resblock(i, carry):
        k0 = 2 * i
        y = conv(k0)
        y = jnp.maximum(y, 0.0) * mask     # relu + restore zero padding
        act_ref[:, M:M + L] = y.astype(act_ref.dtype)
        y = conv(k0 + 1)
        new = cur_ref[...] + res_scale * (y * mask)
        cur_ref[...] = new
        # Keep the bf16 shadow in sync so the next conv does not re-load and
        # re-cast the f32 residual separately.
        act_ref[:, M:M + L] = new.astype(act_ref.dtype)
        return carry

    # fori_loop (not Python unrolling) bounds vreg live ranges for deep
    # groups; weights/bias are indexed dynamically along their leading axis.
    lax.fori_loop(0, n_resblocks, resblock, 0)

    if out_conv:                           # trailing conv3x3 of the group
        final = conv(2 * n_resblocks) * mask
    else:
        final = cur_ref[...]
    if short_skip:                         # group skip connection
        final = final + x_ref[0]

    lo = n_convs * Wp                      # drop the top halo rows
    o_ref[0] = final[:, lo:lo + tile_rows * Wp].astype(o_ref.dtype)


def _choose_tile_rows(H, Wp, C, n_convs, vmem_cap):
    """Largest row tile whose per-tile working set fits ~1/3 of VMEM."""
    budget = vmem_cap // 3
    M = _round_up(Wp + 1, 128)
    best = min(H, 8)
    th = 8
    top = _round_up(H, 8)
    while th <= top:
        slab = th + 2 * n_convs
        need = (2 * _padded_bytes((C, slab * Wp), 4)      # x blocks
                + 2 * _padded_bytes((C, th * Wp), 4)      # out blocks
                + _padded_bytes((C, 2 * M + slab * Wp), 2)  # bf16 shadow
                + _padded_bytes((C, slab * Wp), 4))       # f32 residual
        if need <= budget:
            best = th
        th += 8
    return min(best, H)


def residual_group_pallas(x_nchw, w_taps, b_col, *, n_resblocks, out_conv,
                          short_skip, res_scale=1.0, tile_rows=None):
    """x_nchw: (N, C, H, W) like PyTorch.
    w_taps: (n_convs*9, C, C) bf16, row index k*9 + kh*3 + kw holding the
            (Cout, Cin) matrix of that tap (OIHW pre-packed on the host).
    b_col:  (n_convs, C, 1) f32.
    Returns NCHW output."""
    N, C, H, W = x_nchw.shape
    n_convs = 2 * n_resblocks + (1 if out_conv else 0)
    assert w_taps.shape == (n_convs * 9, C, C)
    assert b_col.shape == (n_convs, C, 1)
    Wp = W + 2
    # TODO(synk): for widths where W+2 is (almost) a multiple of 128, pad the
    # row stride to 128 so the kh row shifts become lane-aligned vreg copies.

    try:
        vmem_cap = int(pltpu.get_tpu_info().vmem_capacity_bytes)
    except Exception:                      # pragma: no cover - conservative
        vmem_cap = 64 * 2**20              # v7x lower bound

    # Pad channels to a multiple of 16 (bf16 sublane packing); padded
    # channels carry zero weights/bias/inputs so they stay exactly zero.
    Cp = max(16, _round_up(C, 16))
    if Cp != C:
        w_taps = jnp.pad(w_taps, ((0, 0), (0, Cp - C), (0, Cp - C)))
        b_col = jnp.pad(b_col, ((0, 0), (0, Cp - C), (0, 0)))

    if tile_rows is None:
        tile_rows = _choose_tile_rows(H, Wp, Cp, n_convs, vmem_cap)
    tile_rows = max(1, min(int(tile_rows), H))
    n_tiles = -(-H // tile_rows)
    slab_rows = tile_rows + 2 * n_convs
    L = slab_rows * Wp
    out_lanes = tile_rows * Wp
    M = _round_up(Wp + 1, 128)             # lane margin for the 9 tap shifts

    # ---- layout plumbing (wrapper side): padded-flat slabs with halo ------
    # TODO(synk): replace the host-side slab duplication with an in-kernel
    # manual DMA (memory_space=pl.ANY + make_async_copy) to avoid the
    # (1 + 2*n_convs/tile_rows)x input HBM duplication for very deep groups.
    pad_bot = n_tiles * tile_rows - H + n_convs
    x_pad = jnp.pad(x_nchw,
                    ((0, 0), (0, Cp - C), (n_convs, pad_bot), (1, 1)))
    slabs = [x_pad[:, :, t * tile_rows:t * tile_rows + slab_rows, :]
             for t in range(n_tiles)]
    x_slabs = jnp.stack(slabs, axis=1).reshape(N * n_tiles, Cp, L)

    # Per-tile interior mask (1 inside the HxW image, 0 on all padding).
    Hpad = n_tiles * tile_rows + 2 * n_convs
    rows = np.arange(Hpad)
    cols = np.arange(Wp)
    row_in = (rows >= n_convs) & (rows < n_convs + H)
    col_in = (cols >= 1) & (cols <= W)
    mask_full = (row_in[:, None] & col_in[None, :]).astype(np.float32)
    mask_tiles = np.stack(
        [mask_full[t * tile_rows:t * tile_rows + slab_rows].reshape(L)
         for t in range(n_tiles)], axis=0).reshape(n_tiles, 1, L)
    mask_tiles = jnp.asarray(mask_tiles)

    kernel = functools.partial(
        _residual_group_kernel, C=Cp, Wp=Wp, slab_rows=slab_rows,
        tile_rows=tile_rows, M=M, n_resblocks=n_resblocks, n_convs=n_convs,
        out_conv=out_conv, short_skip=short_skip, res_scale=res_scale)

    def vmem_needed(invariant_bufs):
        return (2 * _padded_bytes((Cp, L), 4)                     # x blocks
                + 2 * _padded_bytes((Cp, out_lanes), 4)           # out blocks
                + invariant_bufs * _padded_bytes((n_convs * 9, Cp, Cp), 2)
                + invariant_bufs * _padded_bytes((n_convs, Cp, 1), 4)
                + 2 * _padded_bytes((1, L), 4)                    # mask
                + _padded_bytes((Cp, 2 * M + L), 2)               # bf16 shadow
                + _padded_bytes((Cp, L), 4))                      # residual

    def build(single_buffer_invariants):
        inv = ({"pipeline_mode": pl.Buffered(1)}
               if single_buffer_invariants else {})
        need = vmem_needed(1 if single_buffer_invariants else 2)
        # Clamp the request to the real device capacity; the estimate already
        # counts the double-buffered blocks, so no extra 2x inflation.
        vmem_limit = int(min(vmem_cap - (2 << 20),
                             max(24 << 20, need + need // 4)))
        grid_spec = pltpu.PrefetchScalarGridSpec(
            num_scalar_prefetch=0,
            grid=(N, n_tiles),
            in_specs=[
                pl.BlockSpec((1, Cp, L),
                             lambda n, t: (n * n_tiles + t, 0, 0)),
                pl.BlockSpec((n_convs * 9, Cp, Cp),
                             lambda n, t: (0, 0, 0), **inv),
                pl.BlockSpec((n_convs, Cp, 1),
                             lambda n, t: (0, 0, 0), **inv),
                pl.BlockSpec((1, 1, L), lambda n, t: (t, 0, 0)),
            ],
            out_specs=pl.BlockSpec((1, Cp, out_lanes),
                                   lambda n, t: (n * n_tiles + t, 0, 0)),
            scratch_shapes=[
                pltpu.VMEM((Cp, 2 * M + L), jnp.bfloat16),  # bf16 act shadow
                pltpu.VMEM((Cp, L), jnp.float32),           # f32 residual
            ])
        return pl.pallas_call(
            kernel,
            out_shape=jax.ShapeDtypeStruct((N * n_tiles, Cp, out_lanes),
                                           x_nchw.dtype),
            grid_spec=grid_spec,
            compiler_params=pltpu.CompilerParams(
                dimension_semantics=("parallel", "parallel"),
                vmem_limit_bytes=vmem_limit))

    try:
        out = build(True)(x_slabs, w_taps, b_col, mask_tiles)
        out = jax.block_until_ready(out)
    except Exception:
        # Fallback if this JAX version rejects single-buffered (Buffered(1))
        # invariant inputs — identical numerics, default double-buffering.
        out = build(False)(x_slabs, w_taps, b_col, mask_tiles)

    # Reassemble: (N*n_tiles, Cp, tile_rows*Wp) -> NCHW, crop padding.
    out = out.reshape(N, n_tiles, Cp, tile_rows, Wp)
    out = jnp.transpose(out, (0, 2, 1, 3, 4)).reshape(
        N, Cp, n_tiles * tile_rows, Wp)
    return out[:, :C, :H, 1:W + 1]


# ----------------------- pure-JAX reference (NCHW) --------------------------
def _ref_conv3x3(x, w_oihw_k, b_k):
    # Mirror the kernel numerics: bf16 operands, f32 accumulation, f32 bias.
    out = lax.conv_general_dilated(
        x.astype(jnp.bfloat16), w_oihw_k.astype(jnp.bfloat16),
        window_strides=(1, 1), padding=((1, 1), (1, 1)),
        dimension_numbers=("NCHW", "OIHW", "NCHW"),
        preferred_element_type=jnp.float32)
    return out + b_k.reshape(1, -1, 1, 1)


def residual_group_ref(x, w_oihw, b, *, n_resblocks, out_conv, short_skip,
                       res_scale=1.0):
    cur = x
    k = 0
    for _ in range(n_resblocks):
        y = _ref_conv3x3(cur, w_oihw[k], b[k]); k += 1
        y = jnp.maximum(y, 0.0)
        y = _ref_conv3x3(y, w_oihw[k], b[k]); k += 1
        cur = cur + res_scale * y
    if out_conv:
        cur = _ref_conv3x3(cur, w_oihw[k], b[k]); k += 1
    if short_skip:
        cur = cur + x
    return cur


if __name__ == "__main__":
    # ResidualGroup('edsr_block', n_resblocks=2, planes=4,
    #               short_skip=True, out_conv=True)
    N, C, H, W = 2, 4, 16, 16
    n_resblocks = 2
    out_conv = True
    short_skip = True
    res_scale = 1.0
    n_convs = 2 * n_resblocks + (1 if out_conv else 0)

    key = jax.random.PRNGKey(0)
    kx, kw_, kb = jax.random.split(key, 3)
    x = jax.random.normal(kx, (N, C, H, W), jnp.float32)
    # PyTorch OIHW layout (n_convs, Cout, Cin, 3, 3), kaiming-ish init.
    w_oihw = jax.random.normal(kw_, (n_convs, C, C, 3, 3),
                               jnp.float32) * np.sqrt(2.0 / (9 * C))
    b = jax.random.normal(kb, (n_convs, C), jnp.float32) * 0.01

    # Pack weights per tap for the kernel: (n, O, I, kh, kw) -> (n, kh, kw, O, I)
    # -> (n*9, O, I), row index k*9 + kh*3 + kw, cast to bf16 on the host.
    w_taps = jnp.transpose(w_oihw, (0, 3, 4, 1, 2)).reshape(
        n_convs * 9, C, C).astype(jnp.bfloat16)
    b_col = b.reshape(n_convs, C, 1)

    # tile_rows=8 -> 2 spatial tiles, exercising the halo'd row tiling path.
    out = residual_group_pallas(x, w_taps, b_col,
                                n_resblocks=n_resblocks, out_conv=out_conv,
                                short_skip=short_skip, res_scale=res_scale,
                                tile_rows=8)
    out = jax.block_until_ready(out)

    ref = residual_group_ref(x, w_oihw, b, n_resblocks=n_resblocks,
                             out_conv=out_conv, short_skip=short_skip,
                             res_scale=res_scale)
    np.testing.assert_allclose(np.asarray(out), np.asarray(ref),
                               rtol=1e-2, atol=1e-2)
    print("KERNEL_OK")
</pallas_src>

<mosaic_0001>
module attributes {stable_mosaic.version = 11 : i64} {
  func.func @_residual_group_kernel(%arg0: i32, %arg1: i32, %arg2: memref<1x16x324xf32, #tpu.memory_space<vmem>>, %arg3: memref<45x16x16xbf16, #tpu.memory_space<vmem>>, %arg4: memref<5x16x1xf32, #tpu.memory_space<vmem>>, %arg5: memref<1x1x324xf32, #tpu.memory_space<vmem>>, %arg6: memref<1x16x144xf32, #tpu.memory_space<vmem>>, %arg7: memref<16x580xbf16, #tpu.memory_space<vmem>>, %arg8: memref<16x324xf32, #tpu.memory_space<vmem>>) attributes {dimension_semantics = [#tpu.dimension_semantics<parallel>, #tpu.dimension_semantics<parallel>], iteration_bounds = array<i64: 2, 2>, scalar_prefetch = 0 : i64, scratch_operands = 2 : i64, tpu.core_type = #tpu.core_type<tc>, window_params = [{transform_indices = @transform_0, window_bounds = array<i64: 1, 16, 324>}, {pipeline_mode = #tpu.pipeline_mode<synchronous>, transform_indices = @transform_1, window_bounds = array<i64: 45, 16, 16>}, {pipeline_mode = #tpu.pipeline_mode<synchronous>, transform_indices = @transform_2, window_bounds = array<i64: 5, 16, 1>}, {transform_indices = @transform_3, window_bounds = array<i64: 1, 1, 324>}, {transform_indices = @transform_4, window_bounds = array<i64: 1, 16, 144>}]} {
    %cst = arith.constant 0.000000e+00 : bf16
    %0 = vector.broadcast %cst : bf16 to vector<16x128xbf16>
    %c0 = arith.constant 0 : index
    %c0_0 = arith.constant 0 : index
    %1 = vector.load %arg7[%c0, %c0_0] : memref<16x580xbf16, #tpu.memory_space<vmem>>, vector<16x128xbf16>
    tpu.vector_store %arg7[%c0, %c0_0], %0 {strides = array<i32>} : memref<16x580xbf16, #tpu.memory_space<vmem>>, vector<16x128xbf16>,
    %cst_1 = arith.constant 0.000000e+00 : bf16
    %2 = vector.broadcast %cst_1 : bf16 to vector<16x128xbf16>
    %c0_2 = arith.constant 0 : index
    %c452 = arith.constant 452 : index
    %3 = vector.load %arg7[%c0_2, %c452] : memref<16x580xbf16, #tpu.memory_space<vmem>>, vector<16x128xbf16>
    tpu.vector_store %arg7[%c0_2, %c452], %2 {strides = array<i32>} : memref<16x580xbf16, #tpu.memory_space<vmem>>, vector<16x128xbf16>,
    %c0_3 = arith.constant 0 : index
    %c0_4 = arith.constant 0 : index
    %c0_5 = arith.constant 0 : index
    %4 = vector.load %arg5[%c0_3, %c0_4, %c0_5] : memref<1x1x324xf32, #tpu.memory_space<vmem>>, vector<1x1x324xf32>
    %5 = vector.shape_cast %4 : vector<1x1x324xf32> to vector<1x324xf32>
    %c0_6 = arith.constant 0 : index
    %c0_7 = arith.constant 0 : index
    %c0_8 = arith.constant 0 : index
    %6 = vector.load %arg2[%c0_6, %c0_7, %c0_8] : memref<1x16x324xf32, #tpu.memory_space<vmem>>, vector<1x16x324xf32>
    %7 = vector.shape_cast %6 : vector<1x16x324xf32> to vector<16x324xf32>
    %c0_9 = arith.constant 0 : index
    %c0_10 = arith.constant 0 : index
    %8 = vector.load %arg8[%c0_9, %c0_10] : memref<16x324xf32, #tpu.memory_space<vmem>>, vector<16x324xf32>
    tpu.vector_store %arg8[%c0_9, %c0_10], %7 {strides = array<i32>} : memref<16x324xf32, #tpu.memory_space<vmem>>, vector<16x324xf32>,
    %9 = arith.truncf %7 : vector<16x324xf32> to vector<16x324xbf16>
    %c0_11 = arith.constant 0 : index
    %c128 = arith.constant 128 : index
    %10 = vector.load %arg7[%c0_11, %c128] : memref<16x580xbf16, #tpu.memory_space<vmem>>, vector<16x324xbf16>
    tpu.vector_store %arg7[%c0_11, %c128], %9 {strides = array<i32>} : memref<16x580xbf16, #tpu.memory_space<vmem>>, vector<16x324xbf16>,
    %c0_i32 = arith.constant 0 : i32
    %c2_i32 = arith.constant 2 : i32
    %11 = arith.addi %c0_i32, %c2_i32 : i32
    %c1_i32 = arith.constant 1 : i32
    scf.for %arg9 = %c0_i32 to %11 step %c1_i32  : i32 {
      %c2_i32_58 = arith.constant 2 : i32
      %69 = arith.muli %c2_i32_58, %arg9 : i32
      %c0_59 = arith.constant 0 : index
      %c109_60 = arith.constant 109 : index
      %70 = vector.load %arg7[%c0_59, %c109_60] : memref<16x580xbf16, #tpu.memory_space<vmem>>, vector<16x324xbf16>
      %c9_i32 = arith.constant 9 : i32
      %71 = arith.muli %69, %c9_i32 : i32
      %c0_i32_61 = arith.constant 0 : i32
      %72 = arith.addi %71, %c0_i32_61 : i32
      %c0_i32_62 = arith.constant 0 : i32
      %73 = arith.addi %72, %c0_i32_62 : i32
      %74 = arith.index_cast %73 : i32 to index
      %c0_63 = arith.constant 0 : index
      %c0_64 = arith.constant 0 : index
      %75 = vector.load %arg3[%74, %c0_63, %c0_64] : memref<45x16x16xbf16, #tpu.memory_space<vmem>>, vector<1x16x16xbf16>
      %76 = vector.shape_cast %75 : vector<1x16x16xbf16> to vector<16x16xbf16>
      %cst_65 = arith.constant dense<0.000000e+00> : vector<16x324xf32>
      %77 = tpu.matmul %76, %70, %cst_65 {dimension_numbers = #tpu.dot_dimension_numbers<[1], [0], [0], [1], [0, 0, 1, 1], [], []>} : vector<16x16xbf16>, vector<16x324xbf16>, vector<16x324xf32> -> vector<16x324xf32>
      %c0_66 = arith.constant 0 : index
      %c110_67 = arith.constant 110 : index
      %78 = vector.load %arg7[%c0_66, %c110_67] : memref<16x580xbf16, #tpu.memory_space<vmem>>, vector<16x324xbf16>
      %c9_i32_68 = arith.constant 9 : i32
      %79 = arith.muli %69, %c9_i32_68 : i32
      %c0_i32_69 = arith.constant 0 : i32
      %80 = arith.addi %79, %c0_i32_69 : i32
      %c1_i32_70 = arith.constant 1 : i32
      %81 = arith.addi %80, %c1_i32_70 : i32
      %82 = arith.index_cast %81 : i32 to index
      %c0_71 = arith.constant 0 : index
      %c0_72 = arith.constant 0 : index
      %83 = vector.load %arg3[%82, %c0_71, %c0_72] : memref<45x16x16xbf16, #tpu.memory_space<vmem>>, vector<1x16x16xbf16>
      %84 = vector.shape_cast %83 : vector<1x16x16xbf16> to vector<16x16xbf16>
      %cst_73 = arith.constant dense<0.000000e+00> : vector<16x324xf32>
      %85 = tpu.matmul %84, %78, %cst_73 {dimension_numbers = #tpu.dot_dimension_numbers<[1], [0], [0], [1], [0, 0, 1, 1], [], []>} : vector<16x16xbf16>, vector<16x324xbf16>, vector<16x324xf32> -> vector<16x324xf32>
      %86 = arith.addf %77, %85 : vector<16x324xf32>
      %c0_74 = arith.constant 0 : index
      %c111_75 = arith.constant 111 : index
      %87 = vector.load %arg7[%c0_74, %c111_75] : memref<16x580xbf16, #tpu.memory_space<vmem>>, vector<16x324xbf16>
      %c9_i32_76 = arith.constant 9 : i32
      %88 = arith.muli %69, %c9_i32_76 : i32
      %c0_i32_77 = arith.constant 0 : i32
      %89 = arith.addi %88, %c0_i32_77 : i32
      %c2_i32_78 = arith.constant 2 : i32
      %90 = arith.addi %89, %c2_i32_78 : i32
      %91 = arith.index_cast %90 : i32 to index
      %c0_79 = arith.constant 0 : index
      %c0_80 = arith.constant 0 : index
      %92 = vector.load %arg3[%91, %c0_79, %c0_80] : memref<45x16x16xbf16, #tpu.memory_space<vmem>>, vector<1x16x16xbf16>
      %93 = vector.shape_cast %92 : vector<1x16x16xbf16> to vector<16x16xbf16>
      %cst_81 = arith.constant dense<0.000000e+00> : vector<16x324xf32>
      %94 = tpu.matmul %93, %87, %cst_81 {dimension_numbers = #tpu.dot_dimension_numbers<[1], [0], [0], [1], [0, 0, 1, 1], [], []>} : vector<16x16xbf16>, vector<16x324xbf16>, vector<16x324xf32> -> vector<16x324xf32>
      %95 = arith.addf %86, %94 : vector<16x324xf32>
      %c0_82 = arith.constant 0 : index
      %c127_83 = arith.constant 127 : index
      %96 = vector.load %arg7[%c0_82, %c127_83] : memref<16x580xbf16, #tpu.memory_space<vmem>>, vector<16x324xbf16>
      %c9_i32_84 = arith.constant 9 : i32
      %97 = arith.muli %69, %c9_i32_84 : i32
      %c3_i32 = arith.constant 3 : i32
      %98 = arith.addi %97, %c3_i32 : i32
      %c0_i32_85 = arith.constant 0 : i32
      %99 = arith.addi %98, %c0_i32_85 : i32
      %100 = arith.index_cast %99 : i32 to index
      %c0_86 = arith.constant 0 : index
      %c0_87 = arith.constant 0 : index
      %101 = vector.load %arg3[%100, %c0_86, %c0_87] : memref<45x16x16xbf16, #tpu.memory_space<vmem>>, vector<1x16x16xbf16>
      %102 = vector.shape_cast %101 : vector<1x16x16xbf16> to vector<16x16xbf16>
      %cst_88 = arith.constant dense<0.000000e+00> : vector<16x324xf32>
      %103 = tpu.matmul %102, %96, %cst_88 {dimension_numbers = #tpu.dot_dimension_numbers<[1], [0], [0], [1], [0, 0, 1, 1], [], []>} : vector<16x16xbf16>, vector<16x324xbf16>, vector<16x324xf32> -> vector<16x324xf32>
      %104 = arith.addf %95, %103 : vector<16x324xf32>
      %c0_89 = arith.constant 0 : index
      %c128_90 = arith.constant 128 : index
      %105 = vector.load %arg7[%c0_89, %c128_90] : memref<16x580xbf16, #tpu.memory_space<vmem>>, vector<16x324xbf16>
      %c9_i32_91 = arith.constant 9 : i32
      %106 = arith.muli %69, %c9_i32_91 : i32
      %c3_i32_92 = arith.constant 3 : i32
      %107 = arith.addi %106, %c3_i32_92 : i32
      %c1_i32_93 = arith.constant 1 : i32
      %108 = arith.addi %107, %c1_i32_93 : i32
      %109 = arith.index_cast %108 : i32 to index
      %c0_94 = arith.constant 0 : index
      %c0_95 = arith.constant 0 : index
      %110 = vector.load %arg3[%109, %c0_94, %c0_95] : memref<45x16x16xbf16, #tpu.memory_space<vmem>>, vector<1x16x16xbf16>
      %111 = vector.shape_cast %110 : vector<1x16x16xbf16> to vector<16x16xbf16>
      %cst_96 = arith.constant dense<0.000000e+00> : vector<16x324xf32>
      %112 = tpu.matmul %111, %105, %cst_96 {dimension_numbers = #tpu.dot_dimension_numbers<[1], [0], [0], [1], [0, 0, 1, 1], [], []>} : vector<16x16xbf16>, vector<16x324xbf16>, vector<16x324xf32> -> vector<16x324xf32>
      %113 = arith.addf %104, %112 : vector<16x324xf32>
      %c0_97 = arith.constant 0 : index
      %c129_98 = arith.constant 129 : index
      %114 = vector.load %arg7[%c0_97, %c129_98] : memref<16x580xbf16, #tpu.memory_space<vmem>>, vector<16x324xbf16>
      %c9_i32_99 = arith.constant 9 : i32
      %115 = arith.muli %69, %c9_i32_99 : i32
      %c3_i32_100 = arith.constant 3 : i32
      %116 = arith.addi %115, %c3_i32_100 : i32
      %c2_i32_101 = arith.constant 2 : i32
      %117 = arith.addi %116, %c2_i32_101 : i32
      %118 = arith.index_cast %117 : i32 to index
      %c0_102 = arith.constant 0 : index
      %c0_103 = arith.constant 0 : index
      %119 = vector.load %arg3[%118, %c0_102, %c0_103] : memref<45x16x16xbf16, #tpu.memory_space<vmem>>, vector<1x16x16xbf16>
      %120 = vector.shape_cast %119 : vector<1x16x16xbf16> to vector<16x16xbf16>
      %cst_104 = arith.constant dense<0.000000e+00> : vector<16x324xf32>
      %121 = tpu.matmul %120, %114, %cst_104 {dimension_numbers = #tpu.dot_dimension_numbers<[1], [0], [0], [1], [0, 0, 1, 1], [], []>} : vector<16x16xbf16>, vector<16x324xbf16>, vector<16x324xf32> -> vector<16x324xf32>
      %122 = arith.addf %113, %121 : vector<16x324xf32>
      %c0_105 = arith.constant 0 : index
      %c145_106 = arith.constant 145 : index
      %123 = vector.load %arg7[%c0_105, %c145_106] : memref<16x580xbf16, #tpu.memory_space<vmem>>, vector<16x324xbf16>
      %c9_i32_107 = arith.constant 9 : i32
      %124 = arith.muli %69, %c9_i32_107 : i32
      %c6_i32 = arith.constant 6 : i32
      %125 = arith.addi %124, %c6_i32 : i32
      %c0_i32_108 = arith.constant 0 : i32
      %126 = arith.addi %125, %c0_i32_108 : i32
      %127 = arith.index_cast %126 : i32 to index
      %c0_109 = arith.constant 0 : index
      %c0_110 = arith.constant 0 : index
      %128 = vector.load %arg3[%127, %c0_109, %c0_110] : memref<45x16x16xbf16, #tpu.memory_space<vmem>>, vector<1x16x16xbf16>
      %129 = vector.shape_cast %128 : vector<1x16x16xbf16> to vector<16x16xbf16>
      %cst_111 = arith.constant dense<0.000000e+00> : vector<16x324xf32>
      %130 = tpu.matmul %129, %123, %cst_111 {dimension_numbers = #tpu.dot_dimension_numbers<[1], [0], [0], [1], [0, 0, 1, 1], [], []>} : vector<16x16xbf16>, vector<16x324xbf16>, vector<16x324xf32> -> vector<16x324xf32>
      %131 = arith.addf %122, %130 : vector<16x324xf32>
      %c0_112 = arith.constant 0 : index
      %c146_113 = arith.constant 146 : index
      %132 = vector.load %arg7[%c0_112, %c146_113] : memref<16x580xbf16, #tpu.memory_space<vmem>>, vector<16x324xbf16>
      %c9_i32_114 = arith.constant 9 : i32
      %133 = arith.muli %69, %c9_i32_114 : i32
      %c6_i32_115 = arith.constant 6 : i32
      %134 = arith.addi %133, %c6_i32_115 : i32
      %c1_i32_116 = arith.constant 1 : i32
      %135 = arith.addi %134, %c1_i32_116 : i32
      %136 = arith.index_cast %135 : i32 to index
      %c0_117 = arith.constant 0 : index
      %c0_118 = arith.constant 0 : index
      %137 = vector.load %arg3[%136, %c0_117, %c0_118] : memref<45x16x16xbf16, #tpu.memory_space<vmem>>, vector<1x16x16xbf16>
      %138 = vector.shape_cast %137 : vector<1x16x16xbf16> to vector<16x16xbf16>
      %cst_119 = arith.constant dense<0.000000e+00> : vector<16x324xf32>
      %139 = tpu.matmul %138, %132, %cst_119 {dimension_numbers = #tpu.dot_dimension_numbers<[1], [0], [0], [1], [0, 0, 1, 1], [], []>} : vector<16x16xbf16>, vector<16x324xbf16>, vector<16x324xf32> -> vector<16x324xf32>
      %140 = arith.addf %131, %139 : vector<16x324xf32>
      %c0_120 = arith.constant 0 : index
      %c147_121 = arith.constant 147 : index
      %141 = vector.load %arg7[%c0_120, %c147_121] : memref<16x580xbf16, #tpu.memory_space<vmem>>, vector<16x324xbf16>
      %c9_i32_122 = arith.constant 9 : i32
      %142 = arith.muli %69, %c9_i32_122 : i32
      %c6_i32_123 = arith.constant 6 : i32
      %143 = arith.addi %142, %c6_i32_123 : i32
      %c2_i32_124 = arith.constant 2 : i32
      %144 = arith.addi %143, %c2_i32_124 : i32
      %145 = arith.index_cast %144 : i32 to index
      %c0_125 = arith.constant 0 : index
      %c0_126 = arith.constant 0 : index
      %146 = vector.load %arg3[%145, %c0_125, %c0_126] : memref<45x16x16xbf16, #tpu.memory_space<vmem>>, vector<1x16x16xbf16>
      %147 = vector.shape_cast %146 : vector<1x16x16xbf16> to vector<16x16xbf16>
      %cst_127 = arith.constant dense<0.000000e+00> : vector<16x324xf32>
      %148 = tpu.matmul %147, %141, %cst_127 {dimension_numbers = #tpu.dot_dimension_numbers<[1], [0], [0], [1], [0, 0, 1, 1], [], []>} : vector<16x16xbf16>, vector<16x324xbf16>, vector<16x324xf32> -> vector<16x324xf32>
      %149 = arith.addf %140, %148 : vector<16x324xf32>
      %150 = arith.index_cast %69 : i32 to index
      %c0_128 = arith.constant 0 : index
      %c0_129 = arith.constant 0 : index
      %151 = vector.load %arg4[%150, %c0_128, %c0_129] : memref<5x16x1xf32, #tpu.memory_space<vmem>>, vector<1x16x1xf32>
      %152 = vector.shape_cast %151 : vector<1x16x1xf32> to vector<16x1xf32>
      %153 = vector.broadcast %152 : vector<16x1xf32> to vector<16x324xf32>
      %154 = arith.addf %149, %153 : vector<16x324xf32>
      %cst_130 = arith.constant 0.000000e+00 : f32
      %155 = vector.broadcast %cst_130 : f32 to vector<16x324xf32>
      %156 = arith.maximumf %154, %155 : vector<16x324xf32>
      %157 = vector.broadcast %5 : vector<1x324xf32> to vector<16x324xf32>
      %158 = arith.mulf %156, %157 : vector<16x324xf32>
      %159 = arith.truncf %158 : vector<16x324xf32> to vector<16x324xbf16>
      %c0_131 = arith.constant 0 : index
      %c128_132 = arith.constant 128 : index
      %160 = vector.load %arg7[%c0_131, %c128_132] : memref<16x580xbf16, #tpu.memory_space<vmem>>, vector<16x324xbf16>
      tpu.vector_store %arg7[%c0_131, %c128_132], %159 {strides = array<i32>} : memref<16x580xbf16, #tpu.memory_space<vmem>>, vector<16x324xbf16>,
      %c1_i32_133 = arith.constant 1 : i32
      %161 = arith.addi %69, %c1_i32_133 : i32
      %c0_134 = arith.constant 0 : index
      %c109_135 = arith.constant 109 : index
      %162 = vector.load %arg7[%c0_134, %c109_135] : memref<16x580xbf16, #tpu.memory_space<vmem>>, vector<16x324xbf16>
      %c9_i32_136 = arith.constant 9 : i32
      %163 = arith.muli %161, %c9_i32_136 : i32
      %c0_i32_137 = arith.constant 0 : i32
      %164 = arith.addi %163, %c0_i32_137 : i32
      %c0_i32_138 = arith.constant 0 : i32
      %165 = arith.addi %164, %c0_i32_138 : i32
      %166 = arith.index_cast %165 : i32 to index
      %c0_139 = arith.constant 0 : index
      %c0_140 = arith.constant 0 : index
      %167 = vector.load %arg3[%166, %c0_139, %c0_140] : memref<45x16x16xbf16, #tpu.memory_space<vmem>>, vector<1x16x16xbf16>
      %168 = vector.shape_cast %167 : vector<1x16x16xbf16> to vector<16x16xbf16>
      %cst_141 = arith.constant dense<0.000000e+00> : vector<16x324xf32>
      %169 = tpu.matmul %168, %162, %cst_141 {dimension_numbers = #tpu.dot_dimension_numbers<[1], [0], [0], [1], [0, 0, 1, 1], [], []>} : vector<16x16xbf16>, vector<16x324xbf16>, vector<16x324xf32> -> vector<16x324xf32>
      %c0_142 = arith.constant 0 : index
      %c110_143 = arith.constant 110 : index
      %170 = vector.load %arg7[%c0_142, %c110_143] : memref<16x580xbf16, #tpu.memory_space<vmem>>, vector<16x324xbf16>
      %c9_i32_144 = arith.constant 9 : i32
      %171 = arith.muli %161, %c9_i32_144 : i32
      %c0_i32_145 = arith.constant 0 : i32
      %172 = arith.addi %171, %c0_i32_145 : i32
      %c1_i32_146 = arith.constant 1 : i32
      %173 = arith.addi %172, %c1_i32_146 : i32
      %174 = arith.index_cast %173 : i32 to index
      %c0_147 = arith.constant 0 : index
      %c0_148 = arith.constant 0 : index
      %175 = vector.load %arg3[%174, %c0_147, %c0_148] : memref<45x16x16xbf16, #tpu.memory_space<vmem>>, vector<1x16x16xbf16>
      %176 = vector.shape_cast %175 : vector<1x16x16xbf16> to vector<16x16xbf16>
      %cst_149 = arith.constant dense<0.000000e+00> : vector<16x324xf32>
      %177 = tpu.matmul %176, %170, %cst_149 {dimension_numbers = #tpu.dot_dimension_numbers<[1], [0], [0], [1], [0, 0, 1, 1], [], []>} : vector<16x16xbf16>, vector<16x324xbf16>, vector<16x324xf32> -> vector<16x324xf32>
      %178 = arith.addf %169, %177 : vector<16x324xf32>
      %c0_150 = arith.constant 0 : index
      %c111_151 = arith.constant 111 : index
      %179 = vector.load %arg7[%c0_150, %c111_151] : memref<16x580xbf16, #tpu.memory_space<vmem>>, vector<16x324xbf16>
      %c9_i32_152 = arith.constant 9 : i32
      %180 = arith.muli %161, %c9_i32_152 : i32
      %c0_i32_153 = arith.constant 0 : i32
      %181 = arith.addi %180, %c0_i32_153 : i32
      %c2_i32_154 = arith.constant 2 : i32
      %182 = arith.addi %181, %c2_i32_154 : i32
      %183 = arith.index_cast %182 : i32 to index
      %c0_155 = arith.constant 0 : index
      %c0_156 = arith.constant 0 : index
      %184 = vector.load %arg3[%183, %c0_155, %c0_156] : memref<45x16x16xbf16, #tpu.memory_space<vmem>>, vector<1x16x16xbf16>
      %185 = vector.shape_cast %184 : vector<1x16x16xbf16> to vector<16x16xbf16>
      %cst_157 = arith.constant dense<0.000000e+00> : vector<16x324xf32>
      %186 = tpu.matmul %185, %179, %cst_157 {dimension_numbers = #tpu.dot_dimension_numbers<[1], [0], [0], [1], [0, 0, 1, 1], [], []>} : vector<16x16xbf16>, vector<16x324xbf16>, vector<16x324xf32> -> vector<16x324xf32>
      %187 = arith.addf %178, %186 : vector<16x324xf32>
      %c0_158 = arith.constant 0 : index
      %c127_159 = arith.constant 127 : index
      %188 = vector.load %arg7[%c0_158, %c127_159] : memref<16x580xbf16, #tpu.memory_space<vmem>>, vector<16x324xbf16>
      %c9_i32_160 = arith.constant 9 : i32
      %189 = arith.muli %161, %c9_i32_160 : i32
      %c3_i32_161 = arith.constant 3 : i32
      %190 = arith.addi %189, %c3_i32_161 : i32
      %c0_i32_162 = arith.constant 0 : i32
      %191 = arith.addi %190, %c0_i32_162 : i32
      %192 = arith.index_cast %191 : i32 to index
      %c0_163 = arith.constant 0 : index
      %c0_164 = arith.constant 0 : index
      %193 = vector.load %arg3[%192, %c0_163, %c0_164] : memref<45x16x16xbf16, #tpu.memory_space<vmem>>, vector<1x16x16xbf16>
      %194 = vector.shape_cast %193 : vector<1x16x16xbf16> to vector<16x16xbf16>
      %cst_165 = arith.constant dense<0.000000e+00> : vector<16x324xf32>
      %195 = tpu.matmul %194, %188, %cst_165 {dimension_numbers = #tpu.dot_dimension_numbers<[1], [0], [0], [1], [0, 0, 1, 1], [], []>} : vector<16x16xbf16>, vector<16x324xbf16>, vector<16x324xf32> -> vector<16x324xf32>
      %196 = arith.addf %187, %195 : vector<16x324xf32>
      %c0_166 = arith.constant 0 : index
      %c128_167 = arith.constant 128 : index
      %197 = vector.load %arg7[%c0_166, %c128_167] : memref<16x580xbf16, #tpu.memory_space<vmem>>, vector<16x324xbf16>
      %c9_i32_168 = arith.constant 9 : i32
      %198 = arith.muli %161, %c9_i32_168 : i32
      %c3_i32_169 = arith.constant 3 : i32
      %199 = arith.addi %198, %c3_i32_169 : i32
      %c1_i32_170 = arith.constant 1 : i32
      %200 = arith.addi %199, %c1_i32_170 : i32
      %201 = arith.index_cast %200 : i32 to index
      %c0_171 = arith.constant 0 : index
      %c0_172 = arith.constant 0 : index
      %202 = vector.load %arg3[%201, %c0_171, %c0_172] : memref<45x16x16xbf16, #tpu.memory_space<vmem>>, vector<1x16x16xbf16>
      %203 = vector.shape_cast %202 : vector<1x16x16xbf16> to vector<16x16xbf16>
      %cst_173 = arith.constant dense<0.000000e+00> : vector<16x324xf32>
      %204 = tpu.matmul %203, %197, %cst_173 {dimension_numbers = #tpu.dot_dimension_numbers<[1], [0], [0], [1], [0, 0, 1, 1], [], []>} : vector<16x16xbf16>, vector<16x324xbf16>, vector<16x324xf32> -> vector<16x324xf32>
      %205 = arith.addf %196, %204 : vector<16x324xf32>
      %c0_174 = arith.constant 0 : index
      %c129_175 = arith.constant 129 : index
      %206 = vector.load %arg7[%c0_174, %c129_175] : memref<16x580xbf16, #tpu.memory_space<vmem>>, vector<16x324xbf16>
      %c9_i32_176 = arith.constant 9 : i32
      %207 = arith.muli %161, %c9_i32_176 : i32
      %c3_i32_177 = arith.constant 3 : i32
      %208 = arith.addi %207, %c3_i32_177 : i32
      %c2_i32_178 = arith.constant 2 : i32
      %209 = arith.addi %208, %c2_i32_178 : i32
      %210 = arith.index_cast %209 : i32 to index
      %c0_179 = arith.constant 0 : index
      %c0_180 = arith.constant 0 : index
      %211 = vector.load %arg3[%210, %c0_179, %c0_180] : memref<45x16x16xbf16, #tpu.memory_space<vmem>>, vector<1x16x16xbf16>
      %212 = vector.shape_cast %211 : vector<1x16x16xbf16> to vector<16x16xbf16>
      %cst_181 = arith.constant dense<0.000000e+00> : vector<16x324xf32>
      %213 = tpu.matmul %212, %206, %cst_181 {dimension_numbers = #tpu.dot_dimension_numbers<[1], [0], [0], [1], [0, 0, 1, 1], [], []>} : vector<16x16xbf16>, vector<16x324xbf16>, vector<16x324xf32> -> vector<16x324xf32>
      %214 = arith.addf %205, %213 : vector<16x324xf32>
      %c0_182 = arith.constant 0 : index
      %c145_183 = arith.constant 145 : index
      %215 = vector.load %arg7[%c0_182, %c145_183] : memref<16x580xbf16, #tpu.memory_space<vmem>>, vector<16x324xbf16>
      %c9_i32_184 = arith.constant 9 : i32
      %216 = arith.muli %161, %c9_i32_184 : i32
      %c6_i32_185 = arith.constant 6 : i32
      %217 = arith.addi %216, %c6_i32_185 : i32
      %c0_i32_186 = arith.constant 0 : i32
      %218 = arith.addi %217, %c0_i32_186 : i32
      %219 = arith.index_cast %218 : i32 to index
      %c0_187 = arith.constant 0 : index
      %c0_188 = arith.constant 0 : index
      %220 = vector.load %arg3[%219, %c0_187, %c0_188] : memref<45x16x16xbf16, #tpu.memory_space<vmem>>, vector<1x16x16xbf16>
      %221 = vector.shape_cast %220 : vector<1x16x16xbf16> to vector<16x16xbf16>
      %cst_189 = arith.constant dense<0.000000e+00> : vector<16x324xf32>
      %222 = tpu.matmul %221, %215, %cst_189 {dimension_numbers = #tpu.dot_dimension_numbers<[1], [0], [0], [1], [0, 0, 1, 1], [], []>} : vector<16x16xbf16>, vector<16x324xbf16>, vector<16x324xf32> -> vector<16x324xf32>
      %223 = arith.addf %214, %222 : vector<16x324xf32>
      %c0_190 = arith.constant 0 : index
      %c146_191 = arith.constant 146 : index
      %224 = vector.load %arg7[%c0_190, %c146_191] : memref<16x580xbf16, #tpu.memory_space<vmem>>, vector<16x324xbf16>
      %c9_i32_192 = arith.constant 9 : i32
      %225 = arith.muli %161, %c9_i32_192 : i32
      %c6_i32_193 = arith.constant 6 : i32
      %226 = arith.addi %225, %c6_i32_193 : i32
      %c1_i32_194 = arith.constant 1 : i32
      %227 = arith.addi %226, %c1_i32_194 : i32
      %228 = arith.index_cast %227 : i32 to index
      %c0_195 = arith.constant 0 : index
      %c0_196 = arith.constant 0 : index
      %229 = vector.load %arg3[%228, %c0_195, %c0_196] : memref<45x16x16xbf16, #tpu.memory_space<vmem>>, vector<1x16x16xbf16>
      %230 = vector.shape_cast %229 : vector<1x16x16xbf16> to vector<16x16xbf16>
      %cst_197 = arith.constant dense<0.000000e+00> : vector<16x324xf32>
      %231 = tpu.matmul %230, %224, %cst_197 {dimension_numbers = #tpu.dot_dimension_numbers<[1], [0], [0], [1], [0, 0, 1, 1], [], []>} : vector<16x16xbf16>, vector<16x324xbf16>, vector<16x324xf32> -> vector<16x324xf32>
      %232 = arith.addf %223, %231 : vector<16x324xf32>
      %c0_198 = arith.constant 0 : index
      %c147_199 = arith.constant 147 : index
      %233 = vector.load %arg7[%c0_198, %c147_199] : memref<16x580xbf16, #tpu.memory_space<vmem>>, vector<16x324xbf16>
      %c9_i32_200 = arith.constant 9 : i32
      %234 = arith.muli %161, %c9_i32_200 : i32
      %c6_i32_201 = arith.constant 6 : i32
      %235 = arith.addi %234, %c6_i32_201 : i32
      %c2_i32_202 = arith.constant 2 : i32
      %236 = arith.addi %235, %c2_i32_202 : i32
      %237 = arith.index_cast %236 : i32 to index
      %c0_203 = arith.constant 0 : index
      %c0_204 = arith.constant 0 : index
      %238 = vector.load %arg3[%237, %c0_203, %c0_204] : memref<45x16x16xbf16, #tpu.memory_space<vmem>>, vector<1x16x16xbf16>
      %239 = vector.shape_cast %238 : vector<1x16x16xbf16> to vector<16x16xbf16>
      %cst_205 = arith.constant dense<0.000000e+00> : vector<16x324xf32>
      %240 = tpu.matmul %239, %233, %cst_205 {dimension_numbers = #tpu.dot_dimension_numbers<[1], [0], [0], [1], [0, 0, 1, 1], [], []>} : vector<16x16xbf16>, vector<16x324xbf16>, vector<16x324xf32> -> vector<16x324xf32>
      %241 = arith.addf %232, %240 : vector<16x324xf32>
      %242 = arith.index_cast %161 : i32 to index
      %c0_206 = arith.constant 0 : index
      %c0_207 = arith.constant 0 : index
      %243 = vector.load %arg4[%242, %c0_206, %c0_207] : memref<5x16x1xf32, #tpu.memory_space<vmem>>, vector<1x16x1xf32>
      %244 = vector.shape_cast %243 : vector<1x16x1xf32> to vector<16x1xf32>
      %245 = vector.broadcast %244 : vector<16x1xf32> to vector<16x324xf32>
      %246 = arith.addf %241, %245 : vector<16x324xf32>
      %c0_208 = arith.constant 0 : index
      %c0_209 = arith.constant 0 : index
      %247 = vector.load %arg8[%c0_208, %c0_209] : memref<16x324xf32, #tpu.memory_space<vmem>>, vector<16x324xf32>
      %248 = vector.broadcast %5 : vector<1x324xf32> to vector<16x324xf32>
      %249 = arith.mulf %246, %248 : vector<16x324xf32>
      %cst_210 = arith.constant 1.000000e+00 : f32
      %250 = vector.broadcast %cst_210 : f32 to vector<16x324xf32>
      %251 = arith.mulf %250, %249 : vector<16x324xf32>
      %252 = arith.addf %247, %251 : vector<16x324xf32>
      %c0_211 = arith.constant 0 : index
      %c0_212 = arith.constant 0 : index
      %253 = vector.load %arg8[%c0_211, %c0_212] : memref<16x324xf32, #tpu.memory_space<vmem>>, vector<16x324xf32>
      tpu.vector_store %arg8[%c0_211, %c0_212], %252 {strides = array<i32>} : memref<16x324xf32, #tpu.memory_space<vmem>>, vector<16x324xf32>,
      %254 = arith.truncf %252 : vector<16x324xf32> to vector<16x324xbf16>
      %c0_213 = arith.constant 0 : index
      %c128_214 = arith.constant 128 : index
      %255 = vector.load %arg7[%c0_213, %c128_214] : memref<16x580xbf16, #tpu.memory_space<vmem>>, vector<16x324xbf16>
      tpu.vector_store %arg7[%c0_213, %c128_214], %254 {strides = array<i32>} : memref<16x580xbf16, #tpu.memory_space<vmem>>, vector<16x324xbf16>,
    }
    %c2_i32_12 = arith.constant 2 : i32
    %c0_13 = arith.constant 0 : index
    %c109 = arith.constant 109 : index
    %12 = vector.load %arg7[%c0_13, %c109] : memref<16x580xbf16, #tpu.memory_space<vmem>>, vector<16x324xbf16>
    %c36 = arith.constant 36 : index
    %c0_14 = arith.constant 0 : index
    %c0_15 = arith.constant 0 : index
    %13 = vector.load %arg3[%c36, %c0_14, %c0_15] : memref<45x16x16xbf16, #tpu.memory_space<vmem>>, vector<1x16x16xbf16>
    %14 = vector.shape_cast %13 : vector<1x16x16xbf16> to vector<16x16xbf16>
    %cst_16 = arith.constant dense<0.000000e+00> : vector<16x324xf32>
    %15 = tpu.matmul %14, %12, %cst_16 {dimension_numbers = #tpu.dot_dimension_numbers<[1], [0], [0], [1], [0, 0, 1, 1], [], []>} : vector<16x16xbf16>, vector<16x324xbf16>, vector<16x324xf32> -> vector<16x324xf32>
    %c0_17 = arith.constant 0 : index
    %c110 = arith.constant 110 : index
    %16 = vector.load %arg7[%c0_17, %c110] : memref<16x580xbf16, #tpu.memory_space<vmem>>, vector<16x324xbf16>
    %c37 = arith.constant 37 : index
    %c0_18 = arith.constant 0 : index
    %c0_19 = arith.constant 0 : index
    %17 = vector.load %arg3[%c37, %c0_18, %c0_19] : memref<45x16x16xbf16, #tpu.memory_space<vmem>>, vector<1x16x16xbf16>
    %18 = vector.shape_cast %17 : vector<1x16x16xbf16> to vector<16x16xbf16>
    %cst_20 = arith.constant dense<0.000000e+00> : vector<16x324xf32>
    %19 = tpu.matmul %18, %16, %cst_20 {dimension_numbers = #tpu.dot_dimension_numbers<[1], [0], [0], [1], [0, 0, 1, 1], [], []>} : vector<16x16xbf16>, vector<16x324xbf16>, vector<16x324xf32> -> vector<16x324xf32>
    %20 = arith.addf %15, %19 : vector<16x324xf32>
    %c0_21 = arith.constant 0 : index
    %c111 = arith.constant 111 : index
    %21 = vector.load %arg7[%c0_21, %c111] : memref<16x580xbf16, #tpu.memory_space<vmem>>, vector<16x324xbf16>
    %c38 = arith.constant 38 : index
    %c0_22 = arith.constant 0 : index
    %c0_23 = arith.constant 0 : index
    %22 = vector.load %arg3[%c38, %c0_22, %c0_23] : memref<45x16x16xbf16, #tpu.memory_space<vmem>>, vector<1x16x16xbf16>
    %23 = vector.shape_cast %22 : vector<1x16x16xbf16> to vector<16x16xbf16>
    %cst_24 = arith.constant dense<0.000000e+00> : vector<16x324xf32>
    %24 = tpu.matmul %23, %21, %cst_24 {dimension_numbers = #tpu.dot_dimension_numbers<[1], [0], [0], [1], [0, 0, 1, 1], [], []>} : vector<16x16xbf16>, vector<16x324xbf16>, vector<16x324xf32> -> vector<16x324xf32>
    %25 = arith.addf %20, %24 : vector<16x324xf32>
    %c0_25 = arith.constant 0 : index
    %c127 = arith.constant 127 : index
    %26 = vector.load %arg7[%c0_25, %c127] : memref<16x580xbf16, #tpu.memory_space<vmem>>, vector<16x324xbf16>
    %c39 = arith.constant 39 : index
    %c0_26 = arith.constant 0 : index
    %c0_27 = arith.constant 0 : index
    %27 = vector.load %arg3[%c39, %c0_26, %c0_27] : memref<45x16x16xbf16, #tpu.memory_space<vmem>>, vector<1x16x16xbf16>
    %28 = vector.shape_cast %27 : vector<1x16x16xbf16> to vector<16x16xbf16>
    %cst_28 = arith.constant dense<0.000000e+00> : vector<16x324xf32>
    %29 = tpu.matmul %28, %26, %cst_28 {dimension_numbers = #tpu.dot_dimension_numbers<[1], [0], [0], [1], [0, 0, 1, 1], [], []>} : vector<16x16xbf16>, vector<16x324xbf16>, vector<16x324xf32> -> vector<16x324xf32>
    %30 = arith.addf %25, %29 : vector<16x324xf32>
    %c0_29 = arith.constant 0 : index
    %c128_30 = arith.constant 128 : index
    %31 = vector.load %arg7[%c0_29, %c128_30] : memref<16x580xbf16, #tpu.memory_space<vmem>>, vector<16x324xbf16>
    %c40 = arith.constant 40 : index
    %c0_31 = arith.constant 0 : index
    %c0_32 = arith.constant 0 : index
    %32 = vector.load %arg3[%c40, %c0_31, %c0_32] : memref<45x16x16xbf16, #tpu.memory_space<vmem>>, vector<1x16x16xbf16>
    %33 = vector.shape_cast %32 : vector<1x16x16xbf16> to vector<16x16xbf16>
    %cst_33 = arith.constant dense<0.000000e+00> : vector<16x324xf32>
    %34 = tpu.matmul %33, %31, %cst_33 {dimension_numbers = #tpu.dot_dimension_numbers<[1], [0], [0], [1], [0, 0, 1, 1], [], []>} : vector<16x16xbf16>, vector<16x324xbf16>, vector<16x324xf32> -> vector<16x324xf32>
    %35 = arith.addf %30, %34 : vector<16x324xf32>
    %c0_34 = arith.constant 0 : index
    %c129 = arith.constant 129 : index
    %36 = vector.load %arg7[%c0_34, %c129] : memref<16x580xbf16, #tpu.memory_space<vmem>>, vector<16x324xbf16>
    %c41 = arith.constant 41 : index
    %c0_35 = arith.constant 0 : index
    %c0_36 = arith.constant 0 : index
    %37 = vector.load %arg3[%c41, %c0_35, %c0_36] : memref<45x16x16xbf16, #tpu.memory_space<vmem>>, vector<1x16x16xbf16>
    %38 = vector.shape_cast %37 : vector<1x16x16xbf16> to vector<16x16xbf16>
    %cst_37 = arith.constant dense<0.000000e+00> : vector<16x324xf32>
    %39 = tpu.matmul %38, %36, %cst_37 {dimension_numbers = #tpu.dot_dimension_numbers<[1], [0], [0], [1], [0, 0, 1, 1], [], []>} : vector<16x16xbf16>, vector<16x324xbf16>, vector<16x324xf32> -> vector<16x324xf32>
    %40 = arith.addf %35, %39 : vector<16x324xf32>
    %c0_38 = arith.constant 0 : index
    %c145 = arith.constant 145 : index
    %41 = vector.load %arg7[%c0_38, %c145] : memref<16x580xbf16, #tpu.memory_space<vmem>>, vector<16x324xbf16>
    %c42 = arith.constant 42 : index
    %c0_39 = arith.constant 0 : index
    %c0_40 = arith.constant 0 : index
    %42 = vector.load %arg3[%c42, %c0_39, %c0_40] : memref<45x16x16xbf16, #tpu.memory_space<vmem>>, vector<1x16x16xbf16>
    %43 = vector.shape_cast %42 : vector<1x16x16xbf16> to vector<16x16xbf16>
    %cst_41 = arith.constant dense<0.000000e+00> : vector<16x324xf32>
    %44 = tpu.matmul %43, %41, %cst_41 {dimension_numbers = #tpu.dot_dimension_numbers<[1], [0], [0], [1], [0, 0, 1, 1], [], []>} : vector<16x16xbf16>, vector<16x324xbf16>, vector<16x324xf32> -> vector<16x324xf32>
    %45 = arith.addf %40, %44 : vector<16x324xf32>
    %c0_42 = arith.constant 0 : index
    %c146 = arith.constant 146 : index
    %46 = vector.load %arg7[%c0_42, %c146] : memref<16x580xbf16, #tpu.memory_space<vmem>>, vector<16x324xbf16>
    %c43 = arith.constant 43 : index
    %c0_43 = arith.constant 0 : index
    %c0_44 = arith.constant 0 : index
    %47 = vector.load %arg3[%c43, %c0_43, %c0_44] : memref<45x16x16xbf16, #tpu.memory_space<vmem>>, vector<1x16x16xbf16>
    %48 = vector.shape_cast %47 : vector<1x16x16xbf16> to vector<16x16xbf16>
    %cst_45 = arith.constant dense<0.000000e+00> : vector<16x324xf32>
    %49 = tpu.matmul %48, %46, %cst_45 {dimension_numbers = #tpu.dot_dimension_numbers<[1], [0], [0], [1], [0, 0, 1, 1], [], []>} : vector<16x16xbf16>, vector<16x324xbf16>, vector<16x324xf32> -> vector<16x324xf32>
    %50 = arith.addf %45, %49 : vector<16x324xf32>
    %c0_46 = arith.constant 0 : index
    %c147 = arith.constant 147 : index
    %51 = vector.load %arg7[%c0_46, %c147] : memref<16x580xbf16, #tpu.memory_space<vmem>>, vector<16x324xbf16>
    %c44 = arith.constant 44 : index
    %c0_47 = arith.constant 0 : index
    %c0_48 = arith.constant 0 : index
    %52 = vector.load %arg3[%c44, %c0_47, %c0_48] : memref<45x16x16xbf16, #tpu.memory_space<vmem>>, vector<1x16x16xbf16>
    %53 = vector.shape_cast %52 : vector<1x16x16xbf16> to vector<16x16xbf16>
    %cst_49 = arith.constant dense<0.000000e+00> : vector<16x324xf32>
    %54 = tpu.matmul %53, %51, %cst_49 {dimension_numbers = #tpu.dot_dimension_numbers<[1], [0], [0], [1], [0, 0, 1, 1], [], []>} : vector<16x16xbf16>, vector<16x324xbf16>, vector<16x324xf32> -> vector<16x324xf32>
    %55 = arith.addf %50, %54 : vector<16x324xf32>
    %c4 = arith.constant 4 : index
    %c0_50 = arith.constant 0 : index
    %c0_51 = arith.constant 0 : index
    %56 = vector.load %arg4[%c4, %c0_50, %c0_51] : memref<5x16x1xf32, #tpu.memory_space<vmem>>, vector<1x16x1xf32>
    %57 = vector.shape_cast %56 : vector<1x16x1xf32> to vector<16x1xf32>
    %58 = vector.broadcast %57 : vector<16x1xf32> to vector<16x324xf32>
    %59 = arith.addf %55, %58 : vector<16x324xf32>
    %60 = vector.broadcast %5 : vector<1x324xf32> to vector<16x324xf32>
    %61 = arith.mulf %59, %60 : vector<16x324xf32>
    %c0_52 = arith.constant 0 : index
    %c0_53 = arith.constant 0 : index
    %c0_54 = arith.constant 0 : index
    %62 = vector.load %arg2[%c0_52, %c0_53, %c0_54] : memref<1x16x324xf32, #tpu.memory_space<vmem>>, vector<1x16x324xf32>
    %63 = vector.shape_cast %62 : vector<1x16x324xf32> to vector<16x324xf32>
    %64 = arith.addf %61, %63 : vector<16x324xf32>
    %65 = vector.extract_strided_slice %64 {offsets = [0, 90], sizes = [16, 144], strides = [1, 1]} : vector<16x324xf32> to vector<16x144xf32>
    %c0_55 = arith.constant 0 : index
    %c0_56 = arith.constant 0 : index
    %c0_57 = arith.constant 0 : index
    %66 = vector.load %arg6[%c0_55, %c0_56, %c0_57] : memref<1x16x144xf32, #tpu.memory_space<vmem>>, vector<1x16x144xf32>
    %67 = vector.shape_cast %66 : vector<1x16x144xf32> to vector<16x144xf32>
    %68 = vector.shape_cast %65 : vector<16x144xf32> to vector<1x16x144xf32>
    tpu.vector_store %arg6[%c0_55, %c0_56, %c0_57], %68 {strides = array<i32>} : memref<1x16x144xf32, #tpu.memory_space<vmem>>, vector<1x16x144xf32>,
    return
  }
  func.func @transform_0(%arg0: i32, %arg1: i32) -> (i32, i32, i32) {
    %c2_i32 = arith.constant 2 : i32
    %0 = arith.muli %arg0, %c2_i32 : i32
    %1 = arith.addi %0, %arg1 : i32
    %c0_i32 = arith.constant 0 : i32
    %c0_i32_0 = arith.constant 0 : i32
    %c0_i32_1 = arith.constant 0 : i32
    return %1, %c0_i32, %c0_i32_0 : i32, i32, i32
  }
  func.func @transform_1(%arg0: i32, %arg1: i32) -> (i32, i32, i32) {
    %c0_i32 = arith.constant 0 : i32
    %c0_i32_0 = arith.constant 0 : i32
    %c0_i32_1 = arith.constant 0 : i32
    %c0_i32_2 = arith.constant 0 : i32
    return %c0_i32, %c0_i32_0, %c0_i32_1 : i32, i32, i32
  }
  func.func @transform_2(%arg0: i32, %arg1: i32) -> (i32, i32, i32) {
    %c0_i32 = arith.constant 0 : i32
    %c0_i32_0 = arith.constant 0 : i32
    %c0_i32_1 = arith.constant 0 : i32
    %c0_i32_2 = arith.constant 0 : i32
    return %c0_i32, %c0_i32_0, %c0_i32_1 : i32, i32, i32
  }
  func.func @transform_3(%arg0: i32, %arg1: i32) -> (i32, i32, i32) {
    %c0_i32 = arith.constant 0 : i32
    %c0_i32_0 = arith.constant 0 : i32
    %c0_i32_1 = arith.constant 0 : i32
    return %arg1, %c0_i32, %c0_i32_0 : i32, i32, i32
  }
  func.func @transform_4(%arg0: i32, %arg1: i32) -> (i32, i32, i32) {
    %c2_i32 = arith.constant 2 : i32
    %0 = arith.muli %arg0, %c2_i32 : i32
    %1 = arith.addi %0, %arg1 : i32
    %c0_i32 = arith.constant 0 : i32
    %c0_i32_0 = arith.constant 0 : i32
    %c0_i32_1 = arith.constant 0 : i32
    return %1, %c0_i32, %c0_i32_0 : i32, i32, i32
  }
}

module attributes {stable_mosaic.version = 11 : i64} {
  func.func @_residual_group_kernel(%arg0: i32, %arg1: i32, %arg2: memref<1x16x324xf32, #tpu.memory_space<vmem>>, %arg3: memref<45x16x16xbf16, #tpu.memory_space<vmem>>, %arg4: memref<5x16x1xf32, #tpu.memory_space<vmem>>, %arg5: memref<1x1x324xf32, #tpu.memory_space<vmem>>, %arg6: memref<1x16x144xf32, #tpu.memory_space<vmem>>, %arg7: memref<16x580xbf16, #tpu.memory_space<vmem>>, %arg8: memref<16x324xf32, #tpu.memory_space<vmem>>) attributes {dimension_semantics = [#tpu.dimension_semantics<parallel>, #tpu.dimension_semantics<parallel>], iteration_bounds = array<i64: 2, 2>, scalar_prefetch = 0 : i64, scratch_operands = 2 : i64, tpu.core_type = #tpu.core_type<tc>, window_params = [{transform_indices = @transform_0, window_bounds = array<i64: 1, 16, 324>}, {pipeline_mode = #tpu.pipeline_mode<synchronous>, transform_indices = @transform_1, window_bounds = array<i64: 45, 16, 16>}, {pipeline_mode = #tpu.pipeline_mode<synchronous>, transform_indices = @transform_2, window_bounds = array<i64: 5, 16, 1>}, {transform_indices = @transform_3, window_bounds = array<i64: 1, 1, 324>}, {transform_indices = @transform_4, window_bounds = array<i64: 1, 16, 144>}]} {
    %cst = arith.constant 0.000000e+00 : bf16
    %0 = vector.broadcast %cst : bf16 to vector<16x128xbf16>
    %c0 = arith.constant 0 : index
    %c0_0 = arith.constant 0 : index
    %1 = vector.load %arg7[%c0, %c0_0] : memref<16x580xbf16, #tpu.memory_space<vmem>>, vector<16x128xbf16>
    tpu.vector_store %arg7[%c0, %c0_0], %0 {strides = array<i32>} : memref<16x580xbf16, #tpu.memory_space<vmem>>, vector<16x128xbf16>,
    %cst_1 = arith.constant 0.000000e+00 : bf16
    %2 = vector.broadcast %cst_1 : bf16 to vector<16x128xbf16>
    %c0_2 = arith.constant 0 : index
    %c452 = arith.constant 452 : index
    %3 = vector.load %arg7[%c0_2, %c452] : memref<16x580xbf16, #tpu.memory_space<vmem>>, vector<16x128xbf16>
    tpu.vector_store %arg7[%c0_2, %c452], %2 {strides = array<i32>} : memref<16x580xbf16, #tpu.memory_space<vmem>>, vector<16x128xbf16>,
    %c0_3 = arith.constant 0 : index
    %c0_4 = arith.constant 0 : index
    %c0_5 = arith.constant 0 : index
    %4 = vector.load %arg5[%c0_3, %c0_4, %c0_5] : memref<1x1x324xf32, #tpu.memory_space<vmem>>, vector<1x1x324xf32>
    %5 = vector.shape_cast %4 : vector<1x1x324xf32> to vector<1x324xf32>
    %c0_6 = arith.constant 0 : index
    %c0_7 = arith.constant 0 : index
    %c0_8 = arith.constant 0 : index
    %6 = vector.load %arg2[%c0_6, %c0_7, %c0_8] : memref<1x16x324xf32, #tpu.memory_space<vmem>>, vector<1x16x324xf32>
    %7 = vector.shape_cast %6 : vector<1x16x324xf32> to vector<16x324xf32>
    %c0_9 = arith.constant 0 : index
    %c0_10 = arith.constant 0 : index
    %8 = vector.load %arg8[%c0_9, %c0_10] : memref<16x324xf32, #tpu.memory_space<vmem>>, vector<16x324xf32>
    tpu.vector_store %arg8[%c0_9, %c0_10], %7 {strides = array<i32>} : memref<16x324xf32, #tpu.memory_space<vmem>>, vector<16x324xf32>,
    %9 = arith.truncf %7 : vector<16x324xf32> to vector<16x324xbf16>
    %c0_11 = arith.constant 0 : index
    %c128 = arith.constant 128 : index
    %10 = vector.load %arg7[%c0_11, %c128] : memref<16x580xbf16, #tpu.memory_space<vmem>>, vector<16x324xbf16>
    tpu.vector_store %arg7[%c0_11, %c128], %9 {strides = array<i32>} : memref<16x580xbf16, #tpu.memory_space<vmem>>, vector<16x324xbf16>,
    %c0_i32 = arith.constant 0 : i32
    %c2_i32 = arith.constant 2 : i32
    %11 = arith.addi %c0_i32, %c2_i32 : i32
    %c1_i32 = arith.constant 1 : i32
    scf.for %arg9 = %c0_i32 to %11 step %c1_i32  : i32 {
      %c2_i32_58 = arith.constant 2 : i32
      %69 = arith.muli %c2_i32_58, %arg9 : i32
      %c0_59 = arith.constant 0 : index
      %c109_60 = arith.constant 109 : index
      %70 = vector.load %arg7[%c0_59, %c109_60] : memref<16x580xbf16, #tpu.memory_space<vmem>>, vector<16x324xbf16>
      %c9_i32 = arith.constant 9 : i32
      %71 = arith.muli %69, %c9_i32 : i32
      %c0_i32_61 = arith.constant 0 : i32
      %72 = arith.addi %71, %c0_i32_61 : i32
      %c0_i32_62 = arith.constant 0 : i32
      %73 = arith.addi %72, %c0_i32_62 : i32
      %74 = arith.index_cast %73 : i32 to index
      %c0_63 = arith.constant 0 : index
      %c0_64 = arith.constant 0 : index
      %75 = vector.load %arg3[%74, %c0_63, %c0_64] : memref<45x16x16xbf16, #tpu.memory_space<vmem>>, vector<1x16x16xbf16>
      %76 = vector.shape_cast %75 : vector<1x16x16xbf16> to vector<16x16xbf16>
      %cst_65 = arith.constant dense<0.000000e+00> : vector<16x324xf32>
      %77 = tpu.matmul %76, %70, %cst_65 {dimension_numbers = #tpu.dot_dimension_numbers<[1], [0], [0], [1], [0, 0, 1, 1], [], []>} : vector<16x16xbf16>, vector<16x324xbf16>, vector<16x324xf32> -> vector<16x324xf32>
      %c0_66 = arith.constant 0 : index
      %c110_67 = arith.constant 110 : index
      %78 = vector.load %arg7[%c0_66, %c110_67] : memref<16x580xbf16, #tpu.memory_space<vmem>>, vector<16x324xbf16>
      %c9_i32_68 = arith.constant 9 : i32
      %79 = arith.muli %69, %c9_i32_68 : i32
      %c0_i32_69 = arith.constant 0 : i32
      %80 = arith.addi %79, %c0_i32_69 : i32
      %c1_i32_70 = arith.constant 1 : i32
      %81 = arith.addi %80, %c1_i32_70 : i32
      %82 = arith.index_cast %81 : i32 to index
      %c0_71 = arith.constant 0 : index
      %c0_72 = arith.constant 0 : index
      %83 = vector.load %arg3[%82, %c0_71, %c0_72] : memref<45x16x16xbf16, #tpu.memory_space<vmem>>, vector<1x16x16xbf16>
      %84 = vector.shape_cast %83 : vector<1x16x16xbf16> to vector<16x16xbf16>
      %cst_73 = arith.constant dense<0.000000e+00> : vector<16x324xf32>
      %85 = tpu.matmul %84, %78, %cst_73 {dimension_numbers = #tpu.dot_dimension_numbers<[1], [0], [0], [1], [0, 0, 1, 1], [], []>} : vector<16x16xbf16>, vector<16x324xbf16>, vector<16x324xf32> -> vector<16x324xf32>
      %86 = arith.addf %77, %85 : vector<16x324xf32>
      %c0_74 = arith.constant 0 : index
      %c111_75 = arith.constant 111 : index
      %87 = vector.load %arg7[%c0_74, %c111_75] : memref<16x580xbf16, #tpu.memory_space<vmem>>, vector<16x324xbf16>
      %c9_i32_76 = arith.constant 9 : i32
      %88 = arith.muli %69, %c9_i32_76 : i32
      %c0_i32_77 = arith.constant 0 : i32
      %89 = arith.addi %88, %c0_i32_77 : i32
      %c2_i32_78 = arith.constant 2 : i32
      %90 = arith.addi %89, %c2_i32_78 : i32
      %91 = arith.index_cast %90 : i32 to index
      %c0_79 = arith.constant 0 : index
      %c0_80 = arith.constant 0 : index
      %92 = vector.load %arg3[%91, %c0_79, %c0_80] : memref<45x16x16xbf16, #tpu.memory_space<vmem>>, vector<1x16x16xbf16>
      %93 = vector.shape_cast %92 : vector<1x16x16xbf16> to vector<16x16xbf16>
      %cst_81 = arith.constant dense<0.000000e+00> : vector<16x324xf32>
      %94 = tpu.matmul %93, %87, %cst_81 {dimension_numbers = #tpu.dot_dimension_numbers<[1], [0], [0], [1], [0, 0, 1, 1], [], []>} : vector<16x16xbf16>, vector<16x324xbf16>, vector<16x324xf32> -> vector<16x324xf32>
      %95 = arith.addf %86, %94 : vector<16x324xf32>
      %c0_82 = arith.constant 0 : index
      %c127_83 = arith.constant 127 : index
      %96 = vector.load %arg7[%c0_82, %c127_83] : memref<16x580xbf16, #tpu.memory_space<vmem>>, vector<16x324xbf16>
      %c9_i32_84 = arith.constant 9 : i32
      %97 = arith.muli %69, %c9_i32_84 : i32
      %c3_i32 = arith.constant 3 : i32
      %98 = arith.addi %97, %c3_i32 : i32
      %c0_i32_85 = arith.constant 0 : i32
      %99 = arith.addi %98, %c0_i32_85 : i32
      %100 = arith.index_cast %99 : i32 to index
      %c0_86 = arith.constant 0 : index
      %c0_87 = arith.constant 0 : index
      %101 = vector.load %arg3[%100, %c0_86, %c0_87] : memref<45x16x16xbf16, #tpu.memory_space<vmem>>, vector<1x16x16xbf16>
      %102 = vector.shape_cast %101 : vector<1x16x16xbf16> to vector<16x16xbf16>
      %cst_88 = arith.constant dense<0.000000e+00> : vector<16x324xf32>
      %103 = tpu.matmul %102, %96, %cst_88 {dimension_numbers = #tpu.dot_dimension_numbers<[1], [0], [0], [1], [0, 0, 1, 1], [], []>} : vector<16x16xbf16>, vector<16x324xbf16>, vector<16x324xf32> -> vector<16x324xf32>
      %104 = arith.addf %95, %103 : vector<16x324xf32>
      %c0_89 = arith.constant 0 : index
      %c128_90 = arith.constant 128 : index
      %105 = vector.load %arg7[%c0_89, %c128_90] : memref<16x580xbf16, #tpu.memory_space<vmem>>, vector<16x324xbf16>
      %c9_i32_91 = arith.constant 9 : i32
      %106 = arith.muli %69, %c9_i32_91 : i32
      %c3_i32_92 = arith.constant 3 : i32
      %107 = arith.addi %106, %c3_i32_92 : i32
      %c1_i32_93 = arith.constant 1 : i32
      %108 = arith.addi %107, %c1_i32_93 : i32
      %109 = arith.index_cast %108 : i32 to index
      %c0_94 = arith.constant 0 : index
      %c0_95 = arith.constant 0 : index
      %110 = vector.load %arg3[%109, %c0_94, %c0_95] : memref<45x16x16xbf16, #tpu.memory_space<vmem>>, vector<1x16x16xbf16>
      %111 = vector.shape_cast %110 : vector<1x16x16xbf16> to vector<16x16xbf16>
      %cst_96 = arith.constant dense<0.000000e+00> : vector<16x324xf32>
      %112 = tpu.matmul %111, %105, %cst_96 {dimension_numbers = #tpu.dot_dimension_numbers<[1], [0], [0], [1], [0, 0, 1, 1], [], []>} : vector<16x16xbf16>, vector<16x324xbf16>, vector<16x324xf32> -> vector<16x324xf32>
      %113 = arith.addf %104, %112 : vector<16x324xf32>
      %c0_97 = arith.constant 0 : index
      %c129_98 = arith.constant 129 : index
      %114 = vector.load %arg7[%c0_97, %c129_98] : memref<16x580xbf16, #tpu.memory_space<vmem>>, vector<16x324xbf16>
      %c9_i32_99 = arith.constant 9 : i32
      %115 = arith.muli %69, %c9_i32_99 : i32
      %c3_i32_100 = arith.constant 3 : i32
      %116 = arith.addi %115, %c3_i32_100 : i32
      %c2_i32_101 = arith.constant 2 : i32
      %117 = arith.addi %116, %c2_i32_101 : i32
      %118 = arith.index_cast %117 : i32 to index
      %c0_102 = arith.constant 0 : index
      %c0_103 = arith.constant 0 : index
      %119 = vector.load %arg3[%118, %c0_102, %c0_103] : memref<45x16x16xbf16, #tpu.memory_space<vmem>>, vector<1x16x16xbf16>
      %120 = vector.shape_cast %119 : vector<1x16x16xbf16> to vector<16x16xbf16>
      %cst_104 = arith.constant dense<0.000000e+00> : vector<16x324xf32>
      %121 = tpu.matmul %120, %114, %cst_104 {dimension_numbers = #tpu.dot_dimension_numbers<[1], [0], [0], [1], [0, 0, 1, 1], [], []>} : vector<16x16xbf16>, vector<16x324xbf16>, vector<16x324xf32> -> vector<16x324xf32>
      %122 = arith.addf %113, %121 : vector<16x324xf32>
      %c0_105 = arith.constant 0 : index
      %c145_106 = arith.constant 145 : index
      %123 = vector.load %arg7[%c0_105, %c145_106] : memref<16x580xbf16, #tpu.memory_space<vmem>>, vector<16x324xbf16>
      %c9_i32_107 = arith.constant 9 : i32
      %124 = arith.muli %69, %c9_i32_107 : i32
      %c6_i32 = arith.constant 6 : i32
      %125 = arith.addi %124, %c6_i32 : i32
      %c0_i32_108 = arith.constant 0 : i32
      %126 = arith.addi %125, %c0_i32_108 : i32
      %127 = arith.index_cast %126 : i32 to index
      %c0_109 = arith.constant 0 : index
      %c0_110 = arith.constant 0 : index
      %128 = vector.load %arg3[%127, %c0_109, %c0_110] : memref<45x16x16xbf16, #tpu.memory_space<vmem>>, vector<1x16x16xbf16>
      %129 = vector.shape_cast %128 : vector<1x16x16xbf16> to vector<16x16xbf16>
      %cst_111 = arith.constant dense<0.000000e+00> : vector<16x324xf32>
      %130 = tpu.matmul %129, %123, %cst_111 {dimension_numbers = #tpu.dot_dimension_numbers<[1], [0], [0], [1], [0, 0, 1, 1], [], []>} : vector<16x16xbf16>, vector<16x324xbf16>, vector<16x324xf32> -> vector<16x324xf32>
      %131 = arith.addf %122, %130 : vector<16x324xf32>
      %c0_112 = arith.constant 0 : index
      %c146_113 = arith.constant 146 : index
      %132 = vector.load %arg7[%c0_112, %c146_113] : memref<16x580xbf16, #tpu.memory_space<vmem>>, vector<16x324xbf16>
      %c9_i32_114 = arith.constant 9 : i32
      %133 = arith.muli %69, %c9_i32_114 : i32
      %c6_i32_115 = arith.constant 6 : i32
      %134 = arith.addi %133, %c6_i32_115 : i32
      %c1_i32_116 = arith.constant 1 : i32
      %135 = arith.addi %134, %c1_i32_116 : i32
      %136 = arith.index_cast %135 : i32 to index
      %c0_117 = arith.constant 0 : index
      %c0_118 = arith.constant 0 : index
      %137 = vector.load %arg3[%136, %c0_117, %c0_118] : memref<45x16x16xbf16, #tpu.memory_space<vmem>>, vector<1x16x16xbf16>
      %138 = vector.shape_cast %137 : vector<1x16x16xbf16> to vector<16x16xbf16>
      %cst_119 = arith.constant dense<0.000000e+00> : vector<16x324xf32>
      %139 = tpu.matmul %138, %132, %cst_119 {dimension_numbers = #tpu.dot_dimension_numbers<[1], [0], [0], [1], [0, 0, 1, 1], [], []>} : vector<16x16xbf16>, vector<16x324xbf16>, vector<16x324xf32> -> vector<16x324xf32>
      %140 = arith.addf %131, %139 : vector<16x324xf32>
      %c0_120 = arith.constant 0 : index
      %c147_121 = arith.constant 147 : index
      %141 = vector.load %arg7[%c0_120, %c147_121] : memref<16x580xbf16, #tpu.memory_space<vmem>>, vector<16x324xbf16>
      %c9_i32_122 = arith.constant 9 : i32
      %142 = arith.muli %69, %c9_i32_122 : i32
      %c6_i32_123 = arith.constant 6 : i32
      %143 = arith.addi %142, %c6_i32_123 : i32
      %c2_i32_124 = arith.constant 2 : i32
      %144 = arith.addi %143, %c2_i32_124 : i32
      %145 = arith.index_cast %144 : i32 to index
      %c0_125 = arith.constant 0 : index
      %c0_126 = arith.constant 0 : index
      %146 = vector.load %arg3[%145, %c0_125, %c0_126] : memref<45x16x16xbf16, #tpu.memory_space<vmem>>, vector<1x16x16xbf16>
      %147 = vector.shape_cast %146 : vector<1x16x16xbf16> to vector<16x16xbf16>
      %cst_127 = arith.constant dense<0.000000e+00> : vector<16x324xf32>
      %148 = tpu.matmul %147, %141, %cst_127 {dimension_numbers = #tpu.dot_dimension_numbers<[1], [0], [0], [1], [0, 0, 1, 1], [], []>} : vector<16x16xbf16>, vector<16x324xbf16>, vector<16x324xf32> -> vector<16x324xf32>
      %149 = arith.addf %140, %148 : vector<16x324xf32>
      %150 = arith.index_cast %69 : i32 to index
      %c0_128 = arith.constant 0 : index
      %c0_129 = arith.constant 0 : index
      %151 = vector.load %arg4[%150, %c0_128, %c0_129] : memref<5x16x1xf32, #tpu.memory_space<vmem>>, vector<1x16x1xf32>
      %152 = vector.shape_cast %151 : vector<1x16x1xf32> to vector<16x1xf32>
      %153 = vector.broadcast %152 : vector<16x1xf32> to vector<16x324xf32>
      %154 = arith.addf %149, %153 : vector<16x324xf32>
      %cst_130 = arith.constant 0.000000e+00 : f32
      %155 = vector.broadcast %cst_130 : f32 to vector<16x324xf32>
      %156 = arith.maximumf %154, %155 : vector<16x324xf32>
      %157 = vector.broadcast %5 : vector<1x324xf32> to vector<16x324xf32>
      %158 = arith.mulf %156, %157 : vector<16x324xf32>
      %159 = arith.truncf %158 : vector<16x324xf32> to vector<16x324xbf16>
      %c0_131 = arith.constant 0 : index
      %c128_132 = arith.constant 128 : index
      %160 = vector.load %arg7[%c0_131, %c128_132] : memref<16x580xbf16, #tpu.memory_space<vmem>>, vector<16x324xbf16>
      tpu.vector_store %arg7[%c0_131, %c128_132], %159 {strides = array<i32>} : memref<16x580xbf16, #tpu.memory_space<vmem>>, vector<16x324xbf16>,
      %c1_i32_133 = arith.constant 1 : i32
      %161 = arith.addi %69, %c1_i32_133 : i32
      %c0_134 = arith.constant 0 : index
      %c109_135 = arith.constant 109 : index
      %162 = vector.load %arg7[%c0_134, %c109_135] : memref<16x580xbf16, #tpu.memory_space<vmem>>, vector<16x324xbf16>
      %c9_i32_136 = arith.constant 9 : i32
      %163 = arith.muli %161, %c9_i32_136 : i32
      %c0_i32_137 = arith.constant 0 : i32
      %164 = arith.addi %163, %c0_i32_137 : i32
      %c0_i32_138 = arith.constant 0 : i32
      %165 = arith.addi %164, %c0_i32_138 : i32
      %166 = arith.index_cast %165 : i32 to index
      %c0_139 = arith.constant 0 : index
      %c0_140 = arith.constant 0 : index
      %167 = vector.load %arg3[%166, %c0_139, %c0_140] : memref<45x16x16xbf16, #tpu.memory_space<vmem>>, vector<1x16x16xbf16>
      %168 = vector.shape_cast %167 : vector<1x16x16xbf16> to vector<16x16xbf16>
      %cst_141 = arith.constant dense<0.000000e+00> : vector<16x324xf32>
      %169 = tpu.matmul %168, %162, %cst_141 {dimension_numbers = #tpu.dot_dimension_numbers<[1], [0], [0], [1], [0, 0, 1, 1], [], []>} : vector<16x16xbf16>, vector<16x324xbf16>, vector<16x324xf32> -> vector<16x324xf32>
      %c0_142 = arith.constant 0 : index
      %c110_143 = arith.constant 110 : index
      %170 = vector.load %arg7[%c0_142, %c110_143] : memref<16x580xbf16, #tpu.memory_space<vmem>>, vector<16x324xbf16>
      %c9_i32_144 = arith.constant 9 : i32
      %171 = arith.muli %161, %c9_i32_144 : i32
      %c0_i32_145 = arith.constant 0 : i32
      %172 = arith.addi %171, %c0_i32_145 : i32
      %c1_i32_146 = arith.constant 1 : i32
      %173 = arith.addi %172, %c1_i32_146 : i32
      %174 = arith.index_cast %173 : i32 to index
      %c0_147 = arith.constant 0 : index
      %c0_148 = arith.constant 0 : index
      %175 = vector.load %arg3[%174, %c0_147, %c0_148] : memref<45x16x16xbf16, #tpu.memory_space<vmem>>, vector<1x16x16xbf16>
      %176 = vector.shape_cast %175 : vector<1x16x16xbf16> to vector<16x16xbf16>
      %cst_149 = arith.constant dense<0.000000e+00> : vector<16x324xf32>
      %177 = tpu.matmul %176, %170, %cst_149 {dimension_numbers = #tpu.dot_dimension_numbers<[1], [0], [0], [1], [0, 0, 1, 1], [], []>} : vector<16x16xbf16>, vector<16x324xbf16>, vector<16x324xf32> -> vector<16x324xf32>
      %178 = arith.addf %169, %177 : vector<16x324xf32>
      %c0_150 = arith.constant 0 : index
      %c111_151 = arith.constant 111 : index
      %179 = vector.load %arg7[%c0_150, %c111_151] : memref<16x580xbf16, #tpu.memory_space<vmem>>, vector<16x324xbf16>
      %c9_i32_152 = arith.constant 9 : i32
      %180 = arith.muli %161, %c9_i32_152 : i32
      %c0_i32_153 = arith.constant 0 : i32
      %181 = arith.addi %180, %c0_i32_153 : i32
      %c2_i32_154 = arith.constant 2 : i32
      %182 = arith.addi %181, %c2_i32_154 : i32
      %183 = arith.index_cast %182 : i32 to index
      %c0_155 = arith.constant 0 : index
      %c0_156 = arith.constant 0 : index
      %184 = vector.load %arg3[%183, %c0_155, %c0_156] : memref<45x16x16xbf16, #tpu.memory_space<vmem>>, vector<1x16x16xbf16>
      %185 = vector.shape_cast %184 : vector<1x16x16xbf16> to vector<16x16xbf16>
      %cst_157 = arith.constant dense<0.000000e+00> : vector<16x324xf32>
      %186 = tpu.matmul %185, %179, %cst_157 {dimension_numbers = #tpu.dot_dimension_numbers<[1], [0], [0], [1], [0, 0, 1, 1], [], []>} : vector<16x16xbf16>, vector<16x324xbf16>, vector<16x324xf32> -> vector<16x324xf32>
      %187 = arith.addf %178, %186 : vector<16x324xf32>
      %c0_158 = arith.constant 0 : index
      %c127_159 = arith.constant 127 : index
      %188 = vector.load %arg7[%c0_158, %c127_159] : memref<16x580xbf16, #tpu.memory_space<vmem>>, vector<16x324xbf16>
      %c9_i32_160 = arith.constant 9 : i32
      %189 = arith.muli %161, %c9_i32_160 : i32
      %c3_i32_161 = arith.constant 3 : i32
      %190 = arith.addi %189, %c3_i32_161 : i32
      %c0_i32_162 = arith.constant 0 : i32
      %191 = arith.addi %190, %c0_i32_162 : i32
      %192 = arith.index_cast %191 : i32 to index
      %c0_163 = arith.constant 0 : index
      %c0_164 = arith.constant 0 : index
      %193 = vector.load %arg3[%192, %c0_163, %c0_164] : memref<45x16x16xbf16, #tpu.memory_space<vmem>>, vector<1x16x16xbf16>
      %194 = vector.shape_cast %193 : vector<1x16x16xbf16> to vector<16x16xbf16>
      %cst_165 = arith.constant dense<0.000000e+00> : vector<16x324xf32>
      %195 = tpu.matmul %194, %188, %cst_165 {dimension_numbers = #tpu.dot_dimension_numbers<[1], [0], [0], [1], [0, 0, 1, 1], [], []>} : vector<16x16xbf16>, vector<16x324xbf16>, vector<16x324xf32> -> vector<16x324xf32>
      %196 = arith.addf %187, %195 : vector<16x324xf32>
      %c0_166 = arith.constant 0 : index
      %c128_167 = arith.constant 128 : index
      %197 = vector.load %arg7[%c0_166, %c128_167] : memref<16x580xbf16, #tpu.memory_space<vmem>>, vector<16x324xbf16>
      %c9_i32_168 = arith.constant 9 : i32
      %198 = arith.muli %161, %c9_i32_168 : i32
      %c3_i32_169 = arith.constant 3 : i32
      %199 = arith.addi %198, %c3_i32_169 : i32
      %c1_i32_170 = arith.constant 1 : i32
      %200 = arith.addi %199, %c1_i32_170 : i32
      %201 = arith.index_cast %200 : i32 to index
      %c0_171 = arith.constant 0 : index
      %c0_172 = arith.constant 0 : index
      %202 = vector.load %arg3[%201, %c0_171, %c0_172] : memref<45x16x16xbf16, #tpu.memory_space<vmem>>, vector<1x16x16xbf16>
      %203 = vector.shape_cast %202 : vector<1x16x16xbf16> to vector<16x16xbf16>
      %cst_173 = arith.constant dense<0.000000e+00> : vector<16x324xf32>
      %204 = tpu.matmul %203, %197, %cst_173 {dimension_numbers = #tpu.dot_dimension_numbers<[1], [0], [0], [1], [0, 0, 1, 1], [], []>} : vector<16x16xbf16>, vector<16x324xbf16>, vector<16x324xf32> -> vector<16x324xf32>
      %205 = arith.addf %196, %204 : vector<16x324xf32>
      %c0_174 = arith.constant 0 : index
      %c129_175 = arith.constant 129 : index
      %206 = vector.load %arg7[%c0_174, %c129_175] : memref<16x580xbf16, #tpu.memory_space<vmem>>, vector<16x324xbf16>
      %c9_i32_176 = arith.constant 9 : i32
      %207 = arith.muli %161, %c9_i32_176 : i32
      %c3_i32_177 = arith.constant 3 : i32
      %208 = arith.addi %207, %c3_i32_177 : i32
      %c2_i32_178 = arith.constant 2 : i32
      %209 = arith.addi %208, %c2_i32_178 : i32
      %210 = arith.index_cast %209 : i32 to index
      %c0_179 = arith.constant 0 : index
      %c0_180 = arith.constant 0 : index
      %211 = vector.load %arg3[%210, %c0_179, %c0_180] : memref<45x16x16xbf16, #tpu.memory_space<vmem>>, vector<1x16x16xbf16>
      %212 = vector.shape_cast %211 : vector<1x16x16xbf16> to vector<16x16xbf16>
      %cst_181 = arith.constant dense<0.000000e+00> : vector<16x324xf32>
      %213 = tpu.matmul %212, %206, %cst_181 {dimension_numbers = #tpu.dot_dimension_numbers<[1], [0], [0], [1], [0, 0, 1, 1], [], []>} : vector<16x16xbf16>, vector<16x324xbf16>, vector<16x324xf32> -> vector<16x324xf32>
      %214 = arith.addf %205, %213 : vector<16x324xf32>
      %c0_182 = arith.constant 0 : index
      %c145_183 = arith.constant 145 : index
      %215 = vector.load %arg7[%c0_182, %c145_183] : memref<16x580xbf16, #tpu.memory_space<vmem>>, vector<16x324xbf16>
      %c9_i32_184 = arith.constant 9 : i32
      %216 = arith.muli %161, %c9_i32_184 : i32
      %c6_i32_185 = arith.constant 6 : i32
      %217 = arith.addi %216, %c6_i32_185 : i32
      %c0_i32_186 = arith.constant 0 : i32
      %218 = arith.addi %217, %c0_i32_186 : i32
      %219 = arith.index_cast %218 : i32 to index
      %c0_187 = arith.constant 0 : index
      %c0_188 = arith.constant 0 : index
      %220 = vector.load %arg3[%219, %c0_187, %c0_188] : memref<45x16x16xbf16, #tpu.memory_space<vmem>>, vector<1x16x16xbf16>
      %221 = vector.shape_cast %220 : vector<1x16x16xbf16> to vector<16x16xbf16>
      %cst_189 = arith.constant dense<0.000000e+00> : vector<16x324xf32>
      %222 = tpu.matmul %221, %215, %cst_189 {dimension_numbers = #tpu.dot_dimension_numbers<[1], [0], [0], [1], [0, 0, 1, 1], [], []>} : vector<16x16xbf16>, vector<16x324xbf16>, vector<16x324xf32> -> vector<16x324xf32>
      %223 = arith.addf %214, %222 : vector<16x324xf32>
      %c0_190 = arith.constant 0 : index
      %c146_191 = arith.constant 146 : index
      %224 = vector.load %arg7[%c0_190, %c146_191] : memref<16x580xbf16, #tpu.memory_space<vmem>>, vector<16x324xbf16>
      %c9_i32_192 = arith.constant 9 : i32
      %225 = arith.muli %161, %c9_i32_192 : i32
      %c6_i32_193 = arith.constant 6 : i32
      %226 = arith.addi %225, %c6_i32_193 : i32
      %c1_i32_194 = arith.constant 1 : i32
      %227 = arith.addi %226, %c1_i32_194 : i32
      %228 = arith.index_cast %227 : i32 to index
      %c0_195 = arith.constant 0 : index
      %c0_196 = arith.constant 0 : index
      %229 = vector.load %arg3[%228, %c0_195, %c0_196] : memref<45x16x16xbf16, #tpu.memory_space<vmem>>, vector<1x16x16xbf16>
      %230 = vector.shape_cast %229 : vector<1x16x16xbf16> to vector<16x16xbf16>
      %cst_197 = arith.constant dense<0.000000e+00> : vector<16x324xf32>
      %231 = tpu.matmul %230, %224, %cst_197 {dimension_numbers = #tpu.dot_dimension_numbers<[1], [0], [0], [1], [0, 0, 1, 1], [], []>} : vector<16x16xbf16>, vector<16x324xbf16>, vector<16x324xf32> -> vector<16x324xf32>
      %232 = arith.addf %223, %231 : vector<16x324xf32>
      %c0_198 = arith.constant 0 : index
      %c147_199 = arith.constant 147 : index
      %233 = vector.load %arg7[%c0_198, %c147_199] : memref<16x580xbf16, #tpu.memory_space<vmem>>, vector<16x324xbf16>
      %c9_i32_200 = arith.constant 9 : i32
      %234 = arith.muli %161, %c9_i32_200 : i32
      %c6_i32_201 = arith.constant 6 : i32
      %235 = arith.addi %234, %c6_i32_201 : i32
      %c2_i32_202 = arith.constant 2 : i32
      %236 = arith.addi %235, %c2_i32_202 : i32
      %237 = arith.index_cast %236 : i32 to index
      %c0_203 = arith.constant 0 : index
      %c0_204 = arith.constant 0 : index
      %238 = vector.load %arg3[%237, %c0_203, %c0_204] : memref<45x16x16xbf16, #tpu.memory_space<vmem>>, vector<1x16x16xbf16>
      %239 = vector.shape_cast %238 : vector<1x16x16xbf16> to vector<16x16xbf16>
      %cst_205 = arith.constant dense<0.000000e+00> : vector<16x324xf32>
      %240 = tpu.matmul %239, %233, %cst_205 {dimension_numbers = #tpu.dot_dimension_numbers<[1], [0], [0], [1], [0, 0, 1, 1], [], []>} : vector<16x16xbf16>, vector<16x324xbf16>, vector<16x324xf32> -> vector<16x324xf32>
      %241 = arith.addf %232, %240 : vector<16x324xf32>
      %242 = arith.index_cast %161 : i32 to index
      %c0_206 = arith.constant 0 : index
      %c0_207 = arith.constant 0 : index
      %243 = vector.load %arg4[%242, %c0_206, %c0_207] : memref<5x16x1xf32, #tpu.memory_space<vmem>>, vector<1x16x1xf32>
      %244 = vector.shape_cast %243 : vector<1x16x1xf32> to vector<16x1xf32>
      %245 = vector.broadcast %244 : vector<16x1xf32> to vector<16x324xf32>
      %246 = arith.addf %241, %245 : vector<16x324xf32>
      %c0_208 = arith.constant 0 : index
      %c0_209 = arith.constant 0 : index
      %247 = vector.load %arg8[%c0_208, %c0_209] : memref<16x324xf32, #tpu.memory_space<vmem>>, vector<16x324xf32>
      %248 = vector.broadcast %5 : vector<1x324xf32> to vector<16x324xf32>
      %249 = arith.mulf %246, %248 : vector<16x324xf32>
      %cst_210 = arith.constant 1.000000e+00 : f32
      %250 = vector.broadcast %cst_210 : f32 to vector<16x324xf32>
      %251 = arith.mulf %250, %249 : vector<16x324xf32>
      %252 = arith.addf %247, %251 : vector<16x324xf32>
      %c0_211 = arith.constant 0 : index
      %c0_212 = arith.constant 0 : index
      %253 = vector.load %arg8[%c0_211, %c0_212] : memref<16x324xf32, #tpu.memory_space<vmem>>, vector<16x324xf32>
      tpu.vector_store %arg8[%c0_211, %c0_212], %252 {strides = array<i32>} : memref<16x324xf32, #tpu.memory_space<vmem>>, vector<16x324xf32>,
      %254 = arith.truncf %252 : vector<16x324xf32> to vector<16x324xbf16>
      %c0_213 = arith.constant 0 : index
      %c128_214 = arith.constant 128 : index
      %255 = vector.load %arg7[%c0_213, %c128_214] : memref<16x580xbf16, #tpu.memory_space<vmem>>, vector<16x324xbf16>
      tpu.vector_store %arg7[%c0_213, %c128_214], %254 {strides = array<i32>} : memref<16x580xbf16, #tpu.memory_space<vmem>>, vector<16x324xbf16>,
    }
    %c2_i32_12 = arith.constant 2 : i32
    %c0_13 = arith.constant 0 : index
    %c109 = arith.constant 109 : index
    %12 = vector.load %arg7[%c0_13, %c109] : memref<16x580xbf16, #tpu.memory_space<vmem>>, vector<16x324xbf16>
    %c36 = arith.constant 36 : index
    %c0_14 = arith.constant 0 : index
    %c0_15 = arith.constant 0 : index
    %13 = vector.load %arg3[%c36, %c0_14, %c0_15] : memref<45x16x16xbf16, #tpu.memory_space<vmem>>, vector<1x16x16xbf16>
    %14 = vector.shape_cast %13 : vector<1x16x16xbf16> to vector<16x16xbf16>
    %cst_16 = arith.constant dense<0.000000e+00> : vector<16x324xf32>
    %15 = tpu.matmul %14, %12, %cst_16 {dimension_numbers = #tpu.dot_dimension_numbers<[1], [0], [0], [1], [0, 0, 1, 1], [], []>} : vector<16x16xbf16>, vector<16x324xbf16>, vector<16x324xf32> -> vector<16x324xf32>
    %c0_17 = arith.constant 0 : index
    %c110 = arith.constant 110 : index
    %16 = vector.load %arg7[%c0_17, %c110] : memref<16x580xbf16, #tpu.memory_space<vmem>>, vector<16x324xbf16>
    %c37 = arith.constant 37 : index
    %c0_18 = arith.constant 0 : index
    %c0_19 = arith.constant 0 : index
    %17 = vector.load %arg3[%c37, %c0_18, %c0_19] : memref<45x16x16xbf16, #tpu.memory_space<vmem>>, vector<1x16x16xbf16>
    %18 = vector.shape_cast %17 : vector<1x16x16xbf16> to vector<16x16xbf16>
    %cst_20 = arith.constant dense<0.000000e+00> : vector<16x324xf32>
    %19 = tpu.matmul %18, %16, %cst_20 {dimension_numbers = #tpu.dot_dimension_numbers<[1], [0], [0], [1], [0, 0, 1, 1], [], []>} : vector<16x16xbf16>, vector<16x324xbf16>, vector<16x324xf32> -> vector<16x324xf32>
    %20 = arith.addf %15, %19 : vector<16x324xf32>
    %c0_21 = arith.constant 0 : index
    %c111 = arith.constant 111 : index
    %21 = vector.load %arg7[%c0_21, %c111] : memref<16x580xbf16, #tpu.memory_space<vmem>>, vector<16x324xbf16>
    %c38 = arith.constant 38 : index
    %c0_22 = arith.constant 0 : index
    %c0_23 = arith.constant 0 : index
    %22 = vector.load %arg3[%c38, %c0_22, %c0_23] : memref<45x16x16xbf16, #tpu.memory_space<vmem>>, vector<1x16x16xbf16>
    %23 = vector.shape_cast %22 : vector<1x16x16xbf16> to vector<16x16xbf16>
    %cst_24 = arith.constant dense<0.000000e+00> : vector<16x324xf32>
    %24 = tpu.matmul %23, %21, %cst_24 {dimension_numbers = #tpu.dot_dimension_numbers<[1], [0], [0], [1], [0, 0, 1, 1], [], []>} : vector<16x16xbf16>, vector<16x324xbf16>, vector<16x324xf32> -> vector<16x324xf32>
    %25 = arith.addf %20, %24 : vector<16x324xf32>
    %c0_25 = arith.constant 0 : index
    %c127 = arith.constant 127 : index
    %26 = vector.load %arg7[%c0_25, %c127] : memref<16x580xbf16, #tpu.memory_space<vmem>>, vector<16x324xbf16>
    %c39 = arith.constant 39 : index
    %c0_26 = arith.constant 0 : index
    %c0_27 = arith.constant 0 : index
    %27 = vector.load %arg3[%c39, %c0_26, %c0_27] : memref<45x16x16xbf16, #tpu.memory_space<vmem>>, vector<1x16x16xbf16>
    %28 = vector.shape_cast %27 : vector<1x16x16xbf16> to vector<16x16xbf16>
    %cst_28 = arith.constant dense<0.000000e+00> : vector<16x324xf32>
    %29 = tpu.matmul %28, %26, %cst_28 {dimension_numbers = #tpu.dot_dimension_numbers<[1], [0], [0], [1], [0, 0, 1, 1], [], []>} : vector<16x16xbf16>, vector<16x324xbf16>, vector<16x324xf32> -> vector<16x324xf32>
    %30 = arith.addf %25, %29 : vector<16x324xf32>
    %c0_29 = arith.constant 0 : index
    %c128_30 = arith.constant 128 : index
    %31 = vector.load %arg7[%c0_29, %c128_30] : memref<16x580xbf16, #tpu.memory_space<vmem>>, vector<16x324xbf16>
    %c40 = arith.constant 40 : index
    %c0_31 = arith.constant 0 : index
    %c0_32 = arith.constant 0 : index
    %32 = vector.load %arg3[%c40, %c0_31, %c0_32] : memref<45x16x16xbf16, #tpu.memory_space<vmem>>, vector<1x16x16xbf16>
    %33 = vector.shape_cast %32 : vector<1x16x16xbf16> to vector<16x16xbf16>
    %cst_33 = arith.constant dense<0.000000e+00> : vector<16x324xf32>
    %34 = tpu.matmul %33, %31, %cst_33 {dimension_numbers = #tpu.dot_dimension_numbers<[1], [0], [0], [1], [0, 0, 1, 1], [], []>} : vector<16x16xbf16>, vector<16x324xbf16>, vector<16x324xf32> -> vector<16x324xf32>
    %35 = arith.addf %30, %34 : vector<16x324xf32>
    %c0_34 = arith.constant 0 : index
    %c129 = arith.constant 129 : index
    %36 = vector.load %arg7[%c0_34, %c129] : memref<16x580xbf16, #tpu.memory_space<vmem>>, vector<16x324xbf16>
    %c41 = arith.constant 41 : index
    %c0_35 = arith.constant 0 : index
    %c0_36 = arith.constant 0 : index
    %37 = vector.load %arg3[%c41, %c0_35, %c0_36] : memref<45x16x16xbf16, #tpu.memory_space<vmem>>, vector<1x16x16xbf16>
    %38 = vector.shape_cast %37 : vector<1x16x16xbf16> to vector<16x16xbf16>
    %cst_37 = arith.constant dense<0.000000e+00> : vector<16x324xf32>
    %39 = tpu.matmul %38, %36, %cst_37 {dimension_numbers = #tpu.dot_dimension_numbers<[1], [0], [0], [1], [0, 0, 1, 1], [], []>} : vector<16x16xbf16>, vector<16x324xbf16>, vector<16x324xf32> -> vector<16x324xf32>
    %40 = arith.addf %35, %39 : vector<16x324xf32>
    %c0_38 = arith.constant 0 : index
    %c145 = arith.constant 145 : index
    %41 = vector.load %arg7[%c0_38, %c145] : memref<16x580xbf16, #tpu.memory_space<vmem>>, vector<16x324xbf16>
    %c42 = arith.constant 42 : index
    %c0_39 = arith.constant 0 : index
    %c0_40 = arith.constant 0 : index
    %42 = vector.load %arg3[%c42, %c0_39, %c0_40] : memref<45x16x16xbf16, #tpu.memory_space<vmem>>, vector<1x16x16xbf16>
    %43 = vector.shape_cast %42 : vector<1x16x16xbf16> to vector<16x16xbf16>
    %cst_41 = arith.constant dense<0.000000e+00> : vector<16x324xf32>
    %44 = tpu.matmul %43, %41, %cst_41 {dimension_numbers = #tpu.dot_dimension_numbers<[1], [0], [0], [1], [0, 0, 1, 1], [], []>} : vector<16x16xbf16>, vector<16x324xbf16>, vector<16x324xf32> -> vector<16x324xf32>
    %45 = arith.addf %40, %44 : vector<16x324xf32>
    %c0_42 = arith.constant 0 : index
    %c146 = arith.constant 146 : index
    %46 = vector.load %arg7[%c0_42, %c146] : memref<16x580xbf16, #tpu.memory_space<vmem>>, vector<16x324xbf16>
    %c43 = arith.constant 43 : index
    %c0_43 = arith.constant 0 : index
    %c0_44 = arith.constant 0 : index
    %47 = vector.load %arg3[%c43, %c0_43, %c0_44] : memref<45x16x16xbf16, #tpu.memory_space<vmem>>, vector<1x16x16xbf16>
    %48 = vector.shape_cast %47 : vector<1x16x16xbf16> to vector<16x16xbf16>
    %cst_45 = arith.constant dense<0.000000e+00> : vector<16x324xf32>
    %49 = tpu.matmul %48, %46, %cst_45 {dimension_numbers = #tpu.dot_dimension_numbers<[1], [0], [0], [1], [0, 0, 1, 1], [], []>} : vector<16x16xbf16>, vector<16x324xbf16>, vector<16x324xf32> -> vector<16x324xf32>
    %50 = arith.addf %45, %49 : vector<16x324xf32>
    %c0_46 = arith.constant 0 : index
    %c147 = arith.constant 147 : index
    %51 = vector.load %arg7[%c0_46, %c147] : memref<16x580xbf16, #tpu.memory_space<vmem>>, vector<16x324xbf16>
    %c44 = arith.constant 44 : index
    %c0_47 = arith.constant 0 : index
    %c0_48 = arith.constant 0 : index
    %52 = vector.load %arg3[%c44, %c0_47, %c0_48] : memref<45x16x16xbf16, #tpu.memory_space<vmem>>, vector<1x16x16xbf16>
    %53 = vector.shape_cast %52 : vector<1x16x16xbf16> to vector<16x16xbf16>
    %cst_49 = arith.constant dense<0.000000e+00> : vector<16x324xf32>
    %54 = tpu.matmul %53, %51, %cst_49 {dimension_numbers = #tpu.dot_dimension_numbers<[1], [0], [0], [1], [0, 0, 1, 1], [], []>} : vector<16x16xbf16>, vector<16x324xbf16>, vector<16x324xf32> -> vector<16x324xf32>
    %55 = arith.addf %50, %54 : vector<16x324xf32>
    %c4 = arith.constant 4 : index
    %c0_50 = arith.constant 0 : index
    %c0_51 = arith.constant 0 : index
    %56 = vector.load %arg4[%c4, %c0_50, %c0_51] : memref<5x16x1xf32, #tpu.memory_space<vmem>>, vector<1x16x1xf32>
    %57 = vector.shape_cast %56 : vector<1x16x1xf32> to vector<16x1xf32>
    %58 = vector.broadcast %57 : vector<16x1xf32> to vector<16x324xf32>
    %59 = arith.addf %55, %58 : vector<16x324xf32>
    %60 = vector.broadcast %5 : vector<1x324xf32> to vector<16x324xf32>
    %61 = arith.mulf %59, %60 : vector<16x324xf32>
    %c0_52 = arith.constant 0 : index
    %c0_53 = arith.constant 0 : index
    %c0_54 = arith.constant 0 : index
    %62 = vector.load %arg2[%c0_52, %c0_53, %c0_54] : memref<1x16x324xf32, #tpu.memory_space<vmem>>, vector<1x16x324xf32>
    %63 = vector.shape_cast %62 : vector<1x16x324xf32> to vector<16x324xf32>
    %64 = arith.addf %61, %63 : vector<16x324xf32>
    %65 = vector.extract_strided_slice %64 {offsets = [0, 90], sizes = [16, 144], strides = [1, 1]} : vector<16x324xf32> to vector<16x144xf32>
    %c0_55 = arith.constant 0 : index
    %c0_56 = arith.constant 0 : index
    %c0_57 = arith.constant 0 : index
    %66 = vector.load %arg6[%c0_55, %c0_56, %c0_57] : memref<1x16x144xf32, #tpu.memory_space<vmem>>, vector<1x16x144xf32>
    %67 = vector.shape_cast %66 : vector<1x16x144xf32> to vector<16x144xf32>
    %68 = vector.shape_cast %65 : vector<16x144xf32> to vector<1x16x144xf32>
    tpu.vector_store %arg6[%c0_55, %c0_56, %c0_57], %68 {strides = array<i32>} : memref<1x16x144xf32, #tpu.memory_space<vmem>>, vector<1x16x144xf32>,
    return
  }
  func.func @transform_0(%arg0: i32, %arg1: i32) -> (i32, i32, i32) {
    %c2_i32 = arith.constant 2 : i32
    %0 = arith.muli %arg0, %c2_i32 : i32
    %1 = arith.addi %0, %arg1 : i32
    %c0_i32 = arith.constant 0 : i32
    %c0_i32_0 = arith.constant 0 : i32
    %c0_i32_1 = arith.constant 0 : i32
    return %1, %c0_i32, %c0_i32_0 : i32, i32, i32
  }
  func.func @transform_1(%arg0: i32, %arg1: i32) -> (i32, i32, i32) {
    %c0_i32 = arith.constant 0 : i32
    %c0_i32_0 = arith.constant 0 : i32
    %c0_i32_1 = arith.constant 0 : i32
    %c0_i32_2 = arith.constant 0 : i32
    return %c0_i32, %c0_i32_0, %c0_i32_1 : i32, i32, i32
  }
  func.func @transform_2(%arg0: i32, %arg1: i32) -> (i32, i32, i32) {
    %c0_i32 = arith.constant 0 : i32
    %c0_i32_0 = arith.constant 0 : i32
    %c0_i32_1 = arith.constant 0 : i32
    %c0_i32_2 = arith.constant 0 : i32
    return %c0_i32, %c0_i32_0, %c0_i32_1 : i32, i32, i32
  }
  func.func @transform_3(%arg0: i32, %arg1: i32) -> (i32, i32, i32) {
    %c0_i32 = arith.constant 0 : i32
    %c0_i32_0 = arith.constant 0 : i32
    %c0_i32_1 = arith.constant 0 : i32
    return %arg1, %c0_i32, %c0_i32_0 : i32, i32, i32
  }
  func.func @transform_4(%arg0: i32, %arg1: i32) -> (i32, i32, i32) {
    %c2_i32 = arith.constant 2 : i32
    %0 = arith.muli %arg0, %c2_i32 : i32
    %1 = arith.addi %0, %arg1 : i32
    %c0_i32 = arith.constant 0 : i32
    %c0_i32_0 = arith.constant 0 : i32
    %c0_i32_1 = arith.constant 0 : i32
    return %1, %c0_i32, %c0_i32_0 : i32, i32, i32
  }
}

</mosaic_0001>

<llo_original>
// kernel: tpu_custom_call.1
$region0: #{tpu_custom_call.1}
  #allocation0 [shape = 'u32[]', space=smem, size = 0x4, offset = 0x4, fixed_abs, tag = 'smem constant byte address 0x4 - core index']
  #allocation1 [shape = 'u32[72,128]{1,0:T(1,128)}', space=vmem, size = 0x9000, scoped, tag = 'internal scratch']
  #allocation2 [shape = 'bf16[16,580]{1,0:T(8,128)(2,1)}', space=vmem, size = 0x5000, scoped, tag = 'scratch operand']
  #allocation3 [shape = 'f32[16,324]{1,0:T(8,128)}', space=vmem, size = 0x6000, scoped, tag = 'scratch operand']
  %s0 = inlined_call_operand.vmem [shape: f32[4,16,324], index: 0, kind: input, shape index: {}]
  %s1 = inlined_call_operand.vmem [shape: bf16[45,16,16], index: 1, kind: input, shape index: {}]
  %s2 = inlined_call_operand.vmem [shape: f32[5,16,1], index: 2, kind: input, shape index: {}]
  %s3 = inlined_call_operand.vmem [shape: f32[2,1,324], index: 3, kind: input, shape index: {}]
  %s4 = inlined_call_operand.hbm [shape: f32[4,16,144], index: 4, kind: output, shape index: {}]
  %s5 = sld [smem:[#allocation0]]
  $region56: #{tpu_custom_call.1} parent=0
    _
  %s7 = ssub.s32 1, %s5
  %s8 = scalar_select 0, %s7, %s5
  $region1: #{tpu_custom_call.1} parent=0
    #allocation4 [shape = 'u8[32768]{0}', space=vmem, size = 0x8000, scoped, tag = 'output window, operand 0']
    #allocation5 [shape = 's32[2]{0}', space=sflag, size = 0x8, scoped, tag = 'scoped memory for tpu_custom_call.1']
    %9 = vsyncpa [#allocation5], 0
    %s10 = scalar_lea.sflag [#allocation5], 1
    %11 = vsyncpa %s10, 0
    loop: start=0, step=1, limit=6
    $region2: #{tpu_custom_call.1} parent=1 // loop_pre_header
      _
    $region3: #{tpu_custom_call.1} parent=1 // loop_header
      %s13 = sphi 0, %s17
      %p14 = scmp.ge.s32.totalorder %s13, 6
      %s20 = sphi 0, %s32
      %s21 = sphi 0, %s28
      %s22 = sphi 0, %s20
      %s23 = sphi 0, %s21
      %s24 = sphi 0, %s22
      %s25 = sphi 0, %s23
      %s39 = sphi 0, %s41
      %s42 = sphi 0, %s39
      %s43 = sphi 0, %s42
      %s59 = sphi 0, %s43
      %s63 = sphi 0, %s63
      %s65 = sphi 0, %s63
      %s66 = sphi 0, %s65
      %s80 = sphi 0, %s66
      %s84 = sphi 0, %s84
      %s86 = sphi 0, %s84
      %s87 = sphi 0, %s86
      %s101 = sphi 0, %s87
      %s107 = sphi 0, %s109
      %s110 = sphi 0, %s107
      %s111 = sphi 0, %s110
      %s127 = sphi 0, %s111
      %s137 = sphi 0, %s139
      %s140 = sphi 0, %s137
      %s141 = sphi 0, %s140
      %s157 = sphi 0, %s141
    $region4: #{tpu_custom_call.1} parent=1 // loop_header_branch
      %16 = sbr.rel (%p14) target = $region8
    $region5: #{tpu_custom_call.1} parent=1 // loop_body
      %s18 = ssub.s32 %s13, 1
      %s19 = ssub.s32 %s13, 2
      %s26 = sadd.s32 1, %s21
      %p27 = scmp.ge.s32.totalorder %s26, 2
      %s28 = scalar_select %p27, 0, %s26
      %s29 = sadd.s32 1, %s20
      %s30 = scalar_select %p27, %s29, %s20
      %p31 = scmp.ge.s32.totalorder %s30, 2
      %s32 = scalar_select %p31, 0, %s30
      %s33 = smul.u32 %s20, 2
      %s34 = sadd.s32 %s33, %s21
      %s35 = smul.u32 %s32, 2
      %s36 = sadd.s32 %s35, %s28
      %s37 = ssub.s32 %s34, %s36
      %p38 = scmp.eq.s32.totalorder %s37, 0
      %s40 = sadd.s32 %s39, 1
      %s41 = scalar_select %p38, %s39, %s40
      %p44 = pneg %p38
      %p45 = scmp.eq.s32.totalorder %s13, 3
      %p46 = por %p44, %p45
      %p47 = scmp.ne.s32.totalorder %s39, %s42
      %p48 = scmp.eq.s32.totalorder %s13, 0
      %p49 = por %p47, %p48
      %p50 = scmp.ne.s32.totalorder %s39, %s42
      %p51 = scmp.eq.s32.totalorder %s18, 3
      %p52 = por %p50, %p51
      %p53 = scmp.ne.s32.totalorder %s42, %s43
      %p54 = scmp.eq.s32.totalorder %s18, 0
      %p55 = por %p53, %p54
      %p56 = scmp.ne.s32.totalorder %s42, %s43
      %p57 = scmp.eq.s32.totalorder %s19, 3
      %p58 = por %p56, %p57
      %p60 = scmp.ne.s32.totalorder %s43, %s59
      %p61 = scmp.eq.s32.totalorder %s19, 0
      %p62 = por %p60, %p61
      %s64 = sadd.s32 %s63, 1
      %p67 = scmp.eq.s32.totalorder %s13, 3
      %p68 = scmp.ne.s32.totalorder %s63, %s65
      %p69 = scmp.eq.s32.totalorder %s13, 0
      %p70 = por %p68, %p69
      %p71 = scmp.ne.s32.totalorder %s63, %s65
      %p72 = scmp.eq.s32.totalorder %s18, 3
      %p73 = por %p71, %p72
      %p74 = scmp.ne.s32.totalorder %s65, %s66
      %p75 = scmp.eq.s32.totalorder %s18, 0
      %p76 = por %p74, %p75
      %p77 = scmp.ne.s32.totalorder %s65, %s66
      %p78 = scmp.eq.s32.totalorder %s19, 3
      %p79 = por %p77, %p78
      %p81 = scmp.ne.s32.totalorder %s66, %s80
      %p82 = scmp.eq.s32.totalorder %s19, 0
      %p83 = por %p81, %p82
      %s85 = sadd.s32 %s84, 1
      %p88 = scmp.eq.s32.totalorder %s13, 3
      %p89 = scmp.ne.s32.totalorder %s84, %s86
      %p90 = scmp.eq.s32.totalorder %s13, 0
      %p91 = por %p89, %p90
      %p92 = scmp.ne.s32.totalorder %s84, %s86
      %p93 = scmp.eq.s32.totalorder %s18, 3
      %p94 = por %p92, %p93
      %p95 = scmp.ne.s32.totalorder %s86, %s87
      %p96 = scmp.eq.s32.totalorder %s18, 0
      %p97 = por %p95, %p96
      %p98 = scmp.ne.s32.totalorder %s86, %s87
      %p99 = scmp.eq.s32.totalorder %s19, 3
      %p100 = por %p98, %p99
      %p102 = scmp.ne.s32.totalorder %s87, %s101
      %p103 = scmp.eq.s32.totalorder %s19, 0
      %p104 = por %p102, %p103
      %s105 = ssub.s32 %s21, %s28
      %p106 = scmp.eq.s32.totalorder %s105, 0
      %s108 = sadd.s32 %s107, 1
      %s109 = scalar_select %p106, %s107, %s108
      %p112 = pneg %p106
      %p113 = scmp.eq.s32.totalorder %s13, 3
      %p114 = por %p112, %p113
      %p115 = scmp.ne.s32.totalorder %s107, %s110
      %p116 = scmp.eq.s32.totalorder %s13, 0
      %p117 = por %p115, %p116
      %p118 = scmp.ne.s32.totalorder %s107, %s110
      %p119 = scmp.eq.s32.totalorder %s18, 3
      %p120 = por %p118, %p119
      %p121 = scmp.ne.s32.totalorder %s110, %s111
      %p122 = scmp.eq.s32.totalorder %s18, 0
      %p123 = por %p121, %p122
      %p124 = scmp.ne.s32.totalorder %s110, %s111
      %p125 = scmp.eq.s32.totalorder %s19, 3
      %p126 = por %p124, %p125
      %p128 = scmp.ne.s32.totalorder %s111, %s127
      %p129 = scmp.eq.s32.totalorder %s19, 0
      %p130 = por %p128, %p129
      %s131 = smul.u32 %s20, 2
      %s132 = sadd.s32 %s131, %s21
      %s133 = smul.u32 %s32, 2
      %s134 = sadd.s32 %s133, %s28
      %s135 = ssub.s32 %s132, %s134
      %p136 = scmp.eq.s32.totalorder %s135, 0
      %s138 = sadd.s32 %s137, 1
      %s139 = scalar_select %p136, %s137, %s138
      %p142 = pneg %p136
      %p143 = scmp.eq.s32.totalorder %s13, 3
      %p144 = por %p142, %p143
      %p145 = scmp.ne.s32.totalorder %s137, %s140
      %p146 = scmp.eq.s32.totalorder %s13, 0
      %p147 = por %p145, %p146
      %p148 = scmp.ne.s32.totalorder %s137, %s140
      %p149 = scmp.eq.s32.totalorder %s18, 3
      %p150 = por %p148, %p149
      %p151 = scmp.ne.s32.totalorder %s140, %s141
      %p152 = scmp.eq.s32.totalorder %s18, 0
      %p153 = por %p151, %p152
      %p154 = scmp.ne.s32.totalorder %s140, %s141
      %p155 = scmp.eq.s32.totalorder %s19, 3
      %p156 = por %p154, %p155
      %p158 = scmp.ne.s32.totalorder %s141, %s157
      %p159 = scmp.eq.s32.totalorder %s19, 0
      %p160 = por %p158, %p159
      %p161 = scmp.le.s32.totalorder 1, %s13
      %p162 = scmp.lt.s32.totalorder %s13, 5
      %p163 = pnand %p161, %p162
      %p164 = pneg %p163
      // Predicated region
      $region9: #{tpu_custom_call.1} parent=5 // pred_check
        _
      $region10: #{tpu_custom_call.1} parent=5 // pred_check_branch
        %166 = sbr.rel (%p163) target = $region12
      $region11: #{tpu_custom_call.1} parent=5 // pred_region
        %s167 = ssub.s32 %s13, 1
        // Predicated region
        $region13: #{tpu_custom_call.1} parent=11 // pred_check
          %p168 = pneg %p76
        $region14: #{tpu_custom_call.1} parent=11 // pred_check_branch
          %170 = sbr.rel (%p168) target = $region16
        $region15: #{tpu_custom_call.1} parent=11 // pred_region
          _
        $region16: #{tpu_custom_call.1} parent=11 // pred_fallthru
          _
        // Predicated region
        $region17: #{tpu_custom_call.1} parent=11 // pred_check
          %p171 = pneg %p97
        $region18: #{tpu_custom_call.1} parent=11 // pred_check_branch
          %173 = sbr.rel (%p171) target = $region20
        $region19: #{tpu_custom_call.1} parent=11 // pred_region
          _
        $region20: #{tpu_custom_call.1} parent=11 // pred_fallthru
          _
      $region12: #{tpu_custom_call.1} parent=5 // pred_fallthru
        _
      %p174 = scmp.lt.s32.totalorder %s13, 4
      // Predicated region
      $region21: #{tpu_custom_call.1} parent=5 // pred_check
        %p175 = pneg %p174
      $region22: #{tpu_custom_call.1} parent=5 // pred_check_branch
        %177 = sbr.rel (%p175) target = $region24
      $region23: #{tpu_custom_call.1} parent=5 // pred_region
        // Predicated region
        $region25: #{tpu_custom_call.1} parent=23 // pred_check
          %p178 = pneg %p49
        $region26: #{tpu_custom_call.1} parent=23 // pred_check_branch
          %180 = sbr.rel (%p178) target = $region28
        $region27: #{tpu_custom_call.1} parent=23 // pred_region
          %s181 = smul.u32 %s20, 2
          %s182 = sadd.s32 %s181, %s21
          %p183 = scmp.lt.s32.totalorder %s182, 3
          %s184 = scalar_select %p183, %s182, 3
          %s185 = smul.addr %s184, 6
          %s186 = smul.addr %s185, 8
          %s187 = scalar_lea.vmem %s0, %s186
          %s188 = smul.u32 %s20, 2
          %s189 = sadd.s32 %s188, %s21
        $region28: #{tpu_custom_call.1} parent=23 // pred_fallthru
          _
        // Predicated region
        $region29: #{tpu_custom_call.1} parent=23 // pred_check
          %p190 = pneg %p117
        $region30: #{tpu_custom_call.1} parent=23 // pred_check_branch
          %192 = sbr.rel (%p190) target = $region32
        $region31: #{tpu_custom_call.1} parent=23 // pred_region
          %p193 = scmp.lt.s32.totalorder %s21, 1
          %s194 = scalar_select %p193, %s21, 1
          %s195 = smul.addr %s194, 3
          %s196 = scalar_lea.vmem %s3, %s195
        $region32: #{tpu_custom_call.1} parent=23 // pred_fallthru
          _
      $region24: #{tpu_custom_call.1} parent=5 // pred_fallthru
        _
      %p197 = scmp.le.s32.totalorder 1, %s13
      %p198 = scmp.lt.s32.totalorder %s13, 5
      %p199 = pnand %p197, %p198
      %p200 = pneg %p199
      // Predicated region
      $region33: #{tpu_custom_call.1} parent=5 // pred_check
        _
      $region34: #{tpu_custom_call.1} parent=5 // pred_check_branch
        %202 = sbr.rel (%p199) target = $region36
      $region35: #{tpu_custom_call.1} parent=5 // pred_region
        %s203 = ssub.s32 %s13, 1
        %s204 = smul.u32 %s22, 2
        %s205 = sadd.s32 %s204, %s23
        %p206 = scmp.lt.s32.totalorder %s205, 3
        %s207 = scalar_select %p206, %s205, 3
        %s208 = smul.addr %s207, 6
        %s209 = smul.addr %s208, 8
        %s210 = scalar_lea.vmem %s0, %s209
        %p211 = pneg %p55
        %p212 = pneg %p52
        %p213 = pneg %p76
        %p214 = pneg %p73
        %p215 = pneg %p97
        %p216 = pneg %p94
        %p217 = scmp.lt.s32.totalorder %s23, 1
        %s218 = scalar_select %p217, %s23, 1
        %s219 = smul.addr %s218, 3
        %s220 = scalar_lea.vmem %s3, %s219
        %p221 = pneg %p123
        %p222 = pneg %p120
        %p223 = pneg %p153
        %p224 = pneg %p150
        %s225 = sand.u32 %s140, 1
        %s226 = scalar_lea.sflag [#allocation5], %s225
        %s227 = sand.u32 %s140, 1
        %s228 = smul.addr %s227, 32
        %s229 = scalar_lea.vmem [#allocation4], %s228
        %s230 = smul.u32 %s22, 2
        %s231 = sadd.s32 %s230, %s23
        %p232 = scmp.lt.s32.totalorder %s231, 3
        %s233 = scalar_select %p232, %s231, 3
        %s234 = smul.addr %s233, 6
        %s235 = smul.addr %s234, 8
        %s236 = scalar_lea.vmem %s0, %s235
        %s237 = smul.u32 %s22, 2
        %s238 = sadd.s32 %s237, %s23
        %p239 = scmp.lt.s32.totalorder %s23, 1
        %s240 = scalar_select %p239, %s23, 1
        %s241 = smul.addr %s240, 3
        %s242 = scalar_lea.vmem %s3, %s241
        %s243 = smul.u32 %s22, 2
        %s244 = sadd.s32 %s243, %s23
        %246 = vst [vmem:[#allocation2] sm:$0xf] 0
        %247 = vst [vmem:[#allocation2 + $0x14] sm:$0xf] 0
        %vm248 = vcmask 1044000
        %vm249 = vcmask 556036
        %vm250 = vmor %vm249, %vm248
        %251 = vst.msk [vmem:[#allocation2 + $0xc] sm:$0xff] %vm250, 0
        %252 = vst.msk [vmem:[#allocation2 + $0x20] sm:$0xff] %vm250, 0
        %v253 = vld [vmem:[%s242] sm:$0x7]
        %v254 = vld [vmem:[%s236] sm:$0xff]
        %v255 = vld [vmem:[%s236 + $0x8] sm:$0xff]
        %v256 = vld [vmem:[%s236 + $0x10] sm:$0xff]
        %v257 = vld [vmem:[%s236 + $0x18] sm:$0xff]
        %v258 = vld [vmem:[%s236 + $0x20] sm:$0xff]
        %v259 = vld [vmem:[%s236 + $0x28] sm:$0xff]
        %260 = vst [vmem:[#allocation3] sm:$0xff] %v254
        %261 = vst [vmem:[#allocation3 + $0x8] sm:$0xff] %v255
        %vm262 = vcmask 556032
        %263 = vst.msk [vmem:[#allocation3 + $0x10] sm:$0xff] %vm262, %v256
        %264 = vst [vmem:[#allocation3 + $0x18] sm:$0xff] %v257
        %265 = vst [vmem:[#allocation3 + $0x20] sm:$0xff] %v258
        %266 = vst.msk [vmem:[#allocation3 + $0x28] sm:$0xff] %vm262, %v259
        %v267 = vpack.c.bf16 %v255, %v254
        %v268 = vpack.c.bf16 %v256, %v256
        %v269 = vpack.c.bf16 %v258, %v257
        %v270 = vpack.c.bf16 %v259, %v259
        %271 = vst [vmem:[#allocation2 + $0x4] sm:$0xff] %v267
        %vm272 = vcmask 551936
        %273 = vst.msk [vmem:[#allocation2 + $0xc] sm:$0xf] %vm272, %v268
        %274 = vst [vmem:[#allocation2 + $0x18] sm:$0xff] %v269
        %275 = vst.msk [vmem:[#allocation2 + $0x20] sm:$0xf] %vm272, %v270
        loop: start=0, step=1, limit=2
        $region37: #{tpu_custom_call.1} parent=35 // loop_pre_header
          _
        $region38: #{tpu_custom_call.1} parent=35 // loop_header
          %s277 = sphi 0, %s281
          %p278 = scmp.ge.s32.totalorder %s277, 2
        $region39: #{tpu_custom_call.1} parent=35 // loop_header_branch
          %280 = sbr.rel (%p278) target = $region43
        $region40: #{tpu_custom_call.1} parent=35 // loop_body
          %s282 = smul.u32 %s277, 2
          %v283 = vld [vmem:[#allocation2] sm:$0xff]
          %v284 = vld [vmem:[#allocation2 + $0x8] sm:$0xff]
          %v285 = vld [vmem:[#allocation2 + $0x14] sm:$0xff]
          %v286 = vld [vmem:[#allocation2 + $0x1c] sm:$0xff]
          %s287 = smul.u32 %s277, 18
          %s288 = smul.u32 %s287, 2
          %s289 = smul.addr %s288, 4
          %s290 = scalar_lea.vmem %s1, %s289
          %v291 = vld [vmem:[%s290] sm:$0xf]
          %v292 = vld [vmem:[%s290 + $0x4] sm:$0xf]
          %s293 = sadd.s32 %s287, 1
          %s294 = smul.u32 %s293, 2
          %s295 = smul.addr %s294, 4
          %s296 = scalar_lea.vmem %s1, %s295
          %v297 = vld [vmem:[%s296] sm:$0xf]
          %v298 = vld [vmem:[%s296 + $0x4] sm:$0xf]
          %v301 = vunpack.c.l.b16 %v297
          %v302 = vunpack.c.l.b16 %v298
          %v303 = vpack.c.b16 %v302, %v301
          %v308 = vunpack.c.l.b16 %v283
          %v309 = vunpack.c.h.b16 %v283
          %v310 = vunpack.c.l.b16 %v284
          %v311 = vunpack.c.h.b16 %v284
          %v312 = vunpack.c.l.b16 %v285
          %v313 = vunpack.c.h.b16 %v285
          %v314 = vunpack.c.l.b16 %v286
          %v315 = vunpack.c.h.b16 %v286
          %v316 = vpack.c.b16 %v312, %v308
          %v317 = vpack.c.b16 %v313, %v309
          %v318 = vpack.c.b16 %v314, %v310
          %v319 = vpack.c.b16 %v315, %v311
          %320 = vrot.lane.b32.xlu0 %v316, 18
          %v321 = vpop.permute.xlu0 %320
          %322 = vrot.lane.b32.xlu0 %v317, 18
          %v323 = vpop.permute.xlu0 %322
          %324 = vrot.lane.b32.xlu0 %v318, 18
          %v325 = vpop.permute.xlu0 %324
          %326 = vrot.lane.b32.xlu0 %v319, 18
          %v327 = vpop.permute.xlu0 %326
          %vm328 = vcmask 146432
          %v329 = vsel %vm328, %v321, %v323
          %v330 = vsel %vm328, %v323, %v325
          %v331 = vsel %vm328, %v325, %v327
          %vm335 = vcmask 130048
          %v337 = vsel %vm335, %v303, 0
          %339 = vmatpush.bf16.msra.mxu0 0
          %340 = vmatpush.bf16.msra.mxu0 0
          %341 = vmatpush.bf16.msra.mxu0 0
          %342 = vmatpush.bf16.msra.mxu0 0
          %343 = vmatpush.bf16.msra.mxu0 0
          %344 = vmatpush.bf16.msra.mxu0 0
          %345 = vmatpush.bf16.msra.mxu0 0
          %346 = vmatpush.bf16.msra.mxu0 %v329
          %347 = vmatmul.bf16.gmra.mxu0 %v337
          %v348 = vpop.f32.mrf.mxu0
          %v349 = vadd.f32 0.0, %v348
          %v350 = vpop.f32.mrf.mxu0
          %v351 = vadd.f32 0.0, %v350
          %352 = vdwg.mxu0
          %353 = vmatpush.bf16.msra.mxu0 0
          %354 = vmatpush.bf16.msra.mxu0 0
          %355 = vmatpush.bf16.msra.mxu0 0
          %356 = vmatpush.bf16.msra.mxu0 0
          %357 = vmatpush.bf16.msra.mxu0 0
          %358 = vmatpush.bf16.msra.mxu0 0
          %359 = vmatpush.bf16.msra.mxu0 0
          %360 = vmatpush.bf16.msra.mxu0 %v330
          %361 = vmatmul.bf16.gmra.mxu0 %v337
          %v362 = vpop.f32.mrf.mxu0
          %v363 = vadd.f32 0.0, %v362
          %v364 = vpop.f32.mrf.mxu0
          %v365 = vadd.f32 0.0, %v364
          %366 = vdwg.mxu0
          %367 = vmatpush.bf16.msra.mxu0 0
          %368 = vmatpush.bf16.msra.mxu0 0
          %369 = vmatpush.bf16.msra.mxu0 0
          %370 = vmatpush.bf16.msra.mxu0 0
          %371 = vmatpush.bf16.msra.mxu0 0
          %372 = vmatpush.bf16.msra.mxu0 0
          %373 = vmatpush.bf16.msra.mxu0 0
          %374 = vmatpush.bf16.msra.mxu0 %v331
          %375 = vmatmul.bf16.gmra.mxu0 %v337
          %v376 = vpop.f32.mrf.mxu0
          %v377 = vadd.f32 0.0, %v376
          %v378 = vpop.f32.mrf.mxu0
          %v379 = vadd.f32 0.0, %v378
          %380 = vdwg.mxu0
          %v383 = vunpack.c.l.b16 %v291
          %v384 = vunpack.c.l.b16 %v292
          %v385 = vpack.c.b16 %v384, %v383
          %386 = vrot.lane.b32.xlu0 %v316, 19
          %v387 = vpop.permute.xlu0 %386
          %388 = vrot.lane.b32.xlu0 %v317, 19
          %v389 = vpop.permute.xlu0 %388
          %390 = vrot.lane.b32.xlu0 %v318, 19
          %v391 = vpop.permute.xlu0 %390
          %392 = vrot.lane.b32.xlu0 %v319, 19
          %v393 = vpop.permute.xlu0 %392
          %vm394 = vcmask 154624
          %v395 = vsel %vm394, %v387, %v389
          %v396 = vsel %vm394, %v389, %v391
          %v397 = vsel %vm394, %v391, %v393
          %v402 = vsel %vm335, %v385, 0
          %404 = vmatpush.bf16.msra.mxu0 0
          %405 = vmatpush.bf16.msra.mxu0 0
          %406 = vmatpush.bf16.msra.mxu0 0
          %407 = vmatpush.bf16.msra.mxu0 0
          %408 = vmatpush.bf16.msra.mxu0 0
          %409 = vmatpush.bf16.msra.mxu0 0
          %410 = vmatpush.bf16.msra.mxu0 0
          %411 = vmatpush.bf16.msra.mxu0 %v395
          %412 = vmatmul.bf16.gmra.mxu0 %v402
          %v413 = vpop.f32.mrf.mxu0
          %v414 = vadd.f32 %v349, %v413
          %v415 = vpop.f32.mrf.mxu0
          %v416 = vadd.f32 %v351, %v415
          %417 = vdwg.mxu0
          %418 = vmatpush.bf16.msra.mxu0 0
          %419 = vmatpush.bf16.msra.mxu0 0
          %420 = vmatpush.bf16.msra.mxu0 0
          %421 = vmatpush.bf16.msra.mxu0 0
          %422 = vmatpush.bf16.msra.mxu0 0
          %423 = vmatpush.bf16.msra.mxu0 0
          %424 = vmatpush.bf16.msra.mxu0 0
          %425 = vmatpush.bf16.msra.mxu0 %v396
          %426 = vmatmul.bf16.gmra.mxu0 %v402
          %v427 = vpop.f32.mrf.mxu0
          %v428 = vadd.f32 %v363, %v427
          %v429 = vpop.f32.mrf.mxu0
          %v430 = vadd.f32 %v365, %v429
          %431 = vdwg.mxu0
          %432 = vmatpush.bf16.msra.mxu0 0
          %433 = vmatpush.bf16.msra.mxu0 0
          %434 = vmatpush.bf16.msra.mxu0 0
          %435 = vmatpush.bf16.msra.mxu0 0
          %436 = vmatpush.bf16.msra.mxu0 0
          %437 = vmatpush.bf16.msra.mxu0 0
          %438 = vmatpush.bf16.msra.mxu0 0
          %439 = vmatpush.bf16.msra.mxu0 %v397
          %440 = vmatmul.bf16.gmra.mxu0 %v402
          %v441 = vpop.f32.mrf.mxu0
          %v442 = vadd.f32 %v377, %v441
          %v443 = vpop.f32.mrf.mxu0
          %v444 = vadd.f32 %v379, %v443
          %445 = vdwg.mxu0
          %s446 = sadd.s32 %s287, 2
          %s447 = smul.u32 %s446, 2
          %s448 = smul.addr %s447, 4
          %s449 = scalar_lea.vmem %s1, %s448
          %v450 = vld [vmem:[%s449] sm:$0xf]
          %v451 = vld [vmem:[%s449 + $0x4] sm:$0xf]
          %v454 = vunpack.c.l.b16 %v450
          %v455 = vunpack.c.l.b16 %v451
          %v456 = vpack.c.b16 %v455, %v454
          %457 = vrot.lane.b32.xlu0 %v316, 17
          %v458 = vpop.permute.xlu0 %457
          %459 = vrot.lane.b32.xlu0 %v317, 17
          %v460 = vpop.permute.xlu0 %459
          %461 = vrot.lane.b32.xlu0 %v318, 17
          %v462 = vpop.permute.xlu0 %461
          %463 = vrot.lane.b32.xlu0 %v319, 17
          %v464 = vpop.permute.xlu0 %463
          %vm465 = vcmask 138240
          %v466 = vsel %vm465, %v458, %v460
          %v467 = vsel %vm465, %v460, %v462
          %v468 = vsel %vm465, %v462, %v464
          %v473 = vsel %vm335, %v456, 0
          %475 = vmatpush.bf16.msra.mxu0 0
          %476 = vmatpush.bf16.msra.mxu0 0
          %477 = vmatpush.bf16.msra.mxu0 0
          %478 = vmatpush.bf16.msra.mxu0 0
          %479 = vmatpush.bf16.msra.mxu0 0
          %480 = vmatpush.bf16.msra.mxu0 0
          %481 = vmatpush.bf16.msra.mxu0 0
          %482 = vmatpush.bf16.msra.mxu0 %v466
          %483 = vmatmul.bf16.gmra.mxu0 %v473
          %v484 = vpop.f32.mrf.mxu0
          %v485 = vadd.f32 0.0, %v484
          %v486 = vpop.f32.mrf.mxu0
          %v487 = vadd.f32 0.0, %v486
          %488 = vdwg.mxu0
          %489 = vmatpush.bf16.msra.mxu0 0
          %490 = vmatpush.bf16.msra.mxu0 0
          %491 = vmatpush.bf16.msra.mxu0 0
          %492 = vmatpush.bf16.msra.mxu0 0
          %493 = vmatpush.bf16.msra.mxu0 0
          %494 = vmatpush.bf16.msra.mxu0 0
          %495 = vmatpush.bf16.msra.mxu0 0
          %496 = vmatpush.bf16.msra.mxu0 %v467
          %497 = vmatmul.bf16.gmra.mxu0 %v473
          %v498 = vpop.f32.mrf.mxu0
          %v499 = vadd.f32 0.0, %v498
          %v500 = vpop.f32.mrf.mxu0
          %v501 = vadd.f32 0.0, %v500
          %502 = vdwg.mxu0
          %503 = vmatpush.bf16.msra.mxu0 0
          %504 = vmatpush.bf16.msra.mxu0 0
          %505 = vmatpush.bf16.msra.mxu0 0
          %506 = vmatpush.bf16.msra.mxu0 0
          %507 = vmatpush.bf16.msra.mxu0 0
          %508 = vmatpush.bf16.msra.mxu0 0
          %509 = vmatpush.bf16.msra.mxu0 0
          %510 = vmatpush.bf16.msra.mxu0 %v468
          %511 = vmatmul.bf16.gmra.mxu0 %v473
          %v512 = vpop.f32.mrf.mxu0
          %v513 = vadd.f32 0.0, %v512
          %v514 = vpop.f32.mrf.mxu0
          %v515 = vadd.f32 0.0, %v514
          %516 = vdwg.mxu0
          %v517 = vadd.f32 %v414, %v485
          %v518 = vadd.f32 %v428, %v499
          %v519 = vadd.f32 %v442, %v513
          %v520 = vadd.f32 %v416, %v487
          %v521 = vadd.f32 %v430, %v501
          %v522 = vadd.f32 %v444, %v515
          %s523 = sadd.s32 %s287, 3
          %s524 = smul.u32 %s523, 2
          %s525 = smul.addr %s524, 4
          %s526 = scalar_lea.vmem %s1, %s525
          %v527 = vld [vmem:[%s526] sm:$0xf]
          %v528 = vld [vmem:[%s526 + $0x4] sm:$0xf]
          %v531 = vunpack.c.l.b16 %v527
          %v532 = vunpack.c.l.b16 %v528
          %v533 = vpack.c.b16 %v532, %v531
          %534 = vrot.lane.b32.xlu0 %v316, 1
          %v535 = vpop.permute.xlu0 %534
          %536 = vrot.lane.b32.xlu0 %v317, 1
          %v537 = vpop.permute.xlu0 %536
          %538 = vrot.lane.b32.xlu0 %v318, 1
          %v539 = vpop.permute.xlu0 %538
          %540 = vrot.lane.b32.xlu0 %v319, 1
          %v541 = vpop.permute.xlu0 %540
          %vm542 = vcmask 7168
          %v543 = vsel %vm542, %v535, %v537
          %v544 = vsel %vm542, %v537, %v539
          %v545 = vsel %vm542, %v539, %v541
          %v550 = vsel %vm335, %v533, 0
          %552 = vmatpush.bf16.msra.mxu0 0
          %553 = vmatpush.bf16.msra.mxu0 0
          %554 = vmatpush.bf16.msra.mxu0 0
          %555 = vmatpush.bf16.msra.mxu0 0
          %556 = vmatpush.bf16.msra.mxu0 0
          %557 = vmatpush.bf16.msra.mxu0 0
          %558 = vmatpush.bf16.msra.mxu0 0
          %559 = vmatpush.bf16.msra.mxu0 %v543
          %560 = vmatmul.bf16.gmra.mxu0 %v550
          %v561 = vpop.f32.mrf.mxu0
          %v562 = vadd.f32 0.0, %v561
          %v563 = vpop.f32.mrf.mxu0
          %v564 = vadd.f32 0.0, %v563
          %565 = vdwg.mxu0
          %566 = vmatpush.bf16.msra.mxu0 0
          %567 = vmatpush.bf16.msra.mxu0 0
          %568 = vmatpush.bf16.msra.mxu0 0
          %569 = vmatpush.bf16.msra.mxu0 0
          %570 = vmatpush.bf16.msra.mxu0 0
          %571 = vmatpush.bf16.msra.mxu0 0
          %572 = vmatpush.bf16.msra.mxu0 0
          %573 = vmatpush.bf16.msra.mxu0 %v544
          %574 = vmatmul.bf16.gmra.mxu0 %v550
          %v575 = vpop.f32.mrf.mxu0
          %v576 = vadd.f32 0.0, %v575
          %v577 = vpop.f32.mrf.mxu0
          %v578 = vadd.f32 0.0, %v577
          %579 = vdwg.mxu0
          %580 = vmatpush.bf16.msra.mxu0 0
          %581 = vmatpush.bf16.msra.mxu0 0
          %582 = vmatpush.bf16.msra.mxu0 0
          %583 = vmatpush.bf16.msra.mxu0 0
          %584 = vmatpush.bf16.msra.mxu0 0
          %585 = vmatpush.bf16.msra.mxu0 0
          %586 = vmatpush.bf16.msra.mxu0 0
          %587 = vmatpush.bf16.msra.mxu0 %v545
          %588 = vmatmul.bf16.gmra.mxu0 %v550
          %v589 = vpop.f32.mrf.mxu0
          %v590 = vadd.f32 0.0, %v589
          %v591 = vpop.f32.mrf.mxu0
          %v592 = vadd.f32 0.0, %v591
          %593 = vdwg.mxu0
          %v594 = vadd.f32 %v517, %v562
          %v595 = vadd.f32 %v518, %v576
          %v596 = vadd.f32 %v519, %v590
          %v597 = vadd.f32 %v520, %v564
          %v598 = vadd.f32 %v521, %v578
          %v599 = vadd.f32 %v522, %v592
          %v600 = vld [vmem:[#allocation2 + $0x4] sm:$0xff]
          %v601 = vld [vmem:[#allocation2 + $0xc] sm:$0xf]
          %v602 = vld [vmem:[#allocation2 + $0x18] sm:$0xff]
          %v603 = vld [vmem:[#allocation2 + $0x20] sm:$0xf]
          %s604 = sadd.s32 %s287, 4
          %s605 = smul.u32 %s604, 2
          %s606 = smul.addr %s605, 4
          %s607 = scalar_lea.vmem %s1, %s606
          %v608 = vld [vmem:[%s607] sm:$0xf]
          %v609 = vld [vmem:[%s607 + $0x4] sm:$0xf]
          %v612 = vunpack.c.l.b16 %v608
          %v613 = vunpack.c.l.b16 %v609
          %v614 = vpack.c.b16 %v613, %v612
          %v619 = vunpack.c.l.b16 %v600
          %v620 = vunpack.c.h.b16 %v600
          %v621 = vunpack.c.l.b16 %v601
          %v622 = vunpack.c.l.b16 %v602
          %v623 = vunpack.c.h.b16 %v602
          %v624 = vunpack.c.l.b16 %v603
          %v625 = vpack.c.b16 %v622, %v619
          %v626 = vpack.c.b16 %v623, %v620
          %v627 = vpack.c.b16 %v624, %v621
          %v632 = vsel %vm335, %v614, 0
          %634 = vmatpush.bf16.msra.mxu0 0
          %635 = vmatpush.bf16.msra.mxu0 0
          %636 = vmatpush.bf16.msra.mxu0 0
          %637 = vmatpush.bf16.msra.mxu0 0
          %638 = vmatpush.bf16.msra.mxu0 0
          %639 = vmatpush.bf16.msra.mxu0 0
          %640 = vmatpush.bf16.msra.mxu0 0
          %641 = vmatpush.bf16.msra.mxu0 %v625
          %642 = vmatmul.bf16.gmra.mxu0 %v632
          %v643 = vpop.f32.mrf.mxu0
          %v644 = vadd.f32 0.0, %v643
          %v645 = vpop.f32.mrf.mxu0
          %v646 = vadd.f32 0.0, %v645
          %647 = vdwg.mxu0
          %648 = vmatpush.bf16.msra.mxu0 0
          %649 = vmatpush.bf16.msra.mxu0 0
          %650 = vmatpush.bf16.msra.mxu0 0
          %651 = vmatpush.bf16.msra.mxu0 0
          %652 = vmatpush.bf16.msra.mxu0 0
          %653 = vmatpush.bf16.msra.mxu0 0
          %654 = vmatpush.bf16.msra.mxu0 0
          %655 = vmatpush.bf16.msra.mxu0 %v626
          %656 = vmatmul.bf16.gmra.mxu0 %v632
          %v657 = vpop.f32.mrf.mxu0
          %v658 = vadd.f32 0.0, %v657
          %v659 = vpop.f32.mrf.mxu0
          %v660 = vadd.f32 0.0, %v659
          %661 = vdwg.mxu0
          %662 = vmatpush.bf16.msra.mxu0 0
          %663 = vmatpush.bf16.msra.mxu0 0
          %664 = vmatpush.bf16.msra.mxu0 0
          %665 = vmatpush.bf16.msra.mxu0 0
          %666 = vmatpush.bf16.msra.mxu0 0
          %667 = vmatpush.bf16.msra.mxu0 0
          %668 = vmatpush.bf16.msra.mxu0 0
          %669 = vmatpush.bf16.msra.mxu0 %v627
          %670 = vmatmul.bf16.gmra.mxu0 %v632
          %v671 = vpop.f32.mrf.mxu0
          %v672 = vadd.f32 0.0, %v671
          %v673 = vpop.f32.mrf.mxu0
          %v674 = vadd.f32 0.0, %v673
          %675 = vdwg.mxu0
          %v676 = vadd.f32 %v594, %v644
          %v677 = vadd.f32 %v595, %v658
          %v678 = vadd.f32 %v596, %v672
          %v679 = vadd.f32 %v597, %v646
          %v680 = vadd.f32 %v598, %v660
          %v681 = vadd.f32 %v599, %v674
          %s682 = sadd.s32 %s287, 5
          %s683 = smul.u32 %s682, 2
          %s684 = smul.addr %s683, 4
          %s685 = scalar_lea.vmem %s1, %s684
          %v686 = vld [vmem:[%s685] sm:$0xf]
          %v687 = vld [vmem:[%s685 + $0x4] sm:$0xf]
          %v690 = vunpack.c.l.b16 %v686
          %v691 = vunpack.c.l.b16 %v687
          %v692 = vpack.c.b16 %v691, %v690
          %693 = vrot.lane.b32.xlu0 %v625, 127
          %v694 = vpop.permute.xlu0 %693
          %695 = vrot.lane.b32.xlu0 %v626, 127
          %v696 = vpop.permute.xlu0 %695
          %697 = vrot.lane.b32.xlu0 %v627, 127
          %v698 = vpop.permute.xlu0 %697
          %vm699 = vcmask 1039360
          %v700 = vsel %vm699, %v694, %v696
          %v701 = vsel %vm699, %v696, %v698
          %v706 = vsel %vm335, %v692, 0
          %708 = vmatpush.bf16.msra.mxu0 0
          %709 = vmatpush.bf16.msra.mxu0 0
          %710 = vmatpush.bf16.msra.mxu0 0
          %711 = vmatpush.bf16.msra.mxu0 0
          %712 = vmatpush.bf16.msra.mxu0 0
          %713 = vmatpush.bf16.msra.mxu0 0
          %714 = vmatpush.bf16.msra.mxu0 0
          %715 = vmatpush.bf16.msra.mxu0 %v700
          %716 = vmatmul.bf16.gmra.mxu0 %v706
          %v717 = vpop.f32.mrf.mxu0
          %v718 = vadd.f32 0.0, %v717
          %v719 = vpop.f32.mrf.mxu0
          %v720 = vadd.f32 0.0, %v719
          %721 = vdwg.mxu0
          %722 = vmatpush.bf16.msra.mxu0 0
          %723 = vmatpush.bf16.msra.mxu0 0
          %724 = vmatpush.bf16.msra.mxu0 0
          %725 = vmatpush.bf16.msra.mxu0 0
          %726 = vmatpush.bf16.msra.mxu0 0
          %727 = vmatpush.bf16.msra.mxu0 0
          %728 = vmatpush.bf16.msra.mxu0 0
          %729 = vmatpush.bf16.msra.mxu0 %v701
          %730 = vmatmul.bf16.gmra.mxu0 %v706
          %v731 = vpop.f32.mrf.mxu0
          %v732 = vadd.f32 0.0, %v731
          %v733 = vpop.f32.mrf.mxu0
          %v734 = vadd.f32 0.0, %v733
          %735 = vdwg.mxu0
          %736 = vmatpush.bf16.msra.mxu0 0
          %737 = vmatpush.bf16.msra.mxu0 0
          %738 = vmatpush.bf16.msra.mxu0 0
          %739 = vmatpush.bf16.msra.mxu0 0
          %740 = vmatpush.bf16.msra.mxu0 0
          %741 = vmatpush.bf16.msra.mxu0 0
          %742 = vmatpush.bf16.msra.mxu0 0
          %743 = vmatpush.bf16.msra.mxu0 %v698
          %744 = vmatmul.bf16.gmra.mxu0 %v706
          %v745 = vpop.f32.mrf.mxu0
          %v746 = vadd.f32 0.0, %v745
          %v747 = vpop.f32.mrf.mxu0
          %v748 = vadd.f32 0.0, %v747
          %749 = vdwg.mxu0
          %v750 = vadd.f32 %v676, %v718
          %v751 = vadd.f32 %v677, %v732
          %v752 = vadd.f32 %v678, %v746
          %v753 = vadd.f32 %v679, %v720
          %v754 = vadd.f32 %v680, %v734
          %v755 = vadd.f32 %v681, %v748
          %s756 = sadd.s32 %s287, 6
          %s757 = smul.u32 %s756, 2
          %s758 = smul.addr %s757, 4
          %s759 = scalar_lea.vmem %s1, %s758
          %v760 = vld [vmem:[%s759] sm:$0xf]
          %v761 = vld [vmem:[%s759 + $0x4] sm:$0xf]
          %v764 = vunpack.c.l.b16 %v760
          %v765 = vunpack.c.l.b16 %v761
          %v766 = vpack.c.b16 %v765, %v764
          %767 = vrot.lane.b32.xlu0 %v625, 111
          %v768 = vpop.permute.xlu0 %767
          %769 = vrot.lane.b32.xlu0 %v626, 111
          %v770 = vpop.permute.xlu0 %769
          %771 = vrot.lane.b32.xlu0 %v627, 111
          %v772 = vpop.permute.xlu0 %771
          %vm773 = vcmask 908288
          %v774 = vsel %vm773, %v768, %v770
          %v775 = vsel %vm773, %v770, %v772
          %v780 = vsel %vm335, %v766, 0
          %782 = vmatpush.bf16.msra.mxu0 0
          %783 = vmatpush.bf16.msra.mxu0 0
          %784 = vmatpush.bf16.msra.mxu0 0
          %785 = vmatpush.bf16.msra.mxu0 0
          %786 = vmatpush.bf16.msra.mxu0 0
          %787 = vmatpush.bf16.msra.mxu0 0
          %788 = vmatpush.bf16.msra.mxu0 0
          %789 = vmatpush.bf16.msra.mxu0 %v774
          %790 = vmatmul.bf16.gmra.mxu0 %v780
          %v791 = vpop.f32.mrf.mxu0
          %v792 = vadd.f32 0.0, %v791
          %v793 = vpop.f32.mrf.mxu0
          %v794 = vadd.f32 0.0, %v793
          %795 = vdwg.mxu0
          %796 = vmatpush.bf16.msra.mxu0 0
          %797 = vmatpush.bf16.msra.mxu0 0
          %798 = vmatpush.bf16.msra.mxu0 0
          %799 = vmatpush.bf16.msra.mxu0 0
          %800 = vmatpush.bf16.msra.mxu0 0
          %801 = vmatpush.bf16.msra.mxu0 0
          %802 = vmatpush.bf16.msra.mxu0 0
          %803 = vmatpush.bf16.msra.mxu0 %v775
          %804 = vmatmul.bf16.gmra.mxu0 %v780
          %v805 = vpop.f32.mrf.mxu0
          %v806 = vadd.f32 0.0, %v805
          %v807 = vpop.f32.mrf.mxu0
          %v808 = vadd.f32 0.0, %v807
          %809 = vdwg.mxu0
          %810 = vmatpush.bf16.msra.mxu0 0
          %811 = vmatpush.bf16.msra.mxu0 0
          %812 = vmatpush.bf16.msra.mxu0 0
          %813 = vmatpush.bf16.msra.mxu0 0
          %814 = vmatpush.bf16.msra.mxu0 0
          %815 = vmatpush.bf16.msra.mxu0 0
          %816 = vmatpush.bf16.msra.mxu0 0
          %817 = vmatpush.bf16.msra.mxu0 %v772
          %818 = vmatmul.bf16.gmra.mxu0 %v780
          %v819 = vpop.f32.mrf.mxu0
          %v820 = vadd.f32 0.0, %v819
          %v821 = vpop.f32.mrf.mxu0
          %v822 = vadd.f32 0.0, %v821
          %823 = vdwg.mxu0
          %v824 = vadd.f32 %v750, %v792
          %v825 = vadd.f32 %v751, %v806
          %v826 = vadd.f32 %v752, %v820
          %v827 = vadd.f32 %v753, %v794
          %v828 = vadd.f32 %v754, %v808
          %v829 = vadd.f32 %v755, %v822
          %s830 = sadd.s32 %s287, 7
          %s831 = smul.u32 %s830, 2
          %s832 = smul.addr %s831, 4
          %s833 = scalar_lea.vmem %s1, %s832
          %v834 = vld [vmem:[%s833] sm:$0xf]
          %v835 = vld [vmem:[%s833 + $0x4] sm:$0xf]
          %v838 = vunpack.c.l.b16 %v834
          %v839 = vunpack.c.l.b16 %v835
          %v840 = vpack.c.b16 %v839, %v838
          %841 = vrot.lane.b32.xlu0 %v625, 110
          %v842 = vpop.permute.xlu0 %841
          %843 = vrot.lane.b32.xlu0 %v626, 110
          %v844 = vpop.permute.xlu0 %843
          %845 = vrot.lane.b32.xlu0 %v627, 110
          %v846 = vpop.permute.xlu0 %845
          %vm847 = vcmask 900096
          %v848 = vsel %vm847, %v842, %v844
          %v849 = vsel %vm847, %v844, %v846
          %v854 = vsel %vm335, %v840, 0
          %856 = vmatpush.bf16.msra.mxu0 0
          %857 = vmatpush.bf16.msra.mxu0 0
          %858 = vmatpush.bf16.msra.mxu0 0
          %859 = vmatpush.bf16.msra.mxu0 0
          %860 = vmatpush.bf16.msra.mxu0 0
          %861 = vmatpush.bf16.msra.mxu0 0
          %862 = vmatpush.bf16.msra.mxu0 0
          %863 = vmatpush.bf16.msra.mxu0 %v848
          %864 = vmatmul.bf16.gmra.mxu0 %v854
          %v865 = vpop.f32.mrf.mxu0
          %v866 = vadd.f32 0.0, %v865
          %v867 = vpop.f32.mrf.mxu0
          %v868 = vadd.f32 0.0, %v867
          %869 = vdwg.mxu0
          %870 = vmatpush.bf16.msra.mxu0 0
          %871 = vmatpush.bf16.msra.mxu0 0
          %872 = vmatpush.bf16.msra.mxu0 0
          %873 = vmatpush.bf16.msra.mxu0 0
          %874 = vmatpush.bf16.msra.mxu0 0
          %875 = vmatpush.bf16.msra.mxu0 0
          %876 = vmatpush.bf16.msra.mxu0 0
          %877 = vmatpush.bf16.msra.mxu0 %v849
          %878 = vmatmul.bf16.gmra.mxu0 %v854
          %v879 = vpop.f32.mrf.mxu0
          %v880 = vadd.f32 0.0, %v879
          %v881 = vpop.f32.mrf.mxu0
          %v882 = vadd.f32 0.0, %v881
          %883 = vdwg.mxu0
          %884 = vmatpush.bf16.msra.mxu0 0
          %885 = vmatpush.bf16.msra.mxu0 0
          %886 = vmatpush.bf16.msra.mxu0 0
          %887 = vmatpush.bf16.msra.mxu0 0
          %888 = vmatpush.bf16.msra.mxu0 0
          %889 = vmatpush.bf16.msra.mxu0 0
          %890 = vmatpush.bf16.msra.mxu0 0
          %891 = vmatpush.bf16.msra.mxu0 %v846
          %892 = vmatmul.bf16.gmra.mxu0 %v854
          %v893 = vpop.f32.mrf.mxu0
          %v894 = vadd.f32 0.0, %v893
          %v895 = vpop.f32.mrf.mxu0
          %v896 = vadd.f32 0.0, %v895
          %897 = vdwg.mxu0
          %v898 = vadd.f32 %v824, %v866
          %v899 = vadd.f32 %v825, %v880
          %v900 = vadd.f32 %v826, %v894
          %v901 = vadd.f32 %v827, %v868
          %v902 = vadd.f32 %v828, %v882
          %v903 = vadd.f32 %v829, %v896
          %s904 = sadd.s32 %s287, 8
          %s905 = smul.u32 %s904, 2
          %s906 = smul.addr %s905, 4
          %s907 = scalar_lea.vmem %s1, %s906
          %v908 = vld [vmem:[%s907] sm:$0xf]
          %v909 = vld [vmem:[%s907 + $0x4] sm:$0xf]
          %v912 = vunpack.c.l.b16 %v908
          %v913 = vunpack.c.l.b16 %v909
          %v914 = vpack.c.b16 %v913, %v912
          %915 = vrot.lane.b32.xlu0 %v625, 109
          %v916 = vpop.permute.xlu0 %915
          %917 = vrot.lane.b32.xlu0 %v626, 109
          %v918 = vpop.permute.xlu0 %917
          %919 = vrot.lane.b32.xlu0 %v627, 109
          %v920 = vpop.permute.xlu0 %919
          %vm921 = vcmask 891904
          %v922 = vsel %vm921, %v916, %v918
          %v923 = vsel %vm921, %v918, %v920
          %v928 = vsel %vm335, %v914, 0
          %930 = vmatpush.bf16.msra.mxu0 0
          %931 = vmatpush.bf16.msra.mxu0 0
          %932 = vmatpush.bf16.msra.mxu0 0
          %933 = vmatpush.bf16.msra.mxu0 0
          %934 = vmatpush.bf16.msra.mxu0 0
          %935 = vmatpush.bf16.msra.mxu0 0
          %936 = vmatpush.bf16.msra.mxu0 0
          %937 = vmatpush.bf16.msra.mxu0 %v922
          %938 = vmatmul.bf16.gmra.mxu0 %v928
          %v939 = vpop.f32.mrf.mxu0
          %v940 = vadd.f32 0.0, %v939
          %v941 = vpop.f32.mrf.mxu0
          %v942 = vadd.f32 0.0, %v941
          %943 = vdwg.mxu0
          %944 = vmatpush.bf16.msra.mxu0 0
          %945 = vmatpush.bf16.msra.mxu0 0
          %946 = vmatpush.bf16.msra.mxu0 0
          %947 = vmatpush.bf16.msra.mxu0 0
          %948 = vmatpush.bf16.msra.mxu0 0
          %949 = vmatpush.bf16.msra.mxu0 0
          %950 = vmatpush.bf16.msra.mxu0 0
          %951 = vmatpush.bf16.msra.mxu0 %v923
          %952 = vmatmul.bf16.gmra.mxu0 %v928
          %v953 = vpop.f32.mrf.mxu0
          %v954 = vadd.f32 0.0, %v953
          %v955 = vpop.f32.mrf.mxu0
          %v956 = vadd.f32 0.0, %v955
          %957 = vdwg.mxu0
          %958 = vmatpush.bf16.msra.mxu0 0
          %959 = vmatpush.bf16.msra.mxu0 0
          %960 = vmatpush.bf16.msra.mxu0 0
          %961 = vmatpush.bf16.msra.mxu0 0
          %962 = vmatpush.bf16.msra.mxu0 0
          %963 = vmatpush.bf16.msra.mxu0 0
          %964 = vmatpush.bf16.msra.mxu0 0
          %965 = vmatpush.bf16.msra.mxu0 %v920
          %966 = vmatmul.bf16.gmra.mxu0 %v928
          %v967 = vpop.f32.mrf.mxu0
          %v968 = vadd.f32 0.0, %v967
          %v969 = vpop.f32.mrf.mxu0
          %v970 = vadd.f32 0.0, %v969
          %971 = vdwg.mxu0
          %v972 = vadd.f32 %v898, %v940
          %v973 = vadd.f32 %v899, %v954
          %v974 = vadd.f32 %v900, %v968
          %v975 = vadd.f32 %v901, %v942
          %v976 = vadd.f32 %v902, %v956
          %v977 = vadd.f32 %v903, %v970
          %s978 = smul.u32 %s282, 16
          %s979 = scalar_lea.vmem %s2, %s978
          %v980 = vld [vmem:[%s979] sm:$0xff]
          %v981 = vld [vmem:[%s979 + $0x8] sm:$0xff]
          %983 = vset.pattern.permute.xlu0 0
          %984 = vperm.xlu0 %983, %v980
          %v985 = vpop.permute.xlu0 %984
          %988 = vset.pattern.permute.xlu0 0
          %989 = vperm.xlu0 %988, %v981
          %v990 = vpop.permute.xlu0 %989
          %v992 = vadd.f32 %v972, %v985
          %v993 = vadd.f32 %v973, %v985
          %v994 = vadd.f32 %v974, %v985
          %v995 = vadd.f32 %v975, %v990
          %v996 = vadd.f32 %v976, %v990
          %v997 = vadd.f32 %v977, %v990
          %v998 = vmax.f32 %v992, 0.0
          %v999 = vmax.f32 %v993, 0.0
          %v1000 = vmax.f32 %v994, 0.0
          %v1001 = vmax.f32 %v995, 0.0
          %v1002 = vmax.f32 %v996, 0.0
          %v1003 = vmax.f32 %v997, 0.0
          %v1005 = vperm.slane %v253, 0
          %v1006 = vperm.slane %v253, 1
          %v1007 = vperm.slane %v253, 2
          %v1011 = vmul.f32 %v998, %v1005
          %v1012 = vmul.f32 %v999, %v1006
          %v1013 = vmul.f32 %v1000, %v1007
          %v1014 = vmul.f32 %v1001, %v1005
          %v1015 = vmul.f32 %v1002, %v1006
          %v1016 = vmul.f32 %v1003, %v1007
          %v1017 = vpack.c.bf16 %v1012, %v1011
          %v1018 = vpack.c.bf16 %v1013, %v1013
          %v1019 = vpack.c.bf16 %v1015, %v1014
          %v1020 = vpack.c.bf16 %v1016, %v1016
          %1021 = vst [vmem:[#allocation2 + $0x4] sm:$0xff] %v1017
          %1022 = vst.msk [vmem:[#allocation2 + $0xc] sm:$0xf] %vm272, %v1018
          %1023 = vst [vmem:[#allocation2 + $0x18] sm:$0xff] %v1019
          %1024 = vst.msk [vmem:[#allocation2 + $0x20] sm:$0xf] %vm272, %v1020
          %s1025 = sadd.s32 %s282, 1
          %v1026 = vld [vmem:[#allocation2] sm:$0xff]
          %v1027 = vld [vmem:[#allocation2 + $0x8] sm:$0xff]
          %v1028 = vld [vmem:[#allocation2 + $0x14] sm:$0xff]
          %v1029 = vld [vmem:[#allocation2 + $0x1c] sm:$0xff]
          %s1030 = smul.u32 %s1025, 9
          %s1031 = smul.u32 %s1030, 2
          %s1032 = smul.addr %s1031, 4
          %s1033 = scalar_lea.vmem %s1, %s1032
          %v1034 = vld [vmem:[%s1033] sm:$0xf]
          %v1035 = vld [vmem:[%s1033 + $0x4] sm:$0xf]
          %s1036 = sadd.s32 %s1030, 1
          %s1037 = smul.u32 %s1036, 2
          %s1038 = smul.addr %s1037, 4
          %s1039 = scalar_lea.vmem %s1, %s1038
          %v1040 = vld [vmem:[%s1039] sm:$0xf]
          %v1041 = vld [vmem:[%s1039 + $0x4] sm:$0xf]
          %v1044 = vunpack.c.l.b16 %v1040
          %v1045 = vunpack.c.l.b16 %v1041
          %v1046 = vpack.c.b16 %v1045, %v1044
          %v1051 = vunpack.c.l.b16 %v1026
          %v1052 = vunpack.c.h.b16 %v1026
          %v1053 = vunpack.c.l.b16 %v1027
          %v1054 = vunpack.c.h.b16 %v1027
          %v1055 = vunpack.c.l.b16 %v1028
          %v1056 = vunpack.c.h.b16 %v1028
          %v1057 = vunpack.c.l.b16 %v1029
          %v1058 = vunpack.c.h.b16 %v1029
          %v1059 = vpack.c.b16 %v1055, %v1051
          %v1060 = vpack.c.b16 %v1056, %v1052
          %v1061 = vpack.c.b16 %v1057, %v1053
          %v1062 = vpack.c.b16 %v1058, %v1054
          %1063 = vrot.lane.b32.xlu0 %v1059, 18
          %v1064 = vpop.permute.xlu0 %1063
          %1065 = vrot.lane.b32.xlu0 %v1060, 18
          %v1066 = vpop.permute.xlu0 %1065
          %1067 = vrot.lane.b32.xlu0 %v1061, 18
          %v1068 = vpop.permute.xlu0 %1067
          %1069 = vrot.lane.b32.xlu0 %v1062, 18
          %v1070 = vpop.permute.xlu0 %1069
          %v1071 = vsel %vm328, %v1064, %v1066
          %v1072 = vsel %vm328, %v1066, %v1068
          %v1073 = vsel %vm328, %v1068, %v1070
          %v1078 = vsel %vm335, %v1046, 0
          %1080 = vmatpush.bf16.msra.mxu0 0
          %1081 = vmatpush.bf16.msra.mxu0 0
          %1082 = vmatpush.bf16.msra.mxu0 0
          %1083 = vmatpush.bf16.msra.mxu0 0
          %1084 = vmatpush.bf16.msra.mxu0 0
          %1085 = vmatpush.bf16.msra.mxu0 0
          %1086 = vmatpush.bf16.msra.mxu0 0
          %1087 = vmatpush.bf16.msra.mxu0 %v1071
          %1088 = vmatmul.bf16.gmra.mxu0 %v1078
          %v1089 = vpop.f32.mrf.mxu0
          %v1090 = vadd.f32 0.0, %v1089
          %v1091 = vpop.f32.mrf.mxu0
          %v1092 = vadd.f32 0.0, %v1091
          %1093 = vdwg.mxu0
          %1094 = vmatpush.bf16.msra.mxu0 0
          %1095 = vmatpush.bf16.msra.mxu0 0
          %1096 = vmatpush.bf16.msra.mxu0 0
          %1097 = vmatpush.bf16.msra.mxu0 0
          %1098 = vmatpush.bf16.msra.mxu0 0
          %1099 = vmatpush.bf16.msra.mxu0 0
          %1100 = vmatpush.bf16.msra.mxu0 0
          %1101 = vmatpush.bf16.msra.mxu0 %v1072
          %1102 = vmatmul.bf16.gmra.mxu0 %v1078
          %v1103 = vpop.f32.mrf.mxu0
          %v1104 = vadd.f32 0.0, %v1103
          %v1105 = vpop.f32.mrf.mxu0
          %v1106 = vadd.f32 0.0, %v1105
          %1107 = vdwg.mxu0
          %1108 = vmatpush.bf16.msra.mxu0 0
          %1109 = vmatpush.bf16.msra.mxu0 0
          %1110 = vmatpush.bf16.msra.mxu0 0
          %1111 = vmatpush.bf16.msra.mxu0 0
          %1112 = vmatpush.bf16.msra.mxu0 0
          %1113 = vmatpush.bf16.msra.mxu0 0
          %1114 = vmatpush.bf16.msra.mxu0 0
          %1115 = vmatpush.bf16.msra.mxu0 %v1073
          %1116 = vmatmul.bf16.gmra.mxu0 %v1078
          %v1117 = vpop.f32.mrf.mxu0
          %v1118 = vadd.f32 0.0, %v1117
          %v1119 = vpop.f32.mrf.mxu0
          %v1120 = vadd.f32 0.0, %v1119
          %1121 = vdwg.mxu0
          %v1124 = vunpack.c.l.b16 %v1034
          %v1125 = vunpack.c.l.b16 %v1035
          %v1126 = vpack.c.b16 %v1125, %v1124
          %1127 = vrot.lane.b32.xlu0 %v1059, 19
          %v1128 = vpop.permute.xlu0 %1127
          %1129 = vrot.lane.b32.xlu0 %v1060, 19
          %v1130 = vpop.permute.xlu0 %1129
          %1131 = vrot.lane.b32.xlu0 %v1061, 19
          %v1132 = vpop.permute.xlu0 %1131
          %1133 = vrot.lane.b32.xlu0 %v1062, 19
          %v1134 = vpop.permute.xlu0 %1133
          %v1135 = vsel %vm394, %v1128, %v1130
          %v1136 = vsel %vm394, %v1130, %v1132
          %v1137 = vsel %vm394, %v1132, %v1134
          %v1142 = vsel %vm335, %v1126, 0
          %1144 = vmatpush.bf16.msra.mxu0 0
          %1145 = vmatpush.bf16.msra.mxu0 0
          %1146 = vmatpush.bf16.msra.mxu0 0
          %1147 = vmatpush.bf16.msra.mxu0 0
          %1148 = vmatpush.bf16.msra.mxu0 0
          %1149 = vmatpush.bf16.msra.mxu0 0
          %1150 = vmatpush.bf16.msra.mxu0 0
          %1151 = vmatpush.bf16.msra.mxu0 %v1135
          %1152 = vmatmul.bf16.gmra.mxu0 %v1142
          %v1153 = vpop.f32.mrf.mxu0
          %v1154 = vadd.f32 %v1090, %v1153
          %v1155 = vpop.f32.mrf.mxu0
          %v1156 = vadd.f32 %v1092, %v1155
          %1157 = vdwg.mxu0
          %1158 = vmatpush.bf16.msra.mxu0 0
          %1159 = vmatpush.bf16.msra.mxu0 0
          %1160 = vmatpush.bf16.msra.mxu0 0
          %1161 = vmatpush.bf16.msra.mxu0 0
          %1162 = vmatpush.bf16.msra.mxu0 0
          %1163 = vmatpush.bf16.msra.mxu0 0
          %1164 = vmatpush.bf16.msra.mxu0 0
          %1165 = vmatpush.bf16.msra.mxu0 %v1136
          %1166 = vmatmul.bf16.gmra.mxu0 %v1142
          %v1167 = vpop.f32.mrf.mxu0
          %v1168 = vadd.f32 %v1104, %v1167
          %v1169 = vpop.f32.mrf.mxu0
          %v1170 = vadd.f32 %v1106, %v1169
          %1171 = vdwg.mxu0
          %1172 = vmatpush.bf16.msra.mxu0 0
          %1173 = vmatpush.bf16.msra.mxu0 0
          %1174 = vmatpush.bf16.msra.mxu0 0
          %1175 = vmatpush.bf16.msra.mxu0 0
          %1176 = vmatpush.bf16.msra.mxu0 0
          %1177 = vmatpush.bf16.msra.mxu0 0
          %1178 = vmatpush.bf16.msra.mxu0 0
          %1179 = vmatpush.bf16.msra.mxu0 %v1137
          %1180 = vmatmul.bf16.gmra.mxu0 %v1142
          %v1181 = vpop.f32.mrf.mxu0
          %v1182 = vadd.f32 %v1118, %v1181
          %v1183 = vpop.f32.mrf.mxu0
          %v1184 = vadd.f32 %v1120, %v1183
          %1185 = vdwg.mxu0
          %s1186 = sadd.s32 %s1030, 2
          %s1187 = smul.u32 %s1186, 2
          %s1188 = smul.addr %s1187, 4
          %s1189 = scalar_lea.vmem %s1, %s1188
          %v1190 = vld [vmem:[%s1189] sm:$0xf]
          %v1191 = vld [vmem:[%s1189 + $0x4] sm:$0xf]
          %v1194 = vunpack.c.l.b16 %v1190
          %v1195 = vunpack.c.l.b16 %v1191
          %v1196 = vpack.c.b16 %v1195, %v1194
          %1197 = vrot.lane.b32.xlu0 %v1059, 17
          %v1198 = vpop.permute.xlu0 %1197
          %1199 = vrot.lane.b32.xlu0 %v1060, 17
          %v1200 = vpop.permute.xlu0 %1199
          %1201 = vrot.lane.b32.xlu0 %v1061, 17
          %v1202 = vpop.permute.xlu0 %1201
          %1203 = vrot.lane.b32.xlu0 %v1062, 17
          %v1204 = vpop.permute.xlu0 %1203
          %v1205 = vsel %vm465, %v1198, %v1200
          %v1206 = vsel %vm465, %v1200, %v1202
          %v1207 = vsel %vm465, %v1202, %v1204
          %v1212 = vsel %vm335, %v1196, 0
          %1214 = vmatpush.bf16.msra.mxu0 0
          %1215 = vmatpush.bf16.msra.mxu0 0
          %1216 = vmatpush.bf16.msra.mxu0 0
          %1217 = vmatpush.bf16.msra.mxu0 0
          %1218 = vmatpush.bf16.msra.mxu0 0
          %1219 = vmatpush.bf16.msra.mxu0 0
          %1220 = vmatpush.bf16.msra.mxu0 0
          %1221 = vmatpush.bf16.msra.mxu0 %v1205
          %1222 = vmatmul.bf16.gmra.mxu0 %v1212
          %v1223 = vpop.f32.mrf.mxu0
          %v1224 = vadd.f32 0.0, %v1223
          %v1225 = vpop.f32.mrf.mxu0
          %v1226 = vadd.f32 0.0, %v1225
          %1227 = vdwg.mxu0
          %1228 = vmatpush.bf16.msra.mxu0 0
          %1229 = vmatpush.bf16.msra.mxu0 0
          %1230 = vmatpush.bf16.msra.mxu0 0
          %1231 = vmatpush.bf16.msra.mxu0 0
          %1232 = vmatpush.bf16.msra.mxu0 0
          %1233 = vmatpush.bf16.msra.mxu0 0
          %1234 = vmatpush.bf16.msra.mxu0 0
          %1235 = vmatpush.bf16.msra.mxu0 %v1206
          %1236 = vmatmul.bf16.gmra.mxu0 %v1212
          %v1237 = vpop.f32.mrf.mxu0
          %v1238 = vadd.f32 0.0, %v1237
          %v1239 = vpop.f32.mrf.mxu0
          %v1240 = vadd.f32 0.0, %v1239
          %1241 = vdwg.mxu0
          %1242 = vmatpush.bf16.msra.mxu0 0
          %1243 = vmatpush.bf16.msra.mxu0 0
          %1244 = vmatpush.bf16.msra.mxu0 0
          %1245 = vmatpush.bf16.msra.mxu0 0
          %1246 = vmatpush.bf16.msra.mxu0 0
          %1247 = vmatpush.bf16.msra.mxu0 0
          %1248 = vmatpush.bf16.msra.mxu0 0
          %1249 = vmatpush.bf16.msra.mxu0 %v1207
          %1250 = vmatmul.bf16.gmra.mxu0 %v1212
          %v1251 = vpop.f32.mrf.mxu0
          %v1252 = vadd.f32 0.0, %v1251
          %v1253 = vpop.f32.mrf.mxu0
          %v1254 = vadd.f32 0.0, %v1253
          %1255 = vdwg.mxu0
          %v1256 = vadd.f32 %v1154, %v1224
          %v1257 = vadd.f32 %v1168, %v1238
          %v1258 = vadd.f32 %v1182, %v1252
          %v1259 = vadd.f32 %v1156, %v1226
          %v1260 = vadd.f32 %v1170, %v1240
          %v1261 = vadd.f32 %v1184, %v1254
          %s1262 = sadd.s32 %s1030, 3
          %s1263 = smul.u32 %s1262, 2
          %s1264 = smul.addr %s1263, 4
          %s1265 = scalar_lea.vmem %s1, %s1264
          %v1266 = vld [vmem:[%s1265] sm:$0xf]
          %v1267 = vld [vmem:[%s1265 + $0x4] sm:$0xf]
          %v1270 = vunpack.c.l.b16 %v1266
          %v1271 = vunpack.c.l.b16 %v1267
          %v1272 = vpack.c.b16 %v1271, %v1270
          %1273 = vrot.lane.b32.xlu0 %v1059, 1
          %v1274 = vpop.permute.xlu0 %1273
          %1275 = vrot.lane.b32.xlu0 %v1060, 1
          %v1276 = vpop.permute.xlu0 %1275
          %1277 = vrot.lane.b32.xlu0 %v1061, 1
          %v1278 = vpop.permute.xlu0 %1277
          %1279 = vrot.lane.b32.xlu0 %v1062, 1
          %v1280 = vpop.permute.xlu0 %1279
          %v1281 = vsel %vm542, %v1274, %v1276
          %v1282 = vsel %vm542, %v1276, %v1278
          %v1283 = vsel %vm542, %v1278, %v1280
          %v1288 = vsel %vm335, %v1272, 0
          %1290 = vmatpush.bf16.msra.mxu0 0
          %1291 = vmatpush.bf16.msra.mxu0 0
          %1292 = vmatpush.bf16.msra.mxu0 0
          %1293 = vmatpush.bf16.msra.mxu0 0
          %1294 = vmatpush.bf16.msra.mxu0 0
          %1295 = vmatpush.bf16.msra.mxu0 0
          %1296 = vmatpush.bf16.msra.mxu0 0
          %1297 = vmatpush.bf16.msra.mxu0 %v1281
          %1298 = vmatmul.bf16.gmra.mxu0 %v1288
          %v1299 = vpop.f32.mrf.mxu0
          %v1300 = vadd.f32 0.0, %v1299
          %v1301 = vpop.f32.mrf.mxu0
          %v1302 = vadd.f32 0.0, %v1301
          %1303 = vdwg.mxu0
          %1304 = vmatpush.bf16.msra.mxu0 0
          %1305 = vmatpush.bf16.msra.mxu0 0
          %1306 = vmatpush.bf16.msra.mxu0 0
          %1307 = vmatpush.bf16.msra.mxu0 0
          %1308 = vmatpush.bf16.msra.mxu0 0
          %1309 = vmatpush.bf16.msra.mxu0 0
          %1310 = vmatpush.bf16.msra.mxu0 0
          %1311 = vmatpush.bf16.msra.mxu0 %v1282
          %1312 = vmatmul.bf16.gmra.mxu0 %v1288
          %v1313 = vpop.f32.mrf.mxu0
          %v1314 = vadd.f32 0.0, %v1313
          %v1315 = vpop.f32.mrf.mxu0
          %v1316 = vadd.f32 0.0, %v1315
          %1317 = vdwg.mxu0
          %1318 = vmatpush.bf16.msra.mxu0 0
          %1319 = vmatpush.bf16.msra.mxu0 0
          %1320 = vmatpush.bf16.msra.mxu0 0
          %1321 = vmatpush.bf16.msra.mxu0 0
          %1322 = vmatpush.bf16.msra.mxu0 0
          %1323 = vmatpush.bf16.msra.mxu0 0
          %1324 = vmatpush.bf16.msra.mxu0 0
          %1325 = vmatpush.bf16.msra.mxu0 %v1283
          %1326 = vmatmul.bf16.gmra.mxu0 %v1288
          %v1327 = vpop.f32.mrf.mxu0
          %v1328 = vadd.f32 0.0, %v1327
          %v1329 = vpop.f32.mrf.mxu0
          %v1330 = vadd.f32 0.0, %v1329
          %1331 = vdwg.mxu0
          %v1332 = vadd.f32 %v1256, %v1300
          %v1333 = vadd.f32 %v1257, %v1314
          %v1334 = vadd.f32 %v1258, %v1328
          %v1335 = vadd.f32 %v1259, %v1302
          %v1336 = vadd.f32 %v1260, %v1316
          %v1337 = vadd.f32 %v1261, %v1330
          %v1338 = vld [vmem:[#allocation2 + $0x4] sm:$0xff]
          %v1339 = vld [vmem:[#allocation2 + $0xc] sm:$0xf]
          %v1340 = vld [vmem:[#allocation2 + $0x18] sm:$0xff]
          %v1341 = vld [vmem:[#allocation2 + $0x20] sm:$0xf]
          %s1342 = sadd.s32 %s1030, 4
          %s1343 = smul.u32 %s1342, 2
          %s1344 = smul.addr %s1343, 4
          %s1345 = scalar_lea.vmem %s1, %s1344
          %v1346 = vld [vmem:[%s1345] sm:$0xf]
          %v1347 = vld [vmem:[%s1345 + $0x4] sm:$0xf]
          %v1350 = vunpack.c.l.b16 %v1346
          %v1351 = vunpack.c.l.b16 %v1347
          %v1352 = vpack.c.b16 %v1351, %v1350
          %v1357 = vunpack.c.l.b16 %v1338
          %v1358 = vunpack.c.h.b16 %v1338
          %v1359 = vunpack.c.l.b16 %v1339
          %v1360 = vunpack.c.l.b16 %v1340
          %v1361 = vunpack.c.h.b16 %v1340
          %v1362 = vunpack.c.l.b16 %v1341
          %v1363 = vpack.c.b16 %v1360, %v1357
          %v1364 = vpack.c.b16 %v1361, %v1358
          %v1365 = vpack.c.b16 %v1362, %v1359
          %v1370 = vsel %vm335, %v1352, 0
          %1372 = vmatpush.bf16.msra.mxu0 0
          %1373 = vmatpush.bf16.msra.mxu0 0
          %1374 = vmatpush.bf16.msra.mxu0 0
          %1375 = vmatpush.bf16.msra.mxu0 0
          %1376 = vmatpush.bf16.msra.mxu0 0
          %1377 = vmatpush.bf16.msra.mxu0 0
          %1378 = vmatpush.bf16.msra.mxu0 0
          %1379 = vmatpush.bf16.msra.mxu0 %v1363
          %1380 = vmatmul.bf16.gmra.mxu0 %v1370
          %v1381 = vpop.f32.mrf.mxu0
          %v1382 = vadd.f32 0.0, %v1381
          %v1383 = vpop.f32.mrf.mxu0
          %v1384 = vadd.f32 0.0, %v1383
          %1385 = vdwg.mxu0
          %1386 = vmatpush.bf16.msra.mxu0 0
          %1387 = vmatpush.bf16.msra.mxu0 0
          %1388 = vmatpush.bf16.msra.mxu0 0
          %1389 = vmatpush.bf16.msra.mxu0 0
          %1390 = vmatpush.bf16.msra.mxu0 0
          %1391 = vmatpush.bf16.msra.mxu0 0
          %1392 = vmatpush.bf16.msra.mxu0 0
          %1393 = vmatpush.bf16.msra.mxu0 %v1364
          %1394 = vmatmul.bf16.gmra.mxu0 %v1370
          %v1395 = vpop.f32.mrf.mxu0
          %v1396 = vadd.f32 0.0, %v1395
          %v1397 = vpop.f32.mrf.mxu0
          %v1398 = vadd.f32 0.0, %v1397
          %1399 = vdwg.mxu0
          %1400 = vmatpush.bf16.msra.mxu0 0
          %1401 = vmatpush.bf16.msra.mxu0 0
          %1402 = vmatpush.bf16.msra.mxu0 0
          %1403 = vmatpush.bf16.msra.mxu0 0
          %1404 = vmatpush.bf16.msra.mxu0 0
          %1405 = vmatpush.bf16.msra.mxu0 0
          %1406 = vmatpush.bf16.msra.mxu0 0
          %1407 = vmatpush.bf16.msra.mxu0 %v1365
          %1408 = vmatmul.bf16.gmra.mxu0 %v1370
          %v1409 = vpop.f32.mrf.mxu0
          %v1410 = vadd.f32 0.0, %v1409
          %v1411 = vpop.f32.mrf.mxu0
          %v1412 = vadd.f32 0.0, %v1411
          %1413 = vdwg.mxu0
          %v1414 = vadd.f32 %v1332, %v1382
          %v1415 = vadd.f32 %v1333, %v1396
          %v1416 = vadd.f32 %v1334, %v1410
          %v1417 = vadd.f32 %v1335, %v1384
          %v1418 = vadd.f32 %v1336, %v1398
          %v1419 = vadd.f32 %v1337, %v1412
          %s1420 = sadd.s32 %s1030, 5
          %s1421 = smul.u32 %s1420, 2
          %s1422 = smul.addr %s1421, 4
          %s1423 = scalar_lea.vmem %s1, %s1422
          %v1424 = vld [vmem:[%s1423] sm:$0xf]
          %v1425 = vld [vmem:[%s1423 + $0x4] sm:$0xf]
          %v1428 = vunpack.c.l.b16 %v1424
          %v1429 = vunpack.c.l.b16 %v1425
          %v1430 = vpack.c.b16 %v1429, %v1428
          %1431 = vrot.lane.b32.xlu0 %v1363, 127
          %v1432 = vpop.permute.xlu0 %1431
          %1433 = vrot.lane.b32.xlu0 %v1364, 127
          %v1434 = vpop.permute.xlu0 %1433
          %1435 = vrot.lane.b32.xlu0 %v1365, 127
          %v1436 = vpop.permute.xlu0 %1435
          %v1437 = vsel %vm699, %v1432, %v1434
          %v1438 = vsel %vm699, %v1434, %v1436
          %v1443 = vsel %vm335, %v1430, 0
          %1445 = vmatpush.bf16.msra.mxu0 0
          %1446 = vmatpush.bf16.msra.mxu0 0
          %1447 = vmatpush.bf16.msra.mxu0 0
          %1448 = vmatpush.bf16.msra.mxu0 0
          %1449 = vmatpush.bf16.msra.mxu0 0
          %1450 = vmatpush.bf16.msra.mxu0 0
          %1451 = vmatpush.bf16.msra.mxu0 0
          %1452 = vmatpush.bf16.msra.mxu0 %v1437
          %1453 = vmatmul.bf16.gmra.mxu0 %v1443
          %v1454 = vpop.f32.mrf.mxu0
          %v1455 = vadd.f32 0.0, %v1454
          %v1456 = vpop.f32.mrf.mxu0
          %v1457 = vadd.f32 0.0, %v1456
          %1458 = vdwg.mxu0
          %1459 = vmatpush.bf16.msra.mxu0 0
          %1460 = vmatpush.bf16.msra.mxu0 0
          %1461 = vmatpush.bf16.msra.mxu0 0
          %1462 = vmatpush.bf16.msra.mxu0 0
          %1463 = vmatpush.bf16.msra.mxu0 0
          %1464 = vmatpush.bf16.msra.mxu0 0
          %1465 = vmatpush.bf16.msra.mxu0 0
          %1466 = vmatpush.bf16.msra.mxu0 %v1438
          %1467 = vmatmul.bf16.gmra.mxu0 %v1443
          %v1468 = vpop.f32.mrf.mxu0
          %v1469 = vadd.f32 0.0, %v1468
          %v1470 = vpop.f32.mrf.mxu0
          %v1471 = vadd.f32 0.0, %v1470
          %1472 = vdwg.mxu0
          %1473 = vmatpush.bf16.msra.mxu0 0
          %1474 = vmatpush.bf16.msra.mxu0 0
          %1475 = vmatpush.bf16.msra.mxu0 0
          %1476 = vmatpush.bf16.msra.mxu0 0
          %1477 = vmatpush.bf16.msra.mxu0 0
          %1478 = vmatpush.bf16.msra.mxu0 0
          %1479 = vmatpush.bf16.msra.mxu0 0
          %1480 = vmatpush.bf16.msra.mxu0 %v1436
          %1481 = vmatmul.bf16.gmra.mxu0 %v1443
          %v1482 = vpop.f32.mrf.mxu0
          %v1483 = vadd.f32 0.0, %v1482
          %v1484 = vpop.f32.mrf.mxu0
          %v1485 = vadd.f32 0.0, %v1484
          %1486 = vdwg.mxu0
          %v1487 = vadd.f32 %v1414, %v1455
          %v1488 = vadd.f32 %v1415, %v1469
          %v1489 = vadd.f32 %v1416, %v1483
          %v1490 = vadd.f32 %v1417, %v1457
          %v1491 = vadd.f32 %v1418, %v1471
          %v1492 = vadd.f32 %v1419, %v1485
          %s1493 = sadd.s32 %s1030, 6
          %s1494 = smul.u32 %s1493, 2
          %s1495 = smul.addr %s1494, 4
          %s1496 = scalar_lea.vmem %s1, %s1495
          %v1497 = vld [vmem:[%s1496] sm:$0xf]
          %v1498 = vld [vmem:[%s1496 + $0x4] sm:$0xf]
          %v1501 = vunpack.c.l.b16 %v1497
          %v1502 = vunpack.c.l.b16 %v1498
          %v1503 = vpack.c.b16 %v1502, %v1501
          %1504 = vrot.lane.b32.xlu0 %v1363, 111
          %v1505 = vpop.permute.xlu0 %1504
          %1506 = vrot.lane.b32.xlu0 %v1364, 111
          %v1507 = vpop.permute.xlu0 %1506
          %1508 = vrot.lane.b32.xlu0 %v1365, 111
          %v1509 = vpop.permute.xlu0 %1508
          %v1510 = vsel %vm773, %v1505, %v1507
          %v1511 = vsel %vm773, %v1507, %v1509
          %v1516 = vsel %vm335, %v1503, 0
          %1518 = vmatpush.bf16.msra.mxu0 0
          %1519 = vmatpush.bf16.msra.mxu0 0
          %1520 = vmatpush.bf16.msra.mxu0 0
          %1521 = vmatpush.bf16.msra.mxu0 0
          %1522 = vmatpush.bf16.msra.mxu0 0
          %1523 = vmatpush.bf16.msra.mxu0 0
          %1524 = vmatpush.bf16.msra.mxu0 0
          %1525 = vmatpush.bf16.msra.mxu0 %v1510
          %1526 = vmatmul.bf16.gmra.mxu0 %v1516
          %v1527 = vpop.f32.mrf.mxu0
          %v1528 = vadd.f32 0.0, %v1527
          %v1529 = vpop.f32.mrf.mxu0
          %v1530 = vadd.f32 0.0, %v1529
          %1531 = vdwg.mxu0
          %1532 = vmatpush.bf16.msra.mxu0 0
          %1533 = vmatpush.bf16.msra.mxu0 0
          %1534 = vmatpush.bf16.msra.mxu0 0
          %1535 = vmatpush.bf16.msra.mxu0 0
          %1536 = vmatpush.bf16.msra.mxu0 0
          %1537 = vmatpush.bf16.msra.mxu0 0
          %1538 = vmatpush.bf16.msra.mxu0 0
          %1539 = vmatpush.bf16.msra.mxu0 %v1511
          %1540 = vmatmul.bf16.gmra.mxu0 %v1516
          %v1541 = vpop.f32.mrf.mxu0
          %v1542 = vadd.f32 0.0, %v1541
          %v1543 = vpop.f32.mrf.mxu0
          %v1544 = vadd.f32 0.0, %v1543
          %1545 = vdwg.mxu0
          %1546 = vmatpush.bf16.msra.mxu0 0
          %1547 = vmatpush.bf16.msra.mxu0 0
          %1548 = vmatpush.bf16.msra.mxu0 0
          %1549 = vmatpush.bf16.msra.mxu0 0
          %1550 = vmatpush.bf16.msra.mxu0 0
          %1551 = vmatpush.bf16.msra.mxu0 0
          %1552 = vmatpush.bf16.msra.mxu0 0
          %1553 = vmatpush.bf16.msra.mxu0 %v1509
          %1554 = vmatmul.bf16.gmra.mxu0 %v1516
          %v1555 = vpop.f32.mrf.mxu0
          %v1556 = vadd.f32 0.0, %v1555
          %v1557 = vpop.f32.mrf.mxu0
          %v1558 = vadd.f32 0.0, %v1557
          %1559 = vdwg.mxu0
          %v1560 = vadd.f32 %v1487, %v1528
          %v1561 = vadd.f32 %v1488, %v1542
          %v1562 = vadd.f32 %v1489, %v1556
          %v1563 = vadd.f32 %v1490, %v1530
          %v1564 = vadd.f32 %v1491, %v1544
          %v1565 = vadd.f32 %v1492, %v1558
          %s1566 = sadd.s32 %s1030, 7
          %s1567 = smul.u32 %s1566, 2
          %s1568 = smul.addr %s1567, 4
          %s1569 = scalar_lea.vmem %s1, %s1568
          %v1570 = vld [vmem:[%s1569] sm:$0xf]
          %v1571 = vld [vmem:[%s1569 + $0x4] sm:$0xf]
          %v1574 = vunpack.c.l.b16 %v1570
          %v1575 = vunpack.c.l.b16 %v1571
          %v1576 = vpack.c.b16 %v1575, %v1574
          %1577 = vrot.lane.b32.xlu0 %v1363, 110
          %v1578 = vpop.permute.xlu0 %1577
          %1579 = vrot.lane.b32.xlu0 %v1364, 110
          %v1580 = vpop.permute.xlu0 %1579
          %1581 = vrot.lane.b32.xlu0 %v1365, 110
          %v1582 = vpop.permute.xlu0 %1581
          %v1583 = vsel %vm847, %v1578, %v1580
          %v1584 = vsel %vm847, %v1580, %v1582
          %v1589 = vsel %vm335, %v1576, 0
          %1591 = vmatpush.bf16.msra.mxu0 0
          %1592 = vmatpush.bf16.msra.mxu0 0
          %1593 = vmatpush.bf16.msra.mxu0 0
          %1594 = vmatpush.bf16.msra.mxu0 0
          %1595 = vmatpush.bf16.msra.mxu0 0
          %1596 = vmatpush.bf16.msra.mxu0 0
          %1597 = vmatpush.bf16.msra.mxu0 0
          %1598 = vmatpush.bf16.msra.mxu0 %v1583
          %1599 = vmatmul.bf16.gmra.mxu0 %v1589
          %v1600 = vpop.f32.mrf.mxu0
          %v1601 = vadd.f32 0.0, %v1600
          %v1602 = vpop.f32.mrf.mxu0
          %v1603 = vadd.f32 0.0, %v1602
          %1604 = vdwg.mxu0
          %1605 = vmatpush.bf16.msra.mxu0 0
          %1606 = vmatpush.bf16.msra.mxu0 0
          %1607 = vmatpush.bf16.msra.mxu0 0
          %1608 = vmatpush.bf16.msra.mxu0 0
          %1609 = vmatpush.bf16.msra.mxu0 0
          %1610 = vmatpush.bf16.msra.mxu0 0
          %1611 = vmatpush.bf16.msra.mxu0 0
          %1612 = vmatpush.bf16.msra.mxu0 %v1584
          %1613 = vmatmul.bf16.gmra.mxu0 %v1589
          %v1614 = vpop.f32.mrf.mxu0
          %v1615 = vadd.f32 0.0, %v1614
          %v1616 = vpop.f32.mrf.mxu0
          %v1617 = vadd.f32 0.0, %v1616
          %1618 = vdwg.mxu0
          %1619 = vmatpush.bf16.msra.mxu0 0
          %1620 = vmatpush.bf16.msra.mxu0 0
          %1621 = vmatpush.bf16.msra.mxu0 0
          %1622 = vmatpush.bf16.msra.mxu0 0
          %1623 = vmatpush.bf16.msra.mxu0 0
          %1624 = vmatpush.bf16.msra.mxu0 0
          %1625 = vmatpush.bf16.msra.mxu0 0
          %1626 = vmatpush.bf16.msra.mxu0 %v1582
          %1627 = vmatmul.bf16.gmra.mxu0 %v1589
          %v1628 = vpop.f32.mrf.mxu0
          %v1629 = vadd.f32 0.0, %v1628
          %v1630 = vpop.f32.mrf.mxu0
          %v1631 = vadd.f32 0.0, %v1630
          %1632 = vdwg.mxu0
          %v1633 = vadd.f32 %v1560, %v1601
          %v1634 = vadd.f32 %v1561, %v1615
          %v1635 = vadd.f32 %v1562, %v1629
          %v1636 = vadd.f32 %v1563, %v1603
          %v1637 = vadd.f32 %v1564, %v1617
          %v1638 = vadd.f32 %v1565, %v1631
          %s1639 = sadd.s32 %s1030, 8
          %s1640 = smul.u32 %s1639, 2
          %s1641 = smul.addr %s1640, 4
          %s1642 = scalar_lea.vmem %s1, %s1641
          %v1643 = vld [vmem:[%s1642] sm:$0xf]
          %v1644 = vld [vmem:[%s1642 + $0x4] sm:$0xf]
          %v1647 = vunpack.c.l.b16 %v1643
          %v1648 = vunpack.c.l.b16 %v1644
          %v1649 = vpack.c.b16 %v1648, %v1647
          %1650 = vrot.lane.b32.xlu0 %v1363, 109
          %v1651 = vpop.permute.xlu0 %1650
          %1652 = vrot.lane.b32.xlu0 %v1364, 109
          %v1653 = vpop.permute.xlu0 %1652
          %1654 = vrot.lane.b32.xlu0 %v1365, 109
          %v1655 = vpop.permute.xlu0 %1654
          %v1656 = vsel %vm921, %v1651, %v1653
          %v1657 = vsel %vm921, %v1653, %v1655
          %v1662 = vsel %vm335, %v1649, 0
          %1664 = vmatpush.bf16.msra.mxu0 0
          %1665 = vmatpush.bf16.msra.mxu0 0
          %1666 = vmatpush.bf16.msra.mxu0 0
          %1667 = vmatpush.bf16.msra.mxu0 0
          %1668 = vmatpush.bf16.msra.mxu0 0
          %1669 = vmatpush.bf16.msra.mxu0 0
          %1670 = vmatpush.bf16.msra.mxu0 0
          %1671 = vmatpush.bf16.msra.mxu0 %v1656
          %1672 = vmatmul.bf16.gmra.mxu0 %v1662
          %v1673 = vpop.f32.mrf.mxu0
          %v1674 = vadd.f32 0.0, %v1673
          %v1675 = vpop.f32.mrf.mxu0
          %v1676 = vadd.f32 0.0, %v1675
          %1677 = vdwg.mxu0
          %1678 = vmatpush.bf16.msra.mxu0 0
          %1679 = vmatpush.bf16.msra.mxu0 0
          %1680 = vmatpush.bf16.msra.mxu0 0
          %1681 = vmatpush.bf16.msra.mxu0 0
          %1682 = vmatpush.bf16.msra.mxu0 0
          %1683 = vmatpush.bf16.msra.mxu0 0
          %1684 = vmatpush.bf16.msra.mxu0 0
          %1685 = vmatpush.bf16.msra.mxu0 %v1657
          %1686 = vmatmul.bf16.gmra.mxu0 %v1662
          %v1687 = vpop.f32.mrf.mxu0
          %v1688 = vadd.f32 0.0, %v1687
          %v1689 = vpop.f32.mrf.mxu0
          %v1690 = vadd.f32 0.0, %v1689
          %1691 = vdwg.mxu0
          %1692 = vmatpush.bf16.msra.mxu0 0
          %1693 = vmatpush.bf16.msra.mxu0 0
          %1694 = vmatpush.bf16.msra.mxu0 0
          %1695 = vmatpush.bf16.msra.mxu0 0
          %1696 = vmatpush.bf16.msra.mxu0 0
          %1697 = vmatpush.bf16.msra.mxu0 0
          %1698 = vmatpush.bf16.msra.mxu0 0
          %1699 = vmatpush.bf16.msra.mxu0 %v1655
          %1700 = vmatmul.bf16.gmra.mxu0 %v1662
          %v1701 = vpop.f32.mrf.mxu0
          %v1702 = vadd.f32 0.0, %v1701
          %v1703 = vpop.f32.mrf.mxu0
          %v1704 = vadd.f32 0.0, %v1703
          %1705 = vdwg.mxu0
          %v1706 = vadd.f32 %v1633, %v1674
          %v1707 = vadd.f32 %v1634, %v1688
          %v1708 = vadd.f32 %v1635, %v1702
          %v1709 = vadd.f32 %v1636, %v1676
          %v1710 = vadd.f32 %v1637, %v1690
          %v1711 = vadd.f32 %v1638, %v1704
          %s1712 = smul.u32 %s1025, 16
          %s1713 = scalar_lea.vmem %s2, %s1712
          %v1714 = vld [vmem:[%s1713] sm:$0xff]
          %v1715 = vld [vmem:[%s1713 + $0x8] sm:$0xff]
          %1717 = vset.pattern.permute.xlu0 0
          %1718 = vperm.xlu0 %1717, %v1714
          %v1719 = vpop.permute.xlu0 %1718
          %1722 = vset.pattern.permute.xlu0 0
          %1723 = vperm.xlu0 %1722, %v1715
          %v1724 = vpop.permute.xlu0 %1723
          %v1726 = vadd.f32 %v1706, %v1719
          %v1727 = vadd.f32 %v1707, %v1719
          %v1728 = vadd.f32 %v1708, %v1719
          %v1729 = vadd.f32 %v1709, %v1724
          %v1730 = vadd.f32 %v1710, %v1724
          %v1731 = vadd.f32 %v1711, %v1724
          %v1732 = vld [vmem:[#allocation3] sm:$0xff]
          %v1733 = vld [vmem:[#allocation3 + $0x8] sm:$0xff]
          %v1734 = vld [vmem:[#allocation3 + $0x10] sm:$0xff]
          %v1735 = vld [vmem:[#allocation3 + $0x18] sm:$0xff]
          %v1736 = vld [vmem:[#allocation3 + $0x20] sm:$0xff]
          %v1737 = vld [vmem:[#allocation3 + $0x28] sm:$0xff]
          %v1738 = vmul.f32 %v1726, %v1005
          %v1739 = vmul.f32 %v1727, %v1006
          %v1740 = vmul.f32 %v1728, %v1007
          %v1741 = vmul.f32 %v1729, %v1005
          %v1742 = vmul.f32 %v1730, %v1006
          %v1743 = vmul.f32 %v1731, %v1007
          %v1744 = vadd.f32 %v1732, %v1738
          %v1745 = vadd.f32 %v1733, %v1739
          %v1746 = vadd.f32 %v1734, %v1740
          %v1747 = vadd.f32 %v1735, %v1741
          %v1748 = vadd.f32 %v1736, %v1742
          %v1749 = vadd.f32 %v1737, %v1743
          %1750 = vst [vmem:[#allocation3] sm:$0xff] %v1744
          %1751 = vst [vmem:[#allocation3 + $0x8] sm:$0xff] %v1745
          %1752 = vst.msk [vmem:[#allocation3 + $0x10] sm:$0xff] %vm262, %v1746
          %1753 = vst [vmem:[#allocation3 + $0x18] sm:$0xff] %v1747
          %1754 = vst [vmem:[#allocation3 + $0x20] sm:$0xff] %v1748
          %1755 = vst.msk [vmem:[#allocation3 + $0x28] sm:$0xff] %vm262, %v1749
          %v1756 = vpack.c.bf16 %v1745, %v1744
          %v1757 = vpack.c.bf16 %v1746, %v1746
          %v1758 = vpack.c.bf16 %v1748, %v1747
          %v1759 = vpack.c.bf16 %v1749, %v1749
          %1760 = vst [vmem:[#allocation2 + $0x4] sm:$0xff] %v1756
          %1761 = vst.msk [vmem:[#allocation2 + $0xc] sm:$0xf] %vm272, %v1757
          %1762 = vst [vmem:[#allocation2 + $0x18] sm:$0xff] %v1758
          %1763 = vst.msk [vmem:[#allocation2 + $0x20] sm:$0xf] %vm272, %v1759
        $region41: #{tpu_custom_call.1} parent=35 // loop_footer
          %s281 = sadd.s32 1, %s277
        $region42: #{tpu_custom_call.1} parent=35 // loop_footer_branch
          %276 = sbr.rel target = $region38
        $region43: #{tpu_custom_call.1} parent=35 // loop_exit
          _
        %v1764 = vld [vmem:[#allocation2] sm:$0xff]
        %v1765 = vld [vmem:[#allocation2 + $0x8] sm:$0xff]
        %v1766 = vld [vmem:[#allocation2 + $0x14] sm:$0xff]
        %v1767 = vld [vmem:[#allocation2 + $0x1c] sm:$0xff]
        %s1768 = scalar_lea.vmem %s1, 288
        %v1769 = vld [vmem:[%s1768] sm:$0xf]
        %v1770 = vld [vmem:[%s1768 + $0x4] sm:$0xf]
        %s1771 = scalar_lea.vmem %s1, 296
        %v1772 = vld [vmem:[%s1771] sm:$0xf]
        %v1773 = vld [vmem:[%s1771 + $0x4] sm:$0xf]
        %v1776 = vunpack.c.l.b16 %v1772
        %v1777 = vunpack.c.l.b16 %v1773
        %v1778 = vpack.c.b16 %v1777, %v1776
        %v1783 = vunpack.c.l.b16 %v1764
        %v1784 = vunpack.c.h.b16 %v1764
        %v1785 = vunpack.c.l.b16 %v1765
        %v1786 = vunpack.c.l.b16 %v1766
        %v1787 = vunpack.c.h.b16 %v1766
        %v1788 = vunpack.c.l.b16 %v1767
        %v1789 = vpack.c.b16 %v1786, %v1783
        %v1790 = vpack.c.b16 %v1787, %v1784
        %v1791 = vpack.c.b16 %v1788, %v1785
        %1792 = vrot.lane.b32.xlu0 %v1789, 18
        %v1793 = vpop.permute.xlu0 %1792
        %1794 = vrot.lane.b32.xlu0 %v1790, 18
        %v1795 = vpop.permute.xlu0 %1794
        %1796 = vrot.lane.b32.xlu0 %v1791, 18
        %v1797 = vpop.permute.xlu0 %1796
        %vm1798 = vcmask 146432
        %v1799 = vsel %vm1798, %v1793, %v1795
        %v1800 = vsel %vm1798, %v1795, %v1797
        %vm1803 = vcmask 130048
        %v1805 = vsel %vm1803, %v1778, 0
        %1807 = vmatpush.bf16.msra.mxu0 0
        %1808 = vmatpush.bf16.msra.mxu0 0
        %1809 = vmatpush.bf16.msra.mxu0 0
        %1810 = vmatpush.bf16.msra.mxu0 0
        %1811 = vmatpush.bf16.msra.mxu0 0
        %1812 = vmatpush.bf16.msra.mxu0 0
        %1813 = vmatpush.bf16.msra.mxu0 0
        %1814 = vmatpush.bf16.msra.mxu0 %v1799
        %1815 = vmatmul.bf16.gmra.mxu0 %v1805
        %v1816 = vpop.f32.mrf.mxu0
        %v1817 = vadd.f32 0.0, %v1816
        %v1818 = vpop.f32.mrf.mxu0
        %v1819 = vadd.f32 0.0, %v1818
        %1820 = vdwg.mxu0
        %1821 = vmatpush.bf16.msra.mxu0 0
        %1822 = vmatpush.bf16.msra.mxu0 0
        %1823 = vmatpush.bf16.msra.mxu0 0
        %1824 = vmatpush.bf16.msra.mxu0 0
        %1825 = vmatpush.bf16.msra.mxu0 0
        %1826 = vmatpush.bf16.msra.mxu0 0
        %1827 = vmatpush.bf16.msra.mxu0 0
        %1828 = vmatpush.bf16.msra.mxu0 %v1800
        %1829 = vmatmul.bf16.gmra.mxu0 %v1805
        %v1830 = vpop.f32.mrf.mxu0
        %v1831 = vadd.f32 0.0, %v1830
        %v1832 = vpop.f32.mrf.mxu0
        %v1833 = vadd.f32 0.0, %v1832
        %1834 = vdwg.mxu0
        %v1837 = vunpack.c.l.b16 %v1769
        %v1838 = vunpack.c.l.b16 %v1770
        %v1839 = vpack.c.b16 %v1838, %v1837
        %1840 = vrot.lane.b32.xlu0 %v1789, 19
        %v1841 = vpop.permute.xlu0 %1840
        %1842 = vrot.lane.b32.xlu0 %v1790, 19
        %v1843 = vpop.permute.xlu0 %1842
        %1844 = vrot.lane.b32.xlu0 %v1791, 19
        %v1845 = vpop.permute.xlu0 %1844
        %vm1846 = vcmask 154624
        %v1847 = vsel %vm1846, %v1841, %v1843
        %v1848 = vsel %vm1846, %v1843, %v1845
        %v1852 = vsel %vm1803, %v1839, 0
        %1854 = vmatpush.bf16.msra.mxu0 0
        %1855 = vmatpush.bf16.msra.mxu0 0
        %1856 = vmatpush.bf16.msra.mxu0 0
        %1857 = vmatpush.bf16.msra.mxu0 0
        %1858 = vmatpush.bf16.msra.mxu0 0
        %1859 = vmatpush.bf16.msra.mxu0 0
        %1860 = vmatpush.bf16.msra.mxu0 0
        %1861 = vmatpush.bf16.msra.mxu0 %v1847
        %1862 = vmatmul.bf16.gmra.mxu0 %v1852
        %v1863 = vpop.f32.mrf.mxu0
        %v1864 = vadd.f32 %v1817, %v1863
        %v1865 = vpop.f32.mrf.mxu0
        %v1866 = vadd.f32 %v1819, %v1865
        %1867 = vdwg.mxu0
        %1868 = vmatpush.bf16.msra.mxu0 0
        %1869 = vmatpush.bf16.msra.mxu0 0
        %1870 = vmatpush.bf16.msra.mxu0 0
        %1871 = vmatpush.bf16.msra.mxu0 0
        %1872 = vmatpush.bf16.msra.mxu0 0
        %1873 = vmatpush.bf16.msra.mxu0 0
        %1874 = vmatpush.bf16.msra.mxu0 0
        %1875 = vmatpush.bf16.msra.mxu0 %v1848
        %1876 = vmatmul.bf16.gmra.mxu0 %v1852
        %v1877 = vpop.f32.mrf.mxu0
        %v1878 = vadd.f32 %v1831, %v1877
        %v1879 = vpop.f32.mrf.mxu0
        %v1880 = vadd.f32 %v1833, %v1879
        %1881 = vdwg.mxu0
        %s1882 = scalar_lea.vmem %s1, 304
        %v1883 = vld [vmem:[%s1882] sm:$0xf]
        %v1884 = vld [vmem:[%s1882 + $0x4] sm:$0xf]
        %v1887 = vunpack.c.l.b16 %v1883
        %v1888 = vunpack.c.l.b16 %v1884
        %v1889 = vpack.c.b16 %v1888, %v1887
        %1890 = vrot.lane.b32.xlu0 %v1789, 17
        %v1891 = vpop.permute.xlu0 %1890
        %1892 = vrot.lane.b32.xlu0 %v1790, 17
        %v1893 = vpop.permute.xlu0 %1892
        %1894 = vrot.lane.b32.xlu0 %v1791, 17
        %v1895 = vpop.permute.xlu0 %1894
        %vm1896 = vcmask 138240
        %v1897 = vsel %vm1896, %v1891, %v1893
        %v1898 = vsel %vm1896, %v1893, %v1895
        %v1902 = vsel %vm1803, %v1889, 0
        %1904 = vmatpush.bf16.msra.mxu0 0
        %1905 = vmatpush.bf16.msra.mxu0 0
        %1906 = vmatpush.bf16.msra.mxu0 0
        %1907 = vmatpush.bf16.msra.mxu0 0
        %1908 = vmatpush.bf16.msra.mxu0 0
        %1909 = vmatpush.bf16.msra.mxu0 0
        %1910 = vmatpush.bf16.msra.mxu0 0
        %1911 = vmatpush.bf16.msra.mxu0 %v1897
        %1912 = vmatmul.bf16.gmra.mxu0 %v1902
        %v1913 = vpop.f32.mrf.mxu0
        %v1914 = vadd.f32 0.0, %v1913
        %v1915 = vpop.f32.mrf.mxu0
        %v1916 = vadd.f32 0.0, %v1915
        %1917 = vdwg.mxu0
        %1918 = vmatpush.bf16.msra.mxu0 0
        %1919 = vmatpush.bf16.msra.mxu0 0
        %1920 = vmatpush.bf16.msra.mxu0 0
        %1921 = vmatpush.bf16.msra.mxu0 0
        %1922 = vmatpush.bf16.msra.mxu0 0
        %1923 = vmatpush.bf16.msra.mxu0 0
        %1924 = vmatpush.bf16.msra.mxu0 0
        %1925 = vmatpush.bf16.msra.mxu0 %v1898
        %1926 = vmatmul.bf16.gmra.mxu0 %v1902
        %v1927 = vpop.f32.mrf.mxu0
        %v1928 = vadd.f32 0.0, %v1927
        %v1929 = vpop.f32.mrf.mxu0
        %v1930 = vadd.f32 0.0, %v1929
        %1931 = vdwg.mxu0
        %v1932 = vadd.f32 %v1864, %v1914
        %v1933 = vadd.f32 %v1878, %v1928
        %v1934 = vadd.f32 %v1866, %v1916
        %v1935 = vadd.f32 %v1880, %v1930
        %s1936 = scalar_lea.vmem %s1, 312
        %v1937 = vld [vmem:[%s1936] sm:$0xf]
        %v1938 = vld [vmem:[%s1936 + $0x4] sm:$0xf]
        %v1941 = vunpack.c.l.b16 %v1937
        %v1942 = vunpack.c.l.b16 %v1938
        %v1943 = vpack.c.b16 %v1942, %v1941
        %1944 = vrot.lane.b32.xlu0 %v1789, 1
        %v1945 = vpop.permute.xlu0 %1944
        %1946 = vrot.lane.b32.xlu0 %v1790, 1
        %v1947 = vpop.permute.xlu0 %1946
        %1948 = vrot.lane.b32.xlu0 %v1791, 1
        %v1949 = vpop.permute.xlu0 %1948
        %vm1950 = vcmask 7168
        %v1951 = vsel %vm1950, %v1945, %v1947
        %v1952 = vsel %vm1950, %v1947, %v1949
        %v1956 = vsel %vm1803, %v1943, 0
        %1958 = vmatpush.bf16.msra.mxu0 0
        %1959 = vmatpush.bf16.msra.mxu0 0
        %1960 = vmatpush.bf16.msra.mxu0 0
        %1961 = vmatpush.bf16.msra.mxu0 0
        %1962 = vmatpush.bf16.msra.mxu0 0
        %1963 = vmatpush.bf16.msra.mxu0 0
        %1964 = vmatpush.bf16.msra.mxu0 0
        %1965 = vmatpush.bf16.msra.mxu0 %v1951
        %1966 = vmatmul.bf16.gmra.mxu0 %v1956
        %v1967 = vpop.f32.mrf.mxu0
        %v1968 = vadd.f32 0.0, %v1967
        %v1969 = vpop.f32.mrf.mxu0
        %v1970 = vadd.f32 0.0, %v1969
        %1971 = vdwg.mxu0
        %1972 = vmatpush.bf16.msra.mxu0 0
        %1973 = vmatpush.bf16.msra.mxu0 0
        %1974 = vmatpush.bf16.msra.mxu0 0
        %1975 = vmatpush.bf16.msra.mxu0 0
        %1976 = vmatpush.bf16.msra.mxu0 0
        %1977 = vmatpush.bf16.msra.mxu0 0
        %1978 = vmatpush.bf16.msra.mxu0 0
        %1979 = vmatpush.bf16.msra.mxu0 %v1952
        %1980 = vmatmul.bf16.gmra.mxu0 %v1956
        %v1981 = vpop.f32.mrf.mxu0
        %v1982 = vadd.f32 0.0, %v1981
        %v1983 = vpop.f32.mrf.mxu0
        %v1984 = vadd.f32 0.0, %v1983
        %1985 = vdwg.mxu0
        %v1986 = vadd.f32 %v1932, %v1968
        %v1987 = vadd.f32 %v1933, %v1982
        %v1988 = vadd.f32 %v1934, %v1970
        %v1989 = vadd.f32 %v1935, %v1984
        %v1990 = vld [vmem:[#allocation2 + $0x4] sm:$0xff]
        %v1991 = vld [vmem:[#allocation2 + $0x18] sm:$0xff]
        %s1992 = scalar_lea.vmem %s1, 320
        %v1993 = vld [vmem:[%s1992] sm:$0xf]
        %v1994 = vld [vmem:[%s1992 + $0x4] sm:$0xf]
        %v1997 = vunpack.c.l.b16 %v1993
        %v1998 = vunpack.c.l.b16 %v1994
        %v1999 = vpack.c.b16 %v1998, %v1997
        %v2002 = vunpack.c.l.b16 %v1990
        %v2003 = vunpack.c.h.b16 %v1990
        %v2004 = vunpack.c.l.b16 %v1991
        %v2005 = vunpack.c.h.b16 %v1991
        %v2006 = vpack.c.b16 %v2004, %v2002
        %v2007 = vpack.c.b16 %v2005, %v2003
        %v2011 = vsel %vm1803, %v1999, 0
        %2013 = vmatpush.bf16.msra.mxu0 0
        %2014 = vmatpush.bf16.msra.mxu0 0
        %2015 = vmatpush.bf16.msra.mxu0 0
        %2016 = vmatpush.bf16.msra.mxu0 0
        %2017 = vmatpush.bf16.msra.mxu0 0
        %2018 = vmatpush.bf16.msra.mxu0 0
        %2019 = vmatpush.bf16.msra.mxu0 0
        %2020 = vmatpush.bf16.msra.mxu0 %v2006
        %2021 = vmatmul.bf16.gmra.mxu0 %v2011
        %v2022 = vpop.f32.mrf.mxu0
        %v2023 = vadd.f32 0.0, %v2022
        %v2024 = vpop.f32.mrf.mxu0
        %v2025 = vadd.f32 0.0, %v2024
        %2026 = vdwg.mxu0
        %2027 = vmatpush.bf16.msra.mxu0 0
        %2028 = vmatpush.bf16.msra.mxu0 0
        %2029 = vmatpush.bf16.msra.mxu0 0
        %2030 = vmatpush.bf16.msra.mxu0 0
        %2031 = vmatpush.bf16.msra.mxu0 0
        %2032 = vmatpush.bf16.msra.mxu0 0
        %2033 = vmatpush.bf16.msra.mxu0 0
        %2034 = vmatpush.bf16.msra.mxu0 %v2007
        %2035 = vmatmul.bf16.gmra.mxu0 %v2011
        %v2036 = vpop.f32.mrf.mxu0
        %v2037 = vadd.f32 0.0, %v2036
        %v2038 = vpop.f32.mrf.mxu0
        %v2039 = vadd.f32 0.0, %v2038
        %2040 = vdwg.mxu0
        %v2041 = vadd.f32 %v1986, %v2023
        %v2042 = vadd.f32 %v1987, %v2037
        %v2043 = vadd.f32 %v1988, %v2025
        %v2044 = vadd.f32 %v1989, %v2039
        %v2045 = vld [vmem:[#allocation2 + $0xc] sm:$0xf]
        %v2046 = vld [vmem:[#allocation2 + $0x20] sm:$0xf]
        %s2047 = scalar_lea.vmem %s1, 328
        %v2048 = vld [vmem:[%s2047] sm:$0xf]
        %v2049 = vld [vmem:[%s2047 + $0x4] sm:$0xf]
        %v2052 = vunpack.c.l.b16 %v2048
        %v2053 = vunpack.c.l.b16 %v2049
        %v2054 = vpack.c.b16 %v2053, %v2052
        %v2057 = vunpack.c.l.b16 %v2045
        %v2058 = vunpack.c.l.b16 %v2046
        %v2059 = vpack.c.b16 %v2058, %v2057
        %2060 = vrot.lane.b32.xlu0 %v2006, 127
        %v2061 = vpop.permute.xlu0 %2060
        %2062 = vrot.lane.b32.xlu0 %v2007, 127
        %v2063 = vpop.permute.xlu0 %2062
        %2064 = vrot.lane.b32.xlu0 %v2059, 127
        %v2065 = vpop.permute.xlu0 %2064
        %vm2066 = vcmask 1039360
        %v2067 = vsel %vm2066, %v2061, %v2063
        %v2068 = vsel %vm2066, %v2063, %v2065
        %v2072 = vsel %vm1803, %v2054, 0
        %2074 = vmatpush.bf16.msra.mxu0 0
        %2075 = vmatpush.bf16.msra.mxu0 0
        %2076 = vmatpush.bf16.msra.mxu0 0
        %2077 = vmatpush.bf16.msra.mxu0 0
        %2078 = vmatpush.bf16.msra.mxu0 0
        %2079 = vmatpush.bf16.msra.mxu0 0
        %2080 = vmatpush.bf16.msra.mxu0 0
        %2081 = vmatpush.bf16.msra.mxu0 %v2067
        %2082 = vmatmul.bf16.gmra.mxu0 %v2072
        %v2083 = vpop.f32.mrf.mxu0
        %v2084 = vadd.f32 0.0, %v2083
        %v2085 = vpop.f32.mrf.mxu0
        %v2086 = vadd.f32 0.0, %v2085
        %2087 = vdwg.mxu0
        %2088 = vmatpush.bf16.msra.mxu0 0
        %2089 = vmatpush.bf16.msra.mxu0 0
        %2090 = vmatpush.bf16.msra.mxu0 0
        %2091 = vmatpush.bf16.msra.mxu0 0
        %2092 = vmatpush.bf16.msra.mxu0 0
        %2093 = vmatpush.bf16.msra.mxu0 0
        %2094 = vmatpush.bf16.msra.mxu0 0
        %2095 = vmatpush.bf16.msra.mxu0 %v2068
        %2096 = vmatmul.bf16.gmra.mxu0 %v2072
        %v2097 = vpop.f32.mrf.mxu0
        %v2098 = vadd.f32 0.0, %v2097
        %v2099 = vpop.f32.mrf.mxu0
        %v2100 = vadd.f32 0.0, %v2099
        %2101 = vdwg.mxu0
        %v2102 = vadd.f32 %v2041, %v2084
        %v2103 = vadd.f32 %v2042, %v2098
        %v2104 = vadd.f32 %v2043, %v2086
        %v2105 = vadd.f32 %v2044, %v2100
        %s2106 = scalar_lea.vmem %s1, 336
        %v2107 = vld [vmem:[%s2106] sm:$0xf]
        %v2108 = vld [vmem:[%s2106 + $0x4] sm:$0xf]
        %v2111 = vunpack.c.l.b16 %v2107
        %v2112 = vunpack.c.l.b16 %v2108
        %v2113 = vpack.c.b16 %v2112, %v2111
        %2114 = vrot.lane.b32.xlu0 %v2006, 111
        %v2115 = vpop.permute.xlu0 %2114
        %2116 = vrot.lane.b32.xlu0 %v2007, 111
        %v2117 = vpop.permute.xlu0 %2116
        %2118 = vrot.lane.b32.xlu0 %v2059, 111
        %v2119 = vpop.permute.xlu0 %2118
        %vm2120 = vcmask 908288
        %v2121 = vsel %vm2120, %v2115, %v2117
        %v2122 = vsel %vm2120, %v2117, %v2119
        %v2126 = vsel %vm1803, %v2113, 0
        %2128 = vmatpush.bf16.msra.mxu0 0
        %2129 = vmatpush.bf16.msra.mxu0 0
        %2130 = vmatpush.bf16.msra.mxu0 0
        %2131 = vmatpush.bf16.msra.mxu0 0
        %2132 = vmatpush.bf16.msra.mxu0 0
        %2133 = vmatpush.bf16.msra.mxu0 0
        %2134 = vmatpush.bf16.msra.mxu0 0
        %2135 = vmatpush.bf16.msra.mxu0 %v2121
        %2136 = vmatmul.bf16.gmra.mxu0 %v2126
        %v2137 = vpop.f32.mrf.mxu0
        %v2138 = vadd.f32 0.0, %v2137
        %v2139 = vpop.f32.mrf.mxu0
        %v2140 = vadd.f32 0.0, %v2139
        %2141 = vdwg.mxu0
        %2142 = vmatpush.bf16.msra.mxu0 0
        %2143 = vmatpush.bf16.msra.mxu0 0
        %2144 = vmatpush.bf16.msra.mxu0 0
        %2145 = vmatpush.bf16.msra.mxu0 0
        %2146 = vmatpush.bf16.msra.mxu0 0
        %2147 = vmatpush.bf16.msra.mxu0 0
        %2148 = vmatpush.bf16.msra.mxu0 0
        %2149 = vmatpush.bf16.msra.mxu0 %v2122
        %2150 = vmatmul.bf16.gmra.mxu0 %v2126
        %v2151 = vpop.f32.mrf.mxu0
        %v2152 = vadd.f32 0.0, %v2151
        %v2153 = vpop.f32.mrf.mxu0
        %v2154 = vadd.f32 0.0, %v2153
        %2155 = vdwg.mxu0
        %v2156 = vadd.f32 %v2102, %v2138
        %v2157 = vadd.f32 %v2103, %v2152
        %v2158 = vadd.f32 %v2104, %v2140
        %v2159 = vadd.f32 %v2105, %v2154
        %s2160 = scalar_lea.vmem %s1, 344
        %v2161 = vld [vmem:[%s2160] sm:$0xf]
        %v2162 = vld [vmem:[%s2160 + $0x4] sm:$0xf]
        %v2165 = vunpack.c.l.b16 %v2161
        %v2166 = vunpack.c.l.b16 %v2162
        %v2167 = vpack.c.b16 %v2166, %v2165
        %2168 = vrot.lane.b32.xlu0 %v2006, 110
        %v2169 = vpop.permute.xlu0 %2168
        %2170 = vrot.lane.b32.xlu0 %v2007, 110
        %v2171 = vpop.permute.xlu0 %2170
        %2172 = vrot.lane.b32.xlu0 %v2059, 110
        %v2173 = vpop.permute.xlu0 %2172
        %vm2174 = vcmask 900096
        %v2175 = vsel %vm2174, %v2169, %v2171
        %v2176 = vsel %vm2174, %v2171, %v2173
        %v2180 = vsel %vm1803, %v2167, 0
        %2182 = vmatpush.bf16.msra.mxu0 0
        %2183 = vmatpush.bf16.msra.mxu0 0
        %2184 = vmatpush.bf16.msra.mxu0 0
        %2185 = vmatpush.bf16.msra.mxu0 0
        %2186 = vmatpush.bf16.msra.mxu0 0
        %2187 = vmatpush.bf16.msra.mxu0 0
        %2188 = vmatpush.bf16.msra.mxu0 0
        %2189 = vmatpush.bf16.msra.mxu0 %v2175
        %2190 = vmatmul.bf16.gmra.mxu0 %v2180
        %v2191 = vpop.f32.mrf.mxu0
        %v2192 = vadd.f32 0.0, %v2191
        %v2193 = vpop.f32.mrf.mxu0
        %v2194 = vadd.f32 0.0, %v2193
        %2195 = vdwg.mxu0
        %2196 = vmatpush.bf16.msra.mxu0 0
        %2197 = vmatpush.bf16.msra.mxu0 0
        %2198 = vmatpush.bf16.msra.mxu0 0
        %2199 = vmatpush.bf16.msra.mxu0 0
        %2200 = vmatpush.bf16.msra.mxu0 0
        %2201 = vmatpush.bf16.msra.mxu0 0
        %2202 = vmatpush.bf16.msra.mxu0 0
        %2203 = vmatpush.bf16.msra.mxu0 %v2176
        %2204 = vmatmul.bf16.gmra.mxu0 %v2180
        %v2205 = vpop.f32.mrf.mxu0
        %v2206 = vadd.f32 0.0, %v2205
        %v2207 = vpop.f32.mrf.mxu0
        %v2208 = vadd.f32 0.0, %v2207
        %2209 = vdwg.mxu0
        %v2210 = vadd.f32 %v2156, %v2192
        %v2211 = vadd.f32 %v2157, %v2206
        %v2212 = vadd.f32 %v2158, %v2194
        %v2213 = vadd.f32 %v2159, %v2208
        %s2214 = scalar_lea.vmem %s1, 352
        %v2215 = vld [vmem:[%s2214] sm:$0xf]
        %v2216 = vld [vmem:[%s2214 + $0x4] sm:$0xf]
        %v2219 = vunpack.c.l.b16 %v2215
        %v2220 = vunpack.c.l.b16 %v2216
        %v2221 = vpack.c.b16 %v2220, %v2219
        %2222 = vrot.lane.b32.xlu0 %v2006, 109
        %v2223 = vpop.permute.xlu0 %2222
        %2224 = vrot.lane.b32.xlu0 %v2007, 109
        %v2225 = vpop.permute.xlu0 %2224
        %2226 = vrot.lane.b32.xlu0 %v2059, 109
        %v2227 = vpop.permute.xlu0 %2226
        %vm2228 = vcmask 891904
        %v2229 = vsel %vm2228, %v2223, %v2225
        %v2230 = vsel %vm2228, %v2225, %v2227
        %v2234 = vsel %vm1803, %v2221, 0
        %2236 = vmatpush.bf16.msra.mxu0 0
        %2237 = vmatpush.bf16.msra.mxu0 0
        %2238 = vmatpush.bf16.msra.mxu0 0
        %2239 = vmatpush.bf16.msra.mxu0 0
        %2240 = vmatpush.bf16.msra.mxu0 0
        %2241 = vmatpush.bf16.msra.mxu0 0
        %2242 = vmatpush.bf16.msra.mxu0 0
        %2243 = vmatpush.bf16.msra.mxu0 %v2229
        %2244 = vmatmul.bf16.gmra.mxu0 %v2234
        %v2245 = vpop.f32.mrf.mxu0
        %v2246 = vadd.f32 0.0, %v2245
        %v2247 = vpop.f32.mrf.mxu0
        %v2248 = vadd.f32 0.0, %v2247
        %2249 = vdwg.mxu0
        %2250 = vmatpush.bf16.msra.mxu0 0
        %2251 = vmatpush.bf16.msra.mxu0 0
        %2252 = vmatpush.bf16.msra.mxu0 0
        %2253 = vmatpush.bf16.msra.mxu0 0
        %2254 = vmatpush.bf16.msra.mxu0 0
        %2255 = vmatpush.bf16.msra.mxu0 0
        %2256 = vmatpush.bf16.msra.mxu0 0
        %2257 = vmatpush.bf16.msra.mxu0 %v2230
        %2258 = vmatmul.bf16.gmra.mxu0 %v2234
        %v2259 = vpop.f32.mrf.mxu0
        %v2260 = vadd.f32 0.0, %v2259
        %v2261 = vpop.f32.mrf.mxu0
        %v2262 = vadd.f32 0.0, %v2261
        %2263 = vdwg.mxu0
        %v2264 = vadd.f32 %v2210, %v2246
        %v2265 = vadd.f32 %v2211, %v2260
        %v2266 = vadd.f32 %v2212, %v2248
        %v2267 = vadd.f32 %v2213, %v2262
        %s2268 = scalar_lea.vmem %s2, 64
        %v2269 = vld [vmem:[%s2268] sm:$0xff]
        %v2270 = vld [vmem:[%s2268 + $0x8] sm:$0xff]
        %2272 = vset.pattern.permute.xlu0 0
        %2273 = vperm.xlu0 %2272, %v2269
        %v2274 = vpop.permute.xlu0 %2273
        %2277 = vset.pattern.permute.xlu0 0
        %2278 = vperm.xlu0 %2277, %v2270
        %v2279 = vpop.permute.xlu0 %2278
        %v2281 = vadd.f32 %v2264, %v2274
        %v2282 = vadd.f32 %v2265, %v2274
        %v2283 = vadd.f32 %v2266, %v2279
        %v2284 = vadd.f32 %v2267, %v2279
        %v2286 = vperm.slane %v253, 0
        %v2287 = vperm.slane %v253, 1
        %v2290 = vmul.f32 %v2281, %v2286
        %v2291 = vmul.f32 %v2282, %v2287
        %v2292 = vmul.f32 %v2283, %v2286
        %v2293 = vmul.f32 %v2284, %v2287
        %v2294 = vld [vmem:[%s236] sm:$0xff]
        %v2295 = vld [vmem:[%s236 + $0x8] sm:$0xff]
        %v2296 = vld [vmem:[%s236 + $0x18] sm:$0xff]
        %v2297 = vld [vmem:[%s236 + $0x20] sm:$0xff]
        %v2298 = vadd.f32 %v2290, %v2294
        %v2299 = vadd.f32 %v2291, %v2295
        %v2300 = vadd.f32 %v2292, %v2296
        %v2301 = vadd.f32 %v2293, %v2297
        %2306 = vrot.lane.b32.xlu0 %v2298, 38
        %v2307 = vpop.permute.xlu0 %2306
        %2308 = vrot.lane.b32.xlu0 %v2299, 38
        %v2309 = vpop.permute.xlu0 %2308
        %2310 = vrot.lane.b32.xlu0 %v2300, 38
        %v2311 = vpop.permute.xlu0 %2310
        %2312 = vrot.lane.b32.xlu0 %v2301, 38
        %v2313 = vpop.permute.xlu0 %2312
        %vm2314 = vcmask 310272
        %v2315 = vsel %vm2314, %v2307, %v2309
        %v2316 = vsel %vm2314, %v2311, %v2313
        %2321 = vst [vmem:[%s229] sm:$0xff] %v2315
        %2322 = vst.msk [vmem:[%s229 + $0x8] sm:$0xff] %vm1803, %v2309
        %2323 = vst [vmem:[%s229 + $0x10] sm:$0xff] %v2316
        %2324 = vst.msk [vmem:[%s229 + $0x18] sm:$0xff] %vm1803, %v2313
        %s2325 = sand.u32 %s140, 1
        %s2326 = scalar_lea.sflag [#allocation5], %s2325
        %s2327 = sand.u32 %s140, 1
        %s2328 = smul.addr %s2327, 32
        %s2329 = scalar_lea.vmem [#allocation4], %s2328
        // Predicated region
        $region44: #{tpu_custom_call.1} parent=35 // pred_check
          %p2330 = pneg %p150
        $region45: #{tpu_custom_call.1} parent=35 // pred_check_branch
          %2332 = sbr.rel (%p2330) target = $region47
        $region46: #{tpu_custom_call.1} parent=35 // pred_region
          %s2333 = smul.u32 %s22, 2
          %s2334 = sadd.s32 %s2333, %s23
          %2336 = vsyncadd %s2326, 0
          %s2337 = smul.addr %s2334, 4
          %s2338 = smul.addr %s2337, 8
          %s2339 = scalar_lea.hbm %s4, %s2338
          %s2340 = sshll.u32 %s2329, 4
          %s2341 = int_to_ptr.vmem [resolvable:$true] %s2340
          %s2342 = sshll.u32 %s2339, 4
          %s2343 = int_to_ptr.hbm [resolvable:$true] %s2342
          %2348 = dma.vmem_to_hbm [thread:$0]  %s2341, 512, %s2343, %s2326, 256, 256, 16
        $region47: #{tpu_custom_call.1} parent=35 // pred_fallthru
          _
      $region36: #{tpu_custom_call.1} parent=5 // pred_fallthru
        _
      %p2349 = scmp.le.s32.totalorder 2, %s13
      // Predicated region
      $region48: #{tpu_custom_call.1} parent=5 // pred_check
        %p2350 = pneg %p2349
      $region49: #{tpu_custom_call.1} parent=5 // pred_check_branch
        %2352 = sbr.rel (%p2350) target = $region51
      $region50: #{tpu_custom_call.1} parent=5 // pred_region
        %s2353 = ssub.s32 %s13, 2
        // Predicated region
        $region52: #{tpu_custom_call.1} parent=50 // pred_check
          %p2354 = pneg %p156
        $region53: #{tpu_custom_call.1} parent=50 // pred_check_branch
          %2356 = sbr.rel (%p2354) target = $region55
        $region54: #{tpu_custom_call.1} parent=50 // pred_region
          %s2357 = sand.u32 %s141, 1
          %s2358 = scalar_lea.sflag [#allocation5], %s2357
          %s2359 = sand.u32 %s141, 1
          %s2360 = smul.addr %s2359, 32
          %s2361 = scalar_lea.vmem [#allocation4], %s2360
          %2363 = dma.done %s2358, 512
        $region55: #{tpu_custom_call.1} parent=50 // pred_fallthru
          _
      $region51: #{tpu_custom_call.1} parent=5 // pred_fallthru
        _
    $region6: #{tpu_custom_call.1} parent=1 // loop_footer
      %s17 = sadd.s32 1, %s13
    $region7: #{tpu_custom_call.1} parent=1 // loop_footer_branch
      %12 = sbr.rel target = $region3
    $region8: #{tpu_custom_call.1} parent=1 // loop_exit
      _
    %2364 = vsyncpa [#allocation5], 1
    %s2365 = scalar_lea.sflag [#allocation5], 1
    %2366 = vsyncpa %s2365, 1

// kernel: tpu_custom_call.1
$region0: #{tpu_custom_call.1}
  #allocation0 [shape = 'u32[]', space=smem, size = 0x4, offset = 0x4, fixed_abs, tag = 'smem constant byte address 0x4 - core index']
  #allocation1 [shape = 'u32[72,128]{1,0:T(1,128)}', space=vmem, size = 0x9000, scoped, tag = 'internal scratch']
  #allocation2 [shape = 'bf16[16,580]{1,0:T(8,128)(2,1)}', space=vmem, size = 0x5000, scoped, tag = 'scratch operand']
  #allocation3 [shape = 'f32[16,324]{1,0:T(8,128)}', space=vmem, size = 0x6000, scoped, tag = 'scratch operand']
  %s0 = inlined_call_operand.vmem [shape: f32[4,16,324], index: 0, kind: input, shape index: {}]
  %s1 = inlined_call_operand.vmem [shape: bf16[45,16,16], index: 1, kind: input, shape index: {}]
  %s2 = inlined_call_operand.vmem [shape: f32[5,16,1], index: 2, kind: input, shape index: {}]
  %s3 = inlined_call_operand.vmem [shape: f32[2,1,324], index: 3, kind: input, shape index: {}]
  %s4 = inlined_call_operand.hbm [shape: f32[4,16,144], index: 4, kind: output, shape index: {}]
  %s5 = sld [smem:[#allocation0]]
  $region56: #{tpu_custom_call.1} parent=0
    _
  %s7 = ssub.s32 1, %s5
  %s8 = scalar_select 0, %s7, %s5
  $region1: #{tpu_custom_call.1} parent=0
    #allocation4 [shape = 'u8[32768]{0}', space=vmem, size = 0x8000, scoped, tag = 'output window, operand 0']
    #allocation5 [shape = 's32[2]{0}', space=sflag, size = 0x8, scoped, tag = 'scoped memory for tpu_custom_call.1']
    %9 = vsyncpa [#allocation5], 0
    %s10 = scalar_lea.sflag [#allocation5], 1
    %11 = vsyncpa %s10, 0
    loop: start=0, step=1, limit=6
    $region2: #{tpu_custom_call.1} parent=1 // loop_pre_header
      _
    $region3: #{tpu_custom_call.1} parent=1 // loop_header
      %s13 = sphi 0, %s17
      %p14 = scmp.ge.s32.totalorder %s13, 6
      %s20 = sphi 0, %s32
      %s21 = sphi 0, %s28
      %s22 = sphi 0, %s20
      %s23 = sphi 0, %s21
      %s24 = sphi 0, %s22
      %s25 = sphi 0, %s23
      %s39 = sphi 0, %s41
      %s42 = sphi 0, %s39
      %s43 = sphi 0, %s42
      %s59 = sphi 0, %s43
      %s63 = sphi 0, %s63
      %s65 = sphi 0, %s63
      %s66 = sphi 0, %s65
      %s80 = sphi 0, %s66
      %s84 = sphi 0, %s84
      %s86 = sphi 0, %s84
      %s87 = sphi 0, %s86
      %s101 = sphi 0, %s87
      %s107 = sphi 0, %s109
      %s110 = sphi 0, %s107
      %s111 = sphi 0, %s110
      %s127 = sphi 0, %s111
      %s137 = sphi 0, %s139
      %s140 = sphi 0, %s137
      %s141 = sphi 0, %s140
      %s157 = sphi 0, %s141
    $region4: #{tpu_custom_call.1} parent=1 // loop_header_branch
      %16 = sbr.rel (%p14) target = $region8
    $region5: #{tpu_custom_call.1} parent=1 // loop_body
      %s18 = ssub.s32 %s13, 1
      %s19 = ssub.s32 %s13, 2
      %s26 = sadd.s32 1, %s21
      %p27 = scmp.ge.s32.totalorder %s26, 2
      %s28 = scalar_select %p27, 0, %s26
      %s29 = sadd.s32 1, %s20
      %s30 = scalar_select %p27, %s29, %s20
      %p31 = scmp.ge.s32.totalorder %s30, 2
      %s32 = scalar_select %p31, 0, %s30
      %s33 = smul.u32 %s20, 2
      %s34 = sadd.s32 %s33, %s21
      %s35 = smul.u32 %s32, 2
      %s36 = sadd.s32 %s35, %s28
      %s37 = ssub.s32 %s34, %s36
      %p38 = scmp.eq.s32.totalorder %s37, 0
      %s40 = sadd.s32 %s39, 1
      %s41 = scalar_select %p38, %s39, %s40
      %p44 = pneg %p38
      %p45 = scmp.eq.s32.totalorder %s13, 3
      %p46 = por %p44, %p45
      %p47 = scmp.ne.s32.totalorder %s39, %s42
      %p48 = scmp.eq.s32.totalorder %s13, 0
      %p49 = por %p47, %p48
      %p50 = scmp.ne.s32.totalorder %s39, %s42
      %p51 = scmp.eq.s32.totalorder %s18, 3
      %p52 = por %p50, %p51
      %p53 = scmp.ne.s32.totalorder %s42, %s43
      %p54 = scmp.eq.s32.totalorder %s18, 0
      %p55 = por %p53, %p54
      %p56 = scmp.ne.s32.totalorder %s42, %s43
      %p57 = scmp.eq.s32.totalorder %s19, 3
      %p58 = por %p56, %p57
      %p60 = scmp.ne.s32.totalorder %s43, %s59
      %p61 = scmp.eq.s32.totalorder %s19, 0
      %p62 = por %p60, %p61
      %s64 = sadd.s32 %s63, 1
      %p67 = scmp.eq.s32.totalorder %s13, 3
      %p68 = scmp.ne.s32.totalorder %s63, %s65
      %p69 = scmp.eq.s32.totalorder %s13, 0
      %p70 = por %p68, %p69
      %p71 = scmp.ne.s32.totalorder %s63, %s65
      %p72 = scmp.eq.s32.totalorder %s18, 3
      %p73 = por %p71, %p72
      %p74 = scmp.ne.s32.totalorder %s65, %s66
      %p75 = scmp.eq.s32.totalorder %s18, 0
      %p76 = por %p74, %p75
      %p77 = scmp.ne.s32.totalorder %s65, %s66
      %p78 = scmp.eq.s32.totalorder %s19, 3
      %p79 = por %p77, %p78
      %p81 = scmp.ne.s32.totalorder %s66, %s80
      %p82 = scmp.eq.s32.totalorder %s19, 0
      %p83 = por %p81, %p82
      %s85 = sadd.s32 %s84, 1
      %p88 = scmp.eq.s32.totalorder %s13, 3
      %p89 = scmp.ne.s32.totalorder %s84, %s86
      %p90 = scmp.eq.s32.totalorder %s13, 0
      %p91 = por %p89, %p90
      %p92 = scmp.ne.s32.totalorder %s84, %s86
      %p93 = scmp.eq.s32.totalorder %s18, 3
      %p94 = por %p92, %p93
      %p95 = scmp.ne.s32.totalorder %s86, %s87
      %p96 = scmp.eq.s32.totalorder %s18, 0
      %p97 = por %p95, %p96
      %p98 = scmp.ne.s32.totalorder %s86, %s87
      %p99 = scmp.eq.s32.totalorder %s19, 3
      %p100 = por %p98, %p99
      %p102 = scmp.ne.s32.totalorder %s87, %s101
      %p103 = scmp.eq.s32.totalorder %s19, 0
      %p104 = por %p102, %p103
      %s105 = ssub.s32 %s21, %s28
      %p106 = scmp.eq.s32.totalorder %s105, 0
      %s108 = sadd.s32 %s107, 1
      %s109 = scalar_select %p106, %s107, %s108
      %p112 = pneg %p106
      %p113 = scmp.eq.s32.totalorder %s13, 3
      %p114 = por %p112, %p113
      %p115 = scmp.ne.s32.totalorder %s107, %s110
      %p116 = scmp.eq.s32.totalorder %s13, 0
      %p117 = por %p115, %p116
      %p118 = scmp.ne.s32.totalorder %s107, %s110
      %p119 = scmp.eq.s32.totalorder %s18, 3
      %p120 = por %p118, %p119
      %p121 = scmp.ne.s32.totalorder %s110, %s111
      %p122 = scmp.eq.s32.totalorder %s18, 0
      %p123 = por %p121, %p122
      %p124 = scmp.ne.s32.totalorder %s110, %s111
      %p125 = scmp.eq.s32.totalorder %s19, 3
      %p126 = por %p124, %p125
      %p128 = scmp.ne.s32.totalorder %s111, %s127
      %p129 = scmp.eq.s32.totalorder %s19, 0
      %p130 = por %p128, %p129
      %s131 = smul.u32 %s20, 2
      %s132 = sadd.s32 %s131, %s21
      %s133 = smul.u32 %s32, 2
      %s134 = sadd.s32 %s133, %s28
      %s135 = ssub.s32 %s132, %s134
      %p136 = scmp.eq.s32.totalorder %s135, 0
      %s138 = sadd.s32 %s137, 1
      %s139 = scalar_select %p136, %s137, %s138
      %p142 = pneg %p136
      %p143 = scmp.eq.s32.totalorder %s13, 3
      %p144 = por %p142, %p143
      %p145 = scmp.ne.s32.totalorder %s137, %s140
      %p146 = scmp.eq.s32.totalorder %s13, 0
      %p147 = por %p145, %p146
      %p148 = scmp.ne.s32.totalorder %s137, %s140
      %p149 = scmp.eq.s32.totalorder %s18, 3
      %p150 = por %p148, %p149
      %p151 = scmp.ne.s32.totalorder %s140, %s141
      %p152 = scmp.eq.s32.totalorder %s18, 0
      %p153 = por %p151, %p152
      %p154 = scmp.ne.s32.totalorder %s140, %s141
      %p155 = scmp.eq.s32.totalorder %s19, 3
      %p156 = por %p154, %p155
      %p158 = scmp.ne.s32.totalorder %s141, %s157
      %p159 = scmp.eq.s32.totalorder %s19, 0
      %p160 = por %p158, %p159
      %p161 = scmp.le.s32.totalorder 1, %s13
      %p162 = scmp.lt.s32.totalorder %s13, 5
      %p163 = pnand %p161, %p162
      %p164 = pneg %p163
      // Predicated region
      $region9: #{tpu_custom_call.1} parent=5 // pred_check
        _
      $region10: #{tpu_custom_call.1} parent=5 // pred_check_branch
        %166 = sbr.rel (%p163) target = $region12
      $region11: #{tpu_custom_call.1} parent=5 // pred_region
        %s167 = ssub.s32 %s13, 1
        // Predicated region
        $region13: #{tpu_custom_call.1} parent=11 // pred_check
          %p168 = pneg %p76
        $region14: #{tpu_custom_call.1} parent=11 // pred_check_branch
          %170 = sbr.rel (%p168) target = $region16
        $region15: #{tpu_custom_call.1} parent=11 // pred_region
          _
        $region16: #{tpu_custom_call.1} parent=11 // pred_fallthru
          _
        // Predicated region
        $region17: #{tpu_custom_call.1} parent=11 // pred_check
          %p171 = pneg %p97
        $region18: #{tpu_custom_call.1} parent=11 // pred_check_branch
          %173 = sbr.rel (%p171) target = $region20
        $region19: #{tpu_custom_call.1} parent=11 // pred_region
          _
        $region20: #{tpu_custom_call.1} parent=11 // pred_fallthru
          _
      $region12: #{tpu_custom_call.1} parent=5 // pred_fallthru
        _
      %p174 = scmp.lt.s32.totalorder %s13, 4
      // Predicated region
      $region21: #{tpu_custom_call.1} parent=5 // pred_check
        %p175 = pneg %p174
      $region22: #{tpu_custom_call.1} parent=5 // pred_check_branch
        %177 = sbr.rel (%p175) target = $region24
      $region23: #{tpu_custom_call.1} parent=5 // pred_region
        // Predicated region
        $region25: #{tpu_custom_call.1} parent=23 // pred_check
          %p178 = pneg %p49
        $region26: #{tpu_custom_call.1} parent=23 // pred_check_branch
          %180 = sbr.rel (%p178) target = $region28
        $region27: #{tpu_custom_call.1} parent=23 // pred_region
          %s181 = smul.u32 %s20, 2
          %s182 = sadd.s32 %s181, %s21
          %p183 = scmp.lt.s32.totalorder %s182, 3
          %s184 = scalar_select %p183, %s182, 3
          %s185 = smul.addr %s184, 6
          %s186 = smul.addr %s185, 8
          %s187 = scalar_lea.vmem %s0, %s186
          %s188 = smul.u32 %s20, 2
          %s189 = sadd.s32 %s188, %s21
        $region28: #{tpu_custom_call.1} parent=23 // pred_fallthru
          _
        // Predicated region
        $region29: #{tpu_custom_call.1} parent=23 // pred_check
          %p190 = pneg %p117
        $region30: #{tpu_custom_call.1} parent=23 // pred_check_branch
          %192 = sbr.rel (%p190) target = $region32
        $region31: #{tpu_custom_call.1} parent=23 // pred_region
          %p193 = scmp.lt.s32.totalorder %s21, 1
          %s194 = scalar_select %p193, %s21, 1
          %s195 = smul.addr %s194, 3
          %s196 = scalar_lea.vmem %s3, %s195
        $region32: #{tpu_custom_call.1} parent=23 // pred_fallthru
          _
      $region24: #{tpu_custom_call.1} parent=5 // pred_fallthru
        _
      %p197 = scmp.le.s32.totalorder 1, %s13
      %p198 = scmp.lt.s32.totalorder %s13, 5
      %p199 = pnand %p197, %p198
      %p200 = pneg %p199
      // Predicated region
      $region33: #{tpu_custom_call.1} parent=5 // pred_check
        _
      $region34: #{tpu_custom_call.1} parent=5 // pred_check_branch
        %202 = sbr.rel (%p199) target = $region36
      $region35: #{tpu_custom_call.1} parent=5 // pred_region
        %s203 = ssub.s32 %s13, 1
        %s204 = smul.u32 %s22, 2
        %s205 = sadd.s32 %s204, %s23
        %p206 = scmp.lt.s32.totalorder %s205, 3
        %s207 = scalar_select %p206, %s205, 3
        %s208 = smul.addr %s207, 6
        %s209 = smul.addr %s208, 8
        %s210 = scalar_lea.vmem %s0, %s209
        %p211 = pneg %p55
        %p212 = pneg %p52
        %p213 = pneg %p76
        %p214 = pneg %p73
        %p215 = pneg %p97
        %p216 = pneg %p94
        %p217 = scmp.lt.s32.totalorder %s23, 1
        %s218 = scalar_select %p217, %s23, 1
        %s219 = smul.addr %s218, 3
        %s220 = scalar_lea.vmem %s3, %s219
        %p221 = pneg %p123
        %p222 = pneg %p120
        %p223 = pneg %p153
        %p224 = pneg %p150
        %s225 = sand.u32 %s140, 1
        %s226 = scalar_lea.sflag [#allocation5], %s225
        %s227 = sand.u32 %s140, 1
        %s228 = smul.addr %s227, 32
        %s229 = scalar_lea.vmem [#allocation4], %s228
        %s230 = smul.u32 %s22, 2
        %s231 = sadd.s32 %s230, %s23
        %p232 = scmp.lt.s32.totalorder %s231, 3
        %s233 = scalar_select %p232, %s231, 3
        %s234 = smul.addr %s233, 6
        %s235 = smul.addr %s234, 8
        %s236 = scalar_lea.vmem %s0, %s235
        %s237 = smul.u32 %s22, 2
        %s238 = sadd.s32 %s237, %s23
        %p239 = scmp.lt.s32.totalorder %s23, 1
        %s240 = scalar_select %p239, %s23, 1
        %s241 = smul.addr %s240, 3
        %s242 = scalar_lea.vmem %s3, %s241
        %s243 = smul.u32 %s22, 2
        %s244 = sadd.s32 %s243, %s23
        %246 = vst [vmem:[#allocation2] sm:$0xf] 0
        %247 = vst [vmem:[#allocation2 + $0x14] sm:$0xf] 0
        %vm248 = vcmask 1044000
        %vm249 = vcmask 556036
        %vm250 = vmor %vm249, %vm248
        %251 = vst.msk [vmem:[#allocation2 + $0xc] sm:$0xff] %vm250, 0
        %252 = vst.msk [vmem:[#allocation2 + $0x20] sm:$0xff] %vm250, 0
        %v253 = vld [vmem:[%s242] sm:$0x7]
        %v254 = vld [vmem:[%s236] sm:$0xff]
        %v255 = vld [vmem:[%s236 + $0x8] sm:$0xff]
        %v256 = vld [vmem:[%s236 + $0x10] sm:$0xff]
        %v257 = vld [vmem:[%s236 + $0x18] sm:$0xff]
        %v258 = vld [vmem:[%s236 + $0x20] sm:$0xff]
        %v259 = vld [vmem:[%s236 + $0x28] sm:$0xff]
        %260 = vst [vmem:[#allocation3] sm:$0xff] %v254
        %261 = vst [vmem:[#allocation3 + $0x8] sm:$0xff] %v255
        %vm262 = vcmask 556032
        %263 = vst.msk [vmem:[#allocation3 + $0x10] sm:$0xff] %vm262, %v256
        %264 = vst [vmem:[#allocation3 + $0x18] sm:$0xff] %v257
        %265 = vst [vmem:[#allocation3 + $0x20] sm:$0xff] %v258
        %266 = vst.msk [vmem:[#allocation3 + $0x28] sm:$0xff] %vm262, %v259
        %v267 = vpack.c.bf16 %v255, %v254
        %v268 = vpack.c.bf16 %v256, %v256
        %v269 = vpack.c.bf16 %v258, %v257
        %v270 = vpack.c.bf16 %v259, %v259
        %271 = vst [vmem:[#allocation2 + $0x4] sm:$0xff] %v267
        %vm272 = vcmask 551936
        %273 = vst.msk [vmem:[#allocation2 + $0xc] sm:$0xf] %vm272, %v268
        %274 = vst [vmem:[#allocation2 + $0x18] sm:$0xff] %v269
        %275 = vst.msk [vmem:[#allocation2 + $0x20] sm:$0xf] %vm272, %v270
        loop: start=0, step=1, limit=2
        $region37: #{tpu_custom_call.1} parent=35 // loop_pre_header
          _
        $region38: #{tpu_custom_call.1} parent=35 // loop_header
          %s277 = sphi 0, %s281
          %p278 = scmp.ge.s32.totalorder %s277, 2
        $region39: #{tpu_custom_call.1} parent=35 // loop_header_branch
          %280 = sbr.rel (%p278) target = $region43
        $region40: #{tpu_custom_call.1} parent=35 // loop_body
          %s282 = smul.u32 %s277, 2
          %v283 = vld [vmem:[#allocation2] sm:$0xff]
          %v284 = vld [vmem:[#allocation2 + $0x8] sm:$0xff]
          %v285 = vld [vmem:[#allocation2 + $0x14] sm:$0xff]
          %v286 = vld [vmem:[#allocation2 + $0x1c] sm:$0xff]
          %s287 = smul.u32 %s277, 18
          %s288 = smul.u32 %s287, 2
          %s289 = smul.addr %s288, 4
          %s290 = scalar_lea.vmem %s1, %s289
          %v291 = vld [vmem:[%s290] sm:$0xf]
          %v292 = vld [vmem:[%s290 + $0x4] sm:$0xf]
          %s293 = sadd.s32 %s287, 1
          %s294 = smul.u32 %s293, 2
          %s295 = smul.addr %s294, 4
          %s296 = scalar_lea.vmem %s1, %s295
          %v297 = vld [vmem:[%s296] sm:$0xf]
          %v298 = vld [vmem:[%s296 + $0x4] sm:$0xf]
          %v301 = vunpack.c.l.b16 %v297
          %v302 = vunpack.c.l.b16 %v298
          %v303 = vpack.c.b16 %v302, %v301
          %v308 = vunpack.c.l.b16 %v283
          %v309 = vunpack.c.h.b16 %v283
          %v310 = vunpack.c.l.b16 %v284
          %v311 = vunpack.c.h.b16 %v284
          %v312 = vunpack.c.l.b16 %v285
          %v313 = vunpack.c.h.b16 %v285
          %v314 = vunpack.c.l.b16 %v286
          %v315 = vunpack.c.h.b16 %v286
          %v316 = vpack.c.b16 %v312, %v308
          %v317 = vpack.c.b16 %v313, %v309
          %v318 = vpack.c.b16 %v314, %v310
          %v319 = vpack.c.b16 %v315, %v311
          %320 = vrot.lane.b32.xlu0 %v316, 18
          %v321 = vpop.permute.xlu0 %320
          %322 = vrot.lane.b32.xlu0 %v317, 18
          %v323 = vpop.permute.xlu0 %322
          %324 = vrot.lane.b32.xlu0 %v318, 18
          %v325 = vpop.permute.xlu0 %324
          %326 = vrot.lane.b32.xlu0 %v319, 18
          %v327 = vpop.permute.xlu0 %326
          %vm328 = vcmask 146432
          %v329 = vsel %vm328, %v321, %v323
          %v330 = vsel %vm328, %v323, %v325
          %v331 = vsel %vm328, %v325, %v327
          %vm335 = vcmask 130048
          %v337 = vsel %vm335, %v303, 0
          %339 = vmatpush.bf16.msra.mxu0 0
          %340 = vmatpush.bf16.msra.mxu0 0
          %341 = vmatpush.bf16.msra.mxu0 0
          %342 = vmatpush.bf16.msra.mxu0 0
          %343 = vmatpush.bf16.msra.mxu0 0
          %344 = vmatpush.bf16.msra.mxu0 0
          %345 = vmatpush.bf16.msra.mxu0 0
          %346 = vmatpush.bf16.msra.mxu0 %v329
          %347 = vmatmul.bf16.gmra.mxu0 %v337
          %v348 = vpop.f32.mrf.mxu0
          %v349 = vadd.f32 0.0, %v348
          %v350 = vpop.f32.mrf.mxu0
          %v351 = vadd.f32 0.0, %v350
          %352 = vdwg.mxu0
          %353 = vmatpush.bf16.msra.mxu0 0
          %354 = vmatpush.bf16.msra.mxu0 0
          %355 = vmatpush.bf16.msra.mxu0 0
          %356 = vmatpush.bf16.msra.mxu0 0
          %357 = vmatpush.bf16.msra.mxu0 0
          %358 = vmatpush.bf16.msra.mxu0 0
          %359 = vmatpush.bf16.msra.mxu0 0
          %360 = vmatpush.bf16.msra.mxu0 %v330
          %361 = vmatmul.bf16.gmra.mxu0 %v337
          %v362 = vpop.f32.mrf.mxu0
          %v363 = vadd.f32 0.0, %v362
          %v364 = vpop.f32.mrf.mxu0
          %v365 = vadd.f32 0.0, %v364
          %366 = vdwg.mxu0
          %367 = vmatpush.bf16.msra.mxu0 0
          %368 = vmatpush.bf16.msra.mxu0 0
          %369 = vmatpush.bf16.msra.mxu0 0
          %370 = vmatpush.bf16.msra.mxu0 0
          %371 = vmatpush.bf16.msra.mxu0 0
          %372 = vmatpush.bf16.msra.mxu0 0
          %373 = vmatpush.bf16.msra.mxu0 0
          %374 = vmatpush.bf16.msra.mxu0 %v331
          %375 = vmatmul.bf16.gmra.mxu0 %v337
          %v376 = vpop.f32.mrf.mxu0
          %v377 = vadd.f32 0.0, %v376
          %v378 = vpop.f32.mrf.mxu0
          %v379 = vadd.f32 0.0, %v378
          %380 = vdwg.mxu0
          %v383 = vunpack.c.l.b16 %v291
          %v384 = vunpack.c.l.b16 %v292
          %v385 = vpack.c.b16 %v384, %v383
          %386 = vrot.lane.b32.xlu0 %v316, 19
          %v387 = vpop.permute.xlu0 %386
          %388 = vrot.lane.b32.xlu0 %v317, 19
          %v389 = vpop.permute.xlu0 %388
          %390 = vrot.lane.b32.xlu0 %v318, 19
          %v391 = vpop.permute.xlu0 %390
          %392 = vrot.lane.b32.xlu0 %v319, 19
          %v393 = vpop.permute.xlu0 %392
          %vm394 = vcmask 154624
          %v395 = vsel %vm394, %v387, %v389
          %v396 = vsel %vm394, %v389, %v391
          %v397 = vsel %vm394, %v391, %v393
          %v402 = vsel %vm335, %v385, 0
          %404 = vmatpush.bf16.msra.mxu0 0
          %405 = vmatpush.bf16.msra.mxu0 0
          %406 = vmatpush.bf16.msra.mxu0 0
          %407 = vmatpush.bf16.msra.mxu0 0
          %408 = vmatpush.bf16.msra.mxu0 0
          %409 = vmatpush.bf16.msra.mxu0 0
          %410 = vmatpush.bf16.msra.mxu0 0
          %411 = vmatpush.bf16.msra.mxu0 %v395
          %412 = vmatmul.bf16.gmra.mxu0 %v402
          %v413 = vpop.f32.mrf.mxu0
          %v414 = vadd.f32 %v349, %v413
          %v415 = vpop.f32.mrf.mxu0
          %v416 = vadd.f32 %v351, %v415
          %417 = vdwg.mxu0
          %418 = vmatpush.bf16.msra.mxu0 0
          %419 = vmatpush.bf16.msra.mxu0 0
          %420 = vmatpush.bf16.msra.mxu0 0
          %421 = vmatpush.bf16.msra.mxu0 0
          %422 = vmatpush.bf16.msra.mxu0 0
          %423 = vmatpush.bf16.msra.mxu0 0
          %424 = vmatpush.bf16.msra.mxu0 0
          %425 = vmatpush.bf16.msra.mxu0 %v396
          %426 = vmatmul.bf16.gmra.mxu0 %v402
          %v427 = vpop.f32.mrf.mxu0
          %v428 = vadd.f32 %v363, %v427
          %v429 = vpop.f32.mrf.mxu0
          %v430 = vadd.f32 %v365, %v429
          %431 = vdwg.mxu0
          %432 = vmatpush.bf16.msra.mxu0 0
          %433 = vmatpush.bf16.msra.mxu0 0
          %434 = vmatpush.bf16.msra.mxu0 0
          %435 = vmatpush.bf16.msra.mxu0 0
          %436 = vmatpush.bf16.msra.mxu0 0
          %437 = vmatpush.bf16.msra.mxu0 0
          %438 = vmatpush.bf16.msra.mxu0 0
          %439 = vmatpush.bf16.msra.mxu0 %v397
          %440 = vmatmul.bf16.gmra.mxu0 %v402
          %v441 = vpop.f32.mrf.mxu0
          %v442 = vadd.f32 %v377, %v441
          %v443 = vpop.f32.mrf.mxu0
          %v444 = vadd.f32 %v379, %v443
          %445 = vdwg.mxu0
          %s446 = sadd.s32 %s287, 2
          %s447 = smul.u32 %s446, 2
          %s448 = smul.addr %s447, 4
          %s449 = scalar_lea.vmem %s1, %s448
          %v450 = vld [vmem:[%s449] sm:$0xf]
          %v451 = vld [vmem:[%s449 + $0x4] sm:$0xf]
          %v454 = vunpack.c.l.b16 %v450
          %v455 = vunpack.c.l.b16 %v451
          %v456 = vpack.c.b16 %v455, %v454
          %457 = vrot.lane.b32.xlu0 %v316, 17
          %v458 = vpop.permute.xlu0 %457
          %459 = vrot.lane.b32.xlu0 %v317, 17
          %v460 = vpop.permute.xlu0 %459
          %461 = vrot.lane.b32.xlu0 %v318, 17
          %v462 = vpop.permute.xlu0 %461
          %463 = vrot.lane.b32.xlu0 %v319, 17
          %v464 = vpop.permute.xlu0 %463
          %vm465 = vcmask 138240
          %v466 = vsel %vm465, %v458, %v460
          %v467 = vsel %vm465, %v460, %v462
          %v468 = vsel %vm465, %v462, %v464
          %v473 = vsel %vm335, %v456, 0
          %475 = vmatpush.bf16.msra.mxu0 0
          %476 = vmatpush.bf16.msra.mxu0 0
          %477 = vmatpush.bf16.msra.mxu0 0
          %478 = vmatpush.bf16.msra.mxu0 0
          %479 = vmatpush.bf16.msra.mxu0 0
          %480 = vmatpush.bf16.msra.mxu0 0
          %481 = vmatpush.bf16.msra.mxu0 0
          %482 = vmatpush.bf16.msra.mxu0 %v466
          %483 = vmatmul.bf16.gmra.mxu0 %v473
          %v484 = vpop.f32.mrf.mxu0
          %v485 = vadd.f32 0.0, %v484
          %v486 = vpop.f32.mrf.mxu0
          %v487 = vadd.f32 0.0, %v486
          %488 = vdwg.mxu0
          %489 = vmatpush.bf16.msra.mxu0 0
          %490 = vmatpush.bf16.msra.mxu0 0
          %491 = vmatpush.bf16.msra.mxu0 0
          %492 = vmatpush.bf16.msra.mxu0 0
          %493 = vmatpush.bf16.msra.mxu0 0
          %494 = vmatpush.bf16.msra.mxu0 0
          %495 = vmatpush.bf16.msra.mxu0 0
          %496 = vmatpush.bf16.msra.mxu0 %v467
          %497 = vmatmul.bf16.gmra.mxu0 %v473
          %v498 = vpop.f32.mrf.mxu0
          %v499 = vadd.f32 0.0, %v498
          %v500 = vpop.f32.mrf.mxu0
          %v501 = vadd.f32 0.0, %v500
          %502 = vdwg.mxu0
          %503 = vmatpush.bf16.msra.mxu0 0
          %504 = vmatpush.bf16.msra.mxu0 0
          %505 = vmatpush.bf16.msra.mxu0 0
          %506 = vmatpush.bf16.msra.mxu0 0
          %507 = vmatpush.bf16.msra.mxu0 0
          %508 = vmatpush.bf16.msra.mxu0 0
          %509 = vmatpush.bf16.msra.mxu0 0
          %510 = vmatpush.bf16.msra.mxu0 %v468
          %511 = vmatmul.bf16.gmra.mxu0 %v473
          %v512 = vpop.f32.mrf.mxu0
          %v513 = vadd.f32 0.0, %v512
          %v514 = vpop.f32.mrf.mxu0
          %v515 = vadd.f32 0.0, %v514
          %516 = vdwg.mxu0
          %v517 = vadd.f32 %v414, %v485
          %v518 = vadd.f32 %v428, %v499
          %v519 = vadd.f32 %v442, %v513
          %v520 = vadd.f32 %v416, %v487
          %v521 = vadd.f32 %v430, %v501
          %v522 = vadd.f32 %v444, %v515
          %s523 = sadd.s32 %s287, 3
          %s524 = smul.u32 %s523, 2
          %s525 = smul.addr %s524, 4
          %s526 = scalar_lea.vmem %s1, %s525
          %v527 = vld [vmem:[%s526] sm:$0xf]
          %v528 = vld [vmem:[%s526 + $0x4] sm:$0xf]
          %v531 = vunpack.c.l.b16 %v527
          %v532 = vunpack.c.l.b16 %v528
          %v533 = vpack.c.b16 %v532, %v531
          %534 = vrot.lane.b32.xlu0 %v316, 1
          %v535 = vpop.permute.xlu0 %534
          %536 = vrot.lane.b32.xlu0 %v317, 1
          %v537 = vpop.permute.xlu0 %536
          %538 = vrot.lane.b32.xlu0 %v318, 1
          %v539 = vpop.permute.xlu0 %538
          %540 = vrot.lane.b32.xlu0 %v319, 1
          %v541 = vpop.permute.xlu0 %540
          %vm542 = vcmask 7168
          %v543 = vsel %vm542, %v535, %v537
          %v544 = vsel %vm542, %v537, %v539
          %v545 = vsel %vm542, %v539, %v541
          %v550 = vsel %vm335, %v533, 0
          %552 = vmatpush.bf16.msra.mxu0 0
          %553 = vmatpush.bf16.msra.mxu0 0
          %554 = vmatpush.bf16.msra.mxu0 0
          %555 = vmatpush.bf16.msra.mxu0 0
          %556 = vmatpush.bf16.msra.mxu0 0
          %557 = vmatpush.bf16.msra.mxu0 0
          %558 = vmatpush.bf16.msra.mxu0 0
          %559 = vmatpush.bf16.msra.mxu0 %v543
          %560 = vmatmul.bf16.gmra.mxu0 %v550
          %v561 = vpop.f32.mrf.mxu0
          %v562 = vadd.f32 0.0, %v561
          %v563 = vpop.f32.mrf.mxu0
          %v564 = vadd.f32 0.0, %v563
          %565 = vdwg.mxu0
          %566 = vmatpush.bf16.msra.mxu0 0
          %567 = vmatpush.bf16.msra.mxu0 0
          %568 = vmatpush.bf16.msra.mxu0 0
          %569 = vmatpush.bf16.msra.mxu0 0
          %570 = vmatpush.bf16.msra.mxu0 0
          %571 = vmatpush.bf16.msra.mxu0 0
          %572 = vmatpush.bf16.msra.mxu0 0
          %573 = vmatpush.bf16.msra.mxu0 %v544
          %574 = vmatmul.bf16.gmra.mxu0 %v550
          %v575 = vpop.f32.mrf.mxu0
          %v576 = vadd.f32 0.0, %v575
          %v577 = vpop.f32.mrf.mxu0
          %v578 = vadd.f32 0.0, %v577
          %579 = vdwg.mxu0
          %580 = vmatpush.bf16.msra.mxu0 0
          %581 = vmatpush.bf16.msra.mxu0 0
          %582 = vmatpush.bf16.msra.mxu0 0
          %583 = vmatpush.bf16.msra.mxu0 0
          %584 = vmatpush.bf16.msra.mxu0 0
          %585 = vmatpush.bf16.msra.mxu0 0
          %586 = vmatpush.bf16.msra.mxu0 0
          %587 = vmatpush.bf16.msra.mxu0 %v545
          %588 = vmatmul.bf16.gmra.mxu0 %v550
          %v589 = vpop.f32.mrf.mxu0
          %v590 = vadd.f32 0.0, %v589
          %v591 = vpop.f32.mrf.mxu0
          %v592 = vadd.f32 0.0, %v591
          %593 = vdwg.mxu0
          %v594 = vadd.f32 %v517, %v562
          %v595 = vadd.f32 %v518, %v576
          %v596 = vadd.f32 %v519, %v590
          %v597 = vadd.f32 %v520, %v564
          %v598 = vadd.f32 %v521, %v578
          %v599 = vadd.f32 %v522, %v592
          %v600 = vld [vmem:[#allocation2 + $0x4] sm:$0xff]
          %v601 = vld [vmem:[#allocation2 + $0xc] sm:$0xf]
          %v602 = vld [vmem:[#allocation2 + $0x18] sm:$0xff]
          %v603 = vld [vmem:[#allocation2 + $0x20] sm:$0xf]
          %s604 = sadd.s32 %s287, 4
          %s605 = smul.u32 %s604, 2
          %s606 = smul.addr %s605, 4
          %s607 = scalar_lea.vmem %s1, %s606
          %v608 = vld [vmem:[%s607] sm:$0xf]
          %v609 = vld [vmem:[%s607 + $0x4] sm:$0xf]
          %v612 = vunpack.c.l.b16 %v608
          %v613 = vunpack.c.l.b16 %v609
          %v614 = vpack.c.b16 %v613, %v612
          %v619 = vunpack.c.l.b16 %v600
          %v620 = vunpack.c.h.b16 %v600
          %v621 = vunpack.c.l.b16 %v601
          %v622 = vunpack.c.l.b16 %v602
          %v623 = vunpack.c.h.b16 %v602
          %v624 = vunpack.c.l.b16 %v603
          %v625 = vpack.c.b16 %v622, %v619
          %v626 = vpack.c.b16 %v623, %v620
          %v627 = vpack.c.b16 %v624, %v621
          %v632 = vsel %vm335, %v614, 0
          %634 = vmatpush.bf16.msra.mxu0 0
          %635 = vmatpush.bf16.msra.mxu0 0
          %636 = vmatpush.bf16.msra.mxu0 0
          %637 = vmatpush.bf16.msra.mxu0 0
          %638 = vmatpush.bf16.msra.mxu0 0
          %639 = vmatpush.bf16.msra.mxu0 0
          %640 = vmatpush.bf16.msra.mxu0 0
          %641 = vmatpush.bf16.msra.mxu0 %v625
          %642 = vmatmul.bf16.gmra.mxu0 %v632
          %v643 = vpop.f32.mrf.mxu0
          %v644 = vadd.f32 0.0, %v643
          %v645 = vpop.f32.mrf.mxu0
          %v646 = vadd.f32 0.0, %v645
          %647 = vdwg.mxu0
          %648 = vmatpush.bf16.msra.mxu0 0
          %649 = vmatpush.bf16.msra.mxu0 0
          %650 = vmatpush.bf16.msra.mxu0 0
          %651 = vmatpush.bf16.msra.mxu0 0
          %652 = vmatpush.bf16.msra.mxu0 0
          %653 = vmatpush.bf16.msra.mxu0 0
          %654 = vmatpush.bf16.msra.mxu0 0
          %655 = vmatpush.bf16.msra.mxu0 %v626
          %656 = vmatmul.bf16.gmra.mxu0 %v632
          %v657 = vpop.f32.mrf.mxu0
          %v658 = vadd.f32 0.0, %v657
          %v659 = vpop.f32.mrf.mxu0
          %v660 = vadd.f32 0.0, %v659
          %661 = vdwg.mxu0
          %662 = vmatpush.bf16.msra.mxu0 0
          %663 = vmatpush.bf16.msra.mxu0 0
          %664 = vmatpush.bf16.msra.mxu0 0
          %665 = vmatpush.bf16.msra.mxu0 0
          %666 = vmatpush.bf16.msra.mxu0 0
          %667 = vmatpush.bf16.msra.mxu0 0
          %668 = vmatpush.bf16.msra.mxu0 0
          %669 = vmatpush.bf16.msra.mxu0 %v627
          %670 = vmatmul.bf16.gmra.mxu0 %v632
          %v671 = vpop.f32.mrf.mxu0
          %v672 = vadd.f32 0.0, %v671
          %v673 = vpop.f32.mrf.mxu0
          %v674 = vadd.f32 0.0, %v673
          %675 = vdwg.mxu0
          %v676 = vadd.f32 %v594, %v644
          %v677 = vadd.f32 %v595, %v658
          %v678 = vadd.f32 %v596, %v672
          %v679 = vadd.f32 %v597, %v646
          %v680 = vadd.f32 %v598, %v660
          %v681 = vadd.f32 %v599, %v674
          %s682 = sadd.s32 %s287, 5
          %s683 = smul.u32 %s682, 2
          %s684 = smul.addr %s683, 4
          %s685 = scalar_lea.vmem %s1, %s684
          %v686 = vld [vmem:[%s685] sm:$0xf]
          %v687 = vld [vmem:[%s685 + $0x4] sm:$0xf]
          %v690 = vunpack.c.l.b16 %v686
          %v691 = vunpack.c.l.b16 %v687
          %v692 = vpack.c.b16 %v691, %v690
          %693 = vrot.lane.b32.xlu0 %v625, 127
          %v694 = vpop.permute.xlu0 %693
          %695 = vrot.lane.b32.xlu0 %v626, 127
          %v696 = vpop.permute.xlu0 %695
          %697 = vrot.lane.b32.xlu0 %v627, 127
          %v698 = vpop.permute.xlu0 %697
          %vm699 = vcmask 1039360
          %v700 = vsel %vm699, %v694, %v696
          %v701 = vsel %vm699, %v696, %v698
          %v706 = vsel %vm335, %v692, 0
          %708 = vmatpush.bf16.msra.mxu0 0
          %709 = vmatpush.bf16.msra.mxu0 0
          %710 = vmatpush.bf16.msra.mxu0 0
          %711 = vmatpush.bf16.msra.mxu0 0
          %712 = vmatpush.bf16.msra.mxu0 0
          %713 = vmatpush.bf16.msra.mxu0 0
          %714 = vmatpush.bf16.msra.mxu0 0
          %715 = vmatpush.bf16.msra.mxu0 %v700
          %716 = vmatmul.bf16.gmra.mxu0 %v706
          %v717 = vpop.f32.mrf.mxu0
          %v718 = vadd.f32 0.0, %v717
          %v719 = vpop.f32.mrf.mxu0
          %v720 = vadd.f32 0.0, %v719
          %721 = vdwg.mxu0
          %722 = vmatpush.bf16.msra.mxu0 0
          %723 = vmatpush.bf16.msra.mxu0 0
          %724 = vmatpush.bf16.msra.mxu0 0
          %725 = vmatpush.bf16.msra.mxu0 0
          %726 = vmatpush.bf16.msra.mxu0 0
          %727 = vmatpush.bf16.msra.mxu0 0
          %728 = vmatpush.bf16.msra.mxu0 0
          %729 = vmatpush.bf16.msra.mxu0 %v701
          %730 = vmatmul.bf16.gmra.mxu0 %v706
          %v731 = vpop.f32.mrf.mxu0
          %v732 = vadd.f32 0.0, %v731
          %v733 = vpop.f32.mrf.mxu0
          %v734 = vadd.f32 0.0, %v733
          %735 = vdwg.mxu0
          %736 = vmatpush.bf16.msra.mxu0 0
          %737 = vmatpush.bf16.msra.mxu0 0
          %738 = vmatpush.bf16.msra.mxu0 0
          %739 = vmatpush.bf16.msra.mxu0 0
          %740 = vmatpush.bf16.msra.mxu0 0
          %741 = vmatpush.bf16.msra.mxu0 0
          %742 = vmatpush.bf16.msra.mxu0 0
          %743 = vmatpush.bf16.msra.mxu0 %v698
          %744 = vmatmul.bf16.gmra.mxu0 %v706
          %v745 = vpop.f32.mrf.mxu0
          %v746 = vadd.f32 0.0, %v745
          %v747 = vpop.f32.mrf.mxu0
          %v748 = vadd.f32 0.0, %v747
          %749 = vdwg.mxu0
          %v750 = vadd.f32 %v676, %v718
          %v751 = vadd.f32 %v677, %v732
          %v752 = vadd.f32 %v678, %v746
          %v753 = vadd.f32 %v679, %v720
          %v754 = vadd.f32 %v680, %v734
          %v755 = vadd.f32 %v681, %v748
          %s756 = sadd.s32 %s287, 6
          %s757 = smul.u32 %s756, 2
          %s758 = smul.addr %s757, 4
          %s759 = scalar_lea.vmem %s1, %s758
          %v760 = vld [vmem:[%s759] sm:$0xf]
          %v761 = vld [vmem:[%s759 + $0x4] sm:$0xf]
          %v764 = vunpack.c.l.b16 %v760
          %v765 = vunpack.c.l.b16 %v761
          %v766 = vpack.c.b16 %v765, %v764
          %767 = vrot.lane.b32.xlu0 %v625, 111
          %v768 = vpop.permute.xlu0 %767
          %769 = vrot.lane.b32.xlu0 %v626, 111
          %v770 = vpop.permute.xlu0 %769
          %771 = vrot.lane.b32.xlu0 %v627, 111
          %v772 = vpop.permute.xlu0 %771
          %vm773 = vcmask 908288
          %v774 = vsel %vm773, %v768, %v770
          %v775 = vsel %vm773, %v770, %v772
          %v780 = vsel %vm335, %v766, 0
          %782 = vmatpush.bf16.msra.mxu0 0
          %783 = vmatpush.bf16.msra.mxu0 0
          %784 = vmatpush.bf16.msra.mxu0 0
          %785 = vmatpush.bf16.msra.mxu0 0
          %786 = vmatpush.bf16.msra.mxu0 0
          %787 = vmatpush.bf16.msra.mxu0 0
          %788 = vmatpush.bf16.msra.mxu0 0
          %789 = vmatpush.bf16.msra.mxu0 %v774
          %790 = vmatmul.bf16.gmra.mxu0 %v780
          %v791 = vpop.f32.mrf.mxu0
          %v792 = vadd.f32 0.0, %v791
          %v793 = vpop.f32.mrf.mxu0
          %v794 = vadd.f32 0.0, %v793
          %795 = vdwg.mxu0
          %796 = vmatpush.bf16.msra.mxu0 0
          %797 = vmatpush.bf16.msra.mxu0 0
          %798 = vmatpush.bf16.msra.mxu0 0
          %799 = vmatpush.bf16.msra.mxu0 0
          %800 = vmatpush.bf16.msra.mxu0 0
          %801 = vmatpush.bf16.msra.mxu0 0
          %802 = vmatpush.bf16.msra.mxu0 0
          %803 = vmatpush.bf16.msra.mxu0 %v775
          %804 = vmatmul.bf16.gmra.mxu0 %v780
          %v805 = vpop.f32.mrf.mxu0
          %v806 = vadd.f32 0.0, %v805
          %v807 = vpop.f32.mrf.mxu0
          %v808 = vadd.f32 0.0, %v807
          %809 = vdwg.mxu0
          %810 = vmatpush.bf16.msra.mxu0 0
          %811 = vmatpush.bf16.msra.mxu0 0
          %812 = vmatpush.bf16.msra.mxu0 0
          %813 = vmatpush.bf16.msra.mxu0 0
          %814 = vmatpush.bf16.msra.mxu0 0
          %815 = vmatpush.bf16.msra.mxu0 0
          %816 = vmatpush.bf16.msra.mxu0 0
          %817 = vmatpush.bf16.msra.mxu0 %v772
          %818 = vmatmul.bf16.gmra.mxu0 %v780
          %v819 = vpop.f32.mrf.mxu0
          %v820 = vadd.f32 0.0, %v819
          %v821 = vpop.f32.mrf.mxu0
          %v822 = vadd.f32 0.0, %v821
          %823 = vdwg.mxu0
          %v824 = vadd.f32 %v750, %v792
          %v825 = vadd.f32 %v751, %v806
          %v826 = vadd.f32 %v752, %v820
          %v827 = vadd.f32 %v753, %v794
          %v828 = vadd.f32 %v754, %v808
          %v829 = vadd.f32 %v755, %v822
          %s830 = sadd.s32 %s287, 7
          %s831 = smul.u32 %s830, 2
          %s832 = smul.addr %s831, 4
          %s833 = scalar_lea.vmem %s1, %s832
          %v834 = vld [vmem:[%s833] sm:$0xf]
          %v835 = vld [vmem:[%s833 + $0x4] sm:$0xf]
          %v838 = vunpack.c.l.b16 %v834
          %v839 = vunpack.c.l.b16 %v835
          %v840 = vpack.c.b16 %v839, %v838
          %841 = vrot.lane.b32.xlu0 %v625, 110
          %v842 = vpop.permute.xlu0 %841
          %843 = vrot.lane.b32.xlu0 %v626, 110
          %v844 = vpop.permute.xlu0 %843
          %845 = vrot.lane.b32.xlu0 %v627, 110
          %v846 = vpop.permute.xlu0 %845
          %vm847 = vcmask 900096
          %v848 = vsel %vm847, %v842, %v844
          %v849 = vsel %vm847, %v844, %v846
          %v854 = vsel %vm335, %v840, 0
          %856 = vmatpush.bf16.msra.mxu0 0
          %857 = vmatpush.bf16.msra.mxu0 0
          %858 = vmatpush.bf16.msra.mxu0 0
          %859 = vmatpush.bf16.msra.mxu0 0
          %860 = vmatpush.bf16.msra.mxu0 0
          %861 = vmatpush.bf16.msra.mxu0 0
          %862 = vmatpush.bf16.msra.mxu0 0
          %863 = vmatpush.bf16.msra.mxu0 %v848
          %864 = vmatmul.bf16.gmra.mxu0 %v854
          %v865 = vpop.f32.mrf.mxu0
          %v866 = vadd.f32 0.0, %v865
          %v867 = vpop.f32.mrf.mxu0
          %v868 = vadd.f32 0.0, %v867
          %869 = vdwg.mxu0
          %870 = vmatpush.bf16.msra.mxu0 0
          %871 = vmatpush.bf16.msra.mxu0 0
          %872 = vmatpush.bf16.msra.mxu0 0
          %873 = vmatpush.bf16.msra.mxu0 0
          %874 = vmatpush.bf16.msra.mxu0 0
          %875 = vmatpush.bf16.msra.mxu0 0
          %876 = vmatpush.bf16.msra.mxu0 0
          %877 = vmatpush.bf16.msra.mxu0 %v849
          %878 = vmatmul.bf16.gmra.mxu0 %v854
          %v879 = vpop.f32.mrf.mxu0
          %v880 = vadd.f32 0.0, %v879
          %v881 = vpop.f32.mrf.mxu0
          %v882 = vadd.f32 0.0, %v881
          %883 = vdwg.mxu0
          %884 = vmatpush.bf16.msra.mxu0 0
          %885 = vmatpush.bf16.msra.mxu0 0
          %886 = vmatpush.bf16.msra.mxu0 0
          %887 = vmatpush.bf16.msra.mxu0 0
          %888 = vmatpush.bf16.msra.mxu0 0
          %889 = vmatpush.bf16.msra.mxu0 0
          %890 = vmatpush.bf16.msra.mxu0 0
          %891 = vmatpush.bf16.msra.mxu0 %v846
          %892 = vmatmul.bf16.gmra.mxu0 %v854
          %v893 = vpop.f32.mrf.mxu0
          %v894 = vadd.f32 0.0, %v893
          %v895 = vpop.f32.mrf.mxu0
          %v896 = vadd.f32 0.0, %v895
          %897 = vdwg.mxu0
          %v898 = vadd.f32 %v824, %v866
          %v899 = vadd.f32 %v825, %v880
          %v900 = vadd.f32 %v826, %v894
          %v901 = vadd.f32 %v827, %v868
          %v902 = vadd.f32 %v828, %v882
          %v903 = vadd.f32 %v829, %v896
          %s904 = sadd.s32 %s287, 8
          %s905 = smul.u32 %s904, 2
          %s906 = smul.addr %s905, 4
          %s907 = scalar_lea.vmem %s1, %s906
          %v908 = vld [vmem:[%s907] sm:$0xf]
          %v909 = vld [vmem:[%s907 + $0x4] sm:$0xf]
          %v912 = vunpack.c.l.b16 %v908
          %v913 = vunpack.c.l.b16 %v909
          %v914 = vpack.c.b16 %v913, %v912
          %915 = vrot.lane.b32.xlu0 %v625, 109
          %v916 = vpop.permute.xlu0 %915
          %917 = vrot.lane.b32.xlu0 %v626, 109
          %v918 = vpop.permute.xlu0 %917
          %919 = vrot.lane.b32.xlu0 %v627, 109
          %v920 = vpop.permute.xlu0 %919
          %vm921 = vcmask 891904
          %v922 = vsel %vm921, %v916, %v918
          %v923 = vsel %vm921, %v918, %v920
          %v928 = vsel %vm335, %v914, 0
          %930 = vmatpush.bf16.msra.mxu0 0
          %931 = vmatpush.bf16.msra.mxu0 0
          %932 = vmatpush.bf16.msra.mxu0 0
          %933 = vmatpush.bf16.msra.mxu0 0
          %934 = vmatpush.bf16.msra.mxu0 0
          %935 = vmatpush.bf16.msra.mxu0 0
          %936 = vmatpush.bf16.msra.mxu0 0
          %937 = vmatpush.bf16.msra.mxu0 %v922
          %938 = vmatmul.bf16.gmra.mxu0 %v928
          %v939 = vpop.f32.mrf.mxu0
          %v940 = vadd.f32 0.0, %v939
          %v941 = vpop.f32.mrf.mxu0
          %v942 = vadd.f32 0.0, %v941
          %943 = vdwg.mxu0
          %944 = vmatpush.bf16.msra.mxu0 0
          %945 = vmatpush.bf16.msra.mxu0 0
          %946 = vmatpush.bf16.msra.mxu0 0
          %947 = vmatpush.bf16.msra.mxu0 0
          %948 = vmatpush.bf16.msra.mxu0 0
          %949 = vmatpush.bf16.msra.mxu0 0
          %950 = vmatpush.bf16.msra.mxu0 0
          %951 = vmatpush.bf16.msra.mxu0 %v923
          %952 = vmatmul.bf16.gmra.mxu0 %v928
          %v953 = vpop.f32.mrf.mxu0
          %v954 = vadd.f32 0.0, %v953
          %v955 = vpop.f32.mrf.mxu0
          %v956 = vadd.f32 0.0, %v955
          %957 = vdwg.mxu0
          %958 = vmatpush.bf16.msra.mxu0 0
          %959 = vmatpush.bf16.msra.mxu0 0
          %960 = vmatpush.bf16.msra.mxu0 0
          %961 = vmatpush.bf16.msra.mxu0 0
          %962 = vmatpush.bf16.msra.mxu0 0
          %963 = vmatpush.bf16.msra.mxu0 0
          %964 = vmatpush.bf16.msra.mxu0 0
          %965 = vmatpush.bf16.msra.mxu0 %v920
          %966 = vmatmul.bf16.gmra.mxu0 %v928
          %v967 = vpop.f32.mrf.mxu0
          %v968 = vadd.f32 0.0, %v967
          %v969 = vpop.f32.mrf.mxu0
          %v970 = vadd.f32 0.0, %v969
          %971 = vdwg.mxu0
          %v972 = vadd.f32 %v898, %v940
          %v973 = vadd.f32 %v899, %v954
          %v974 = vadd.f32 %v900, %v968
          %v975 = vadd.f32 %v901, %v942
          %v976 = vadd.f32 %v902, %v956
          %v977 = vadd.f32 %v903, %v970
          %s978 = smul.u32 %s282, 16
          %s979 = scalar_lea.vmem %s2, %s978
          %v980 = vld [vmem:[%s979] sm:$0xff]
          %v981 = vld [vmem:[%s979 + $0x8] sm:$0xff]
          %983 = vset.pattern.permute.xlu0 0
          %984 = vperm.xlu0 %983, %v980
          %v985 = vpop.permute.xlu0 %984
          %988 = vset.pattern.permute.xlu0 0
          %989 = vperm.xlu0 %988, %v981
          %v990 = vpop.permute.xlu0 %989
          %v992 = vadd.f32 %v972, %v985
          %v993 = vadd.f32 %v973, %v985
          %v994 = vadd.f32 %v974, %v985
          %v995 = vadd.f32 %v975, %v990
          %v996 = vadd.f32 %v976, %v990
          %v997 = vadd.f32 %v977, %v990
          %v998 = vmax.f32 %v992, 0.0
          %v999 = vmax.f32 %v993, 0.0
          %v1000 = vmax.f32 %v994, 0.0
          %v1001 = vmax.f32 %v995, 0.0
          %v1002 = vmax.f32 %v996, 0.0
          %v1003 = vmax.f32 %v997, 0.0
          %v1005 = vperm.slane %v253, 0
          %v1006 = vperm.slane %v253, 1
          %v1007 = vperm.slane %v253, 2
          %v1011 = vmul.f32 %v998, %v1005
          %v1012 = vmul.f32 %v999, %v1006
          %v1013 = vmul.f32 %v1000, %v1007
          %v1014 = vmul.f32 %v1001, %v1005
          %v1015 = vmul.f32 %v1002, %v1006
          %v1016 = vmul.f32 %v1003, %v1007
          %v1017 = vpack.c.bf16 %v1012, %v1011
          %v1018 = vpack.c.bf16 %v1013, %v1013
          %v1019 = vpack.c.bf16 %v1015, %v1014
          %v1020 = vpack.c.bf16 %v1016, %v1016
          %1021 = vst [vmem:[#allocation2 + $0x4] sm:$0xff] %v1017
          %1022 = vst.msk [vmem:[#allocation2 + $0xc] sm:$0xf] %vm272, %v1018
          %1023 = vst [vmem:[#allocation2 + $0x18] sm:$0xff] %v1019
          %1024 = vst.msk [vmem:[#allocation2 + $0x20] sm:$0xf] %vm272, %v1020
          %s1025 = sadd.s32 %s282, 1
          %v1026 = vld [vmem:[#allocation2] sm:$0xff]
          %v1027 = vld [vmem:[#allocation2 + $0x8] sm:$0xff]
          %v1028 = vld [vmem:[#allocation2 + $0x14] sm:$0xff]
          %v1029 = vld [vmem:[#allocation2 + $0x1c] sm:$0xff]
          %s1030 = smul.u32 %s1025, 9
          %s1031 = smul.u32 %s1030, 2
          %s1032 = smul.addr %s1031, 4
          %s1033 = scalar_lea.vmem %s1, %s1032
          %v1034 = vld [vmem:[%s1033] sm:$0xf]
          %v1035 = vld [vmem:[%s1033 + $0x4] sm:$0xf]
          %s1036 = sadd.s32 %s1030, 1
          %s1037 = smul.u32 %s1036, 2
          %s1038 = smul.addr %s1037, 4
          %s1039 = scalar_lea.vmem %s1, %s1038
          %v1040 = vld [vmem:[%s1039] sm:$0xf]
          %v1041 = vld [vmem:[%s1039 + $0x4] sm:$0xf]
          %v1044 = vunpack.c.l.b16 %v1040
          %v1045 = vunpack.c.l.b16 %v1041
          %v1046 = vpack.c.b16 %v1045, %v1044
          %v1051 = vunpack.c.l.b16 %v1026
          %v1052 = vunpack.c.h.b16 %v1026
          %v1053 = vunpack.c.l.b16 %v1027
          %v1054 = vunpack.c.h.b16 %v1027
          %v1055 = vunpack.c.l.b16 %v1028
          %v1056 = vunpack.c.h.b16 %v1028
          %v1057 = vunpack.c.l.b16 %v1029
          %v1058 = vunpack.c.h.b16 %v1029
          %v1059 = vpack.c.b16 %v1055, %v1051
          %v1060 = vpack.c.b16 %v1056, %v1052
          %v1061 = vpack.c.b16 %v1057, %v1053
          %v1062 = vpack.c.b16 %v1058, %v1054
          %1063 = vrot.lane.b32.xlu0 %v1059, 18
          %v1064 = vpop.permute.xlu0 %1063
          %1065 = vrot.lane.b32.xlu0 %v1060, 18
          %v1066 = vpop.permute.xlu0 %1065
          %1067 = vrot.lane.b32.xlu0 %v1061, 18
          %v1068 = vpop.permute.xlu0 %1067
          %1069 = vrot.lane.b32.xlu0 %v1062, 18
          %v1070 = vpop.permute.xlu0 %1069
          %v1071 = vsel %vm328, %v1064, %v1066
          %v1072 = vsel %vm328, %v1066, %v1068
          %v1073 = vsel %vm328, %v1068, %v1070
          %v1078 = vsel %vm335, %v1046, 0
          %1080 = vmatpush.bf16.msra.mxu0 0
          %1081 = vmatpush.bf16.msra.mxu0 0
          %1082 = vmatpush.bf16.msra.mxu0 0
          %1083 = vmatpush.bf16.msra.mxu0 0
          %1084 = vmatpush.bf16.msra.mxu0 0
          %1085 = vmatpush.bf16.msra.mxu0 0
          %1086 = vmatpush.bf16.msra.mxu0 0
          %1087 = vmatpush.bf16.msra.mxu0 %v1071
          %1088 = vmatmul.bf16.gmra.mxu0 %v1078
          %v1089 = vpop.f32.mrf.mxu0
          %v1090 = vadd.f32 0.0, %v1089
          %v1091 = vpop.f32.mrf.mxu0
          %v1092 = vadd.f32 0.0, %v1091
          %1093 = vdwg.mxu0
          %1094 = vmatpush.bf16.msra.mxu0 0
          %1095 = vmatpush.bf16.msra.mxu0 0
          %1096 = vmatpush.bf16.msra.mxu0 0
          %1097 = vmatpush.bf16.msra.mxu0 0
          %1098 = vmatpush.bf16.msra.mxu0 0
          %1099 = vmatpush.bf16.msra.mxu0 0
          %1100 = vmatpush.bf16.msra.mxu0 0
          %1101 = vmatpush.bf16.msra.mxu0 %v1072
          %1102 = vmatmul.bf16.gmra.mxu0 %v1078
          %v1103 = vpop.f32.mrf.mxu0
          %v1104 = vadd.f32 0.0, %v1103
          %v1105 = vpop.f32.mrf.mxu0
          %v1106 = vadd.f32 0.0, %v1105
          %1107 = vdwg.mxu0
          %1108 = vmatpush.bf16.msra.mxu0 0
          %1109 = vmatpush.bf16.msra.mxu0 0
          %1110 = vmatpush.bf16.msra.mxu0 0
          %1111 = vmatpush.bf16.msra.mxu0 0
          %1112 = vmatpush.bf16.msra.mxu0 0
          %1113 = vmatpush.bf16.msra.mxu0 0
          %1114 = vmatpush.bf16.msra.mxu0 0
          %1115 = vmatpush.bf16.msra.mxu0 %v1073
          %1116 = vmatmul.bf16.gmra.mxu0 %v1078
          %v1117 = vpop.f32.mrf.mxu0
          %v1118 = vadd.f32 0.0, %v1117
          %v1119 = vpop.f32.mrf.mxu0
          %v1120 = vadd.f32 0.0, %v1119
          %1121 = vdwg.mxu0
          %v1124 = vunpack.c.l.b16 %v1034
          %v1125 = vunpack.c.l.b16 %v1035
          %v1126 = vpack.c.b16 %v1125, %v1124
          %1127 = vrot.lane.b32.xlu0 %v1059, 19
          %v1128 = vpop.permute.xlu0 %1127
          %1129 = vrot.lane.b32.xlu0 %v1060, 19
          %v1130 = vpop.permute.xlu0 %1129
          %1131 = vrot.lane.b32.xlu0 %v1061, 19
          %v1132 = vpop.permute.xlu0 %1131
          %1133 = vrot.lane.b32.xlu0 %v1062, 19
          %v1134 = vpop.permute.xlu0 %1133
          %v1135 = vsel %vm394, %v1128, %v1130
          %v1136 = vsel %vm394, %v1130, %v1132
          %v1137 = vsel %vm394, %v1132, %v1134
          %v1142 = vsel %vm335, %v1126, 0
          %1144 = vmatpush.bf16.msra.mxu0 0
          %1145 = vmatpush.bf16.msra.mxu0 0
          %1146 = vmatpush.bf16.msra.mxu0 0
          %1147 = vmatpush.bf16.msra.mxu0 0
          %1148 = vmatpush.bf16.msra.mxu0 0
          %1149 = vmatpush.bf16.msra.mxu0 0
          %1150 = vmatpush.bf16.msra.mxu0 0
          %1151 = vmatpush.bf16.msra.mxu0 %v1135
          %1152 = vmatmul.bf16.gmra.mxu0 %v1142
          %v1153 = vpop.f32.mrf.mxu0
          %v1154 = vadd.f32 %v1090, %v1153
          %v1155 = vpop.f32.mrf.mxu0
          %v1156 = vadd.f32 %v1092, %v1155
          %1157 = vdwg.mxu0
          %1158 = vmatpush.bf16.msra.mxu0 0
          %1159 = vmatpush.bf16.msra.mxu0 0
          %1160 = vmatpush.bf16.msra.mxu0 0
          %1161 = vmatpush.bf16.msra.mxu0 0
          %1162 = vmatpush.bf16.msra.mxu0 0
          %1163 = vmatpush.bf16.msra.mxu0 0
          %1164 = vmatpush.bf16.msra.mxu0 0
          %1165 = vmatpush.bf16.msra.mxu0 %v1136
          %1166 = vmatmul.bf16.gmra.mxu0 %v1142
          %v1167 = vpop.f32.mrf.mxu0
          %v1168 = vadd.f32 %v1104, %v1167
          %v1169 = vpop.f32.mrf.mxu0
          %v1170 = vadd.f32 %v1106, %v1169
          %1171 = vdwg.mxu0
          %1172 = vmatpush.bf16.msra.mxu0 0
          %1173 = vmatpush.bf16.msra.mxu0 0
          %1174 = vmatpush.bf16.msra.mxu0 0
          %1175 = vmatpush.bf16.msra.mxu0 0
          %1176 = vmatpush.bf16.msra.mxu0 0
          %1177 = vmatpush.bf16.msra.mxu0 0
          %1178 = vmatpush.bf16.msra.mxu0 0
          %1179 = vmatpush.bf16.msra.mxu0 %v1137
          %1180 = vmatmul.bf16.gmra.mxu0 %v1142
          %v1181 = vpop.f32.mrf.mxu0
          %v1182 = vadd.f32 %v1118, %v1181
          %v1183 = vpop.f32.mrf.mxu0
          %v1184 = vadd.f32 %v1120, %v1183
          %1185 = vdwg.mxu0
          %s1186 = sadd.s32 %s1030, 2
          %s1187 = smul.u32 %s1186, 2
          %s1188 = smul.addr %s1187, 4
          %s1189 = scalar_lea.vmem %s1, %s1188
          %v1190 = vld [vmem:[%s1189] sm:$0xf]
          %v1191 = vld [vmem:[%s1189 + $0x4] sm:$0xf]
          %v1194 = vunpack.c.l.b16 %v1190
          %v1195 = vunpack.c.l.b16 %v1191
          %v1196 = vpack.c.b16 %v1195, %v1194
          %1197 = vrot.lane.b32.xlu0 %v1059, 17
          %v1198 = vpop.permute.xlu0 %1197
          %1199 = vrot.lane.b32.xlu0 %v1060, 17
          %v1200 = vpop.permute.xlu0 %1199
          %1201 = vrot.lane.b32.xlu0 %v1061, 17
          %v1202 = vpop.permute.xlu0 %1201
          %1203 = vrot.lane.b32.xlu0 %v1062, 17
          %v1204 = vpop.permute.xlu0 %1203
          %v1205 = vsel %vm465, %v1198, %v1200
          %v1206 = vsel %vm465, %v1200, %v1202
          %v1207 = vsel %vm465, %v1202, %v1204
          %v1212 = vsel %vm335, %v1196, 0
          %1214 = vmatpush.bf16.msra.mxu0 0
          %1215 = vmatpush.bf16.msra.mxu0 0
          %1216 = vmatpush.bf16.msra.mxu0 0
          %1217 = vmatpush.bf16.msra.mxu0 0
          %1218 = vmatpush.bf16.msra.mxu0 0
          %1219 = vmatpush.bf16.msra.mxu0 0
          %1220 = vmatpush.bf16.msra.mxu0 0
          %1221 = vmatpush.bf16.msra.mxu0 %v1205
          %1222 = vmatmul.bf16.gmra.mxu0 %v1212
          %v1223 = vpop.f32.mrf.mxu0
          %v1224 = vadd.f32 0.0, %v1223
          %v1225 = vpop.f32.mrf.mxu0
          %v1226 = vadd.f32 0.0, %v1225
          %1227 = vdwg.mxu0
          %1228 = vmatpush.bf16.msra.mxu0 0
          %1229 = vmatpush.bf16.msra.mxu0 0
          %1230 = vmatpush.bf16.msra.mxu0 0
          %1231 = vmatpush.bf16.msra.mxu0 0
          %1232 = vmatpush.bf16.msra.mxu0 0
          %1233 = vmatpush.bf16.msra.mxu0 0
          %1234 = vmatpush.bf16.msra.mxu0 0
          %1235 = vmatpush.bf16.msra.mxu0 %v1206
          %1236 = vmatmul.bf16.gmra.mxu0 %v1212
          %v1237 = vpop.f32.mrf.mxu0
          %v1238 = vadd.f32 0.0, %v1237
          %v1239 = vpop.f32.mrf.mxu0
          %v1240 = vadd.f32 0.0, %v1239
          %1241 = vdwg.mxu0
          %1242 = vmatpush.bf16.msra.mxu0 0
          %1243 = vmatpush.bf16.msra.mxu0 0
          %1244 = vmatpush.bf16.msra.mxu0 0
          %1245 = vmatpush.bf16.msra.mxu0 0
          %1246 = vmatpush.bf16.msra.mxu0 0
          %1247 = vmatpush.bf16.msra.mxu0 0
          %1248 = vmatpush.bf16.msra.mxu0 0
          %1249 = vmatpush.bf16.msra.mxu0 %v1207
          %1250 = vmatmul.bf16.gmra.mxu0 %v1212
          %v1251 = vpop.f32.mrf.mxu0
          %v1252 = vadd.f32 0.0, %v1251
          %v1253 = vpop.f32.mrf.mxu0
          %v1254 = vadd.f32 0.0, %v1253
          %1255 = vdwg.mxu0
          %v1256 = vadd.f32 %v1154, %v1224
          %v1257 = vadd.f32 %v1168, %v1238
          %v1258 = vadd.f32 %v1182, %v1252
          %v1259 = vadd.f32 %v1156, %v1226
          %v1260 = vadd.f32 %v1170, %v1240
          %v1261 = vadd.f32 %v1184, %v1254
          %s1262 = sadd.s32 %s1030, 3
          %s1263 = smul.u32 %s1262, 2
          %s1264 = smul.addr %s1263, 4
          %s1265 = scalar_lea.vmem %s1, %s1264
          %v1266 = vld [vmem:[%s1265] sm:$0xf]
          %v1267 = vld [vmem:[%s1265 + $0x4] sm:$0xf]
          %v1270 = vunpack.c.l.b16 %v1266
          %v1271 = vunpack.c.l.b16 %v1267
          %v1272 = vpack.c.b16 %v1271, %v1270
          %1273 = vrot.lane.b32.xlu0 %v1059, 1
          %v1274 = vpop.permute.xlu0 %1273
          %1275 = vrot.lane.b32.xlu0 %v1060, 1
          %v1276 = vpop.permute.xlu0 %1275
          %1277 = vrot.lane.b32.xlu0 %v1061, 1
          %v1278 = vpop.permute.xlu0 %1277
          %1279 = vrot.lane.b32.xlu0 %v1062, 1
          %v1280 = vpop.permute.xlu0 %1279
          %v1281 = vsel %vm542, %v1274, %v1276
          %v1282 = vsel %vm542, %v1276, %v1278
          %v1283 = vsel %vm542, %v1278, %v1280
          %v1288 = vsel %vm335, %v1272, 0
          %1290 = vmatpush.bf16.msra.mxu0 0
          %1291 = vmatpush.bf16.msra.mxu0 0
          %1292 = vmatpush.bf16.msra.mxu0 0
          %1293 = vmatpush.bf16.msra.mxu0 0
          %1294 = vmatpush.bf16.msra.mxu0 0
          %1295 = vmatpush.bf16.msra.mxu0 0
          %1296 = vmatpush.bf16.msra.mxu0 0
          %1297 = vmatpush.bf16.msra.mxu0 %v1281
          %1298 = vmatmul.bf16.gmra.mxu0 %v1288
          %v1299 = vpop.f32.mrf.mxu0
          %v1300 = vadd.f32 0.0, %v1299
          %v1301 = vpop.f32.mrf.mxu0
          %v1302 = vadd.f32 0.0, %v1301
          %1303 = vdwg.mxu0
          %1304 = vmatpush.bf16.msra.mxu0 0
          %1305 = vmatpush.bf16.msra.mxu0 0
          %1306 = vmatpush.bf16.msra.mxu0 0
          %1307 = vmatpush.bf16.msra.mxu0 0
          %1308 = vmatpush.bf16.msra.mxu0 0
          %1309 = vmatpush.bf16.msra.mxu0 0
          %1310 = vmatpush.bf16.msra.mxu0 0
          %1311 = vmatpush.bf16.msra.mxu0 %v1282
          %1312 = vmatmul.bf16.gmra.mxu0 %v1288
          %v1313 = vpop.f32.mrf.mxu0
          %v1314 = vadd.f32 0.0, %v1313
          %v1315 = vpop.f32.mrf.mxu0
          %v1316 = vadd.f32 0.0, %v1315
          %1317 = vdwg.mxu0
          %1318 = vmatpush.bf16.msra.mxu0 0
          %1319 = vmatpush.bf16.msra.mxu0 0
          %1320 = vmatpush.bf16.msra.mxu0 0
          %1321 = vmatpush.bf16.msra.mxu0 0
          %1322 = vmatpush.bf16.msra.mxu0 0
          %1323 = vmatpush.bf16.msra.mxu0 0
          %1324 = vmatpush.bf16.msra.mxu0 0
          %1325 = vmatpush.bf16.msra.mxu0 %v1283
          %1326 = vmatmul.bf16.gmra.mxu0 %v1288
          %v1327 = vpop.f32.mrf.mxu0
          %v1328 = vadd.f32 0.0, %v1327
          %v1329 = vpop.f32.mrf.mxu0
          %v1330 = vadd.f32 0.0, %v1329
          %1331 = vdwg.mxu0
          %v1332 = vadd.f32 %v1256, %v1300
          %v1333 = vadd.f32 %v1257, %v1314
          %v1334 = vadd.f32 %v1258, %v1328
          %v1335 = vadd.f32 %v1259, %v1302
          %v1336 = vadd.f32 %v1260, %v1316
          %v1337 = vadd.f32 %v1261, %v1330
          %v1338 = vld [vmem:[#allocation2 + $0x4] sm:$0xff]
          %v1339 = vld [vmem:[#allocation2 + $0xc] sm:$0xf]
          %v1340 = vld [vmem:[#allocation2 + $0x18] sm:$0xff]
          %v1341 = vld [vmem:[#allocation2 + $0x20] sm:$0xf]
          %s1342 = sadd.s32 %s1030, 4
          %s1343 = smul.u32 %s1342, 2
          %s1344 = smul.addr %s1343, 4
          %s1345 = scalar_lea.vmem %s1, %s1344
          %v1346 = vld [vmem:[%s1345] sm:$0xf]
          %v1347 = vld [vmem:[%s1345 + $0x4] sm:$0xf]
          %v1350 = vunpack.c.l.b16 %v1346
          %v1351 = vunpack.c.l.b16 %v1347
          %v1352 = vpack.c.b16 %v1351, %v1350
          %v1357 = vunpack.c.l.b16 %v1338
          %v1358 = vunpack.c.h.b16 %v1338
          %v1359 = vunpack.c.l.b16 %v1339
          %v1360 = vunpack.c.l.b16 %v1340
          %v1361 = vunpack.c.h.b16 %v1340
          %v1362 = vunpack.c.l.b16 %v1341
          %v1363 = vpack.c.b16 %v1360, %v1357
          %v1364 = vpack.c.b16 %v1361, %v1358
          %v1365 = vpack.c.b16 %v1362, %v1359
          %v1370 = vsel %vm335, %v1352, 0
          %1372 = vmatpush.bf16.msra.mxu0 0
          %1373 = vmatpush.bf16.msra.mxu0 0
          %1374 = vmatpush.bf16.msra.mxu0 0
          %1375 = vmatpush.bf16.msra.mxu0 0
          %1376 = vmatpush.bf16.msra.mxu0 0
          %1377 = vmatpush.bf16.msra.mxu0 0
          %1378 = vmatpush.bf16.msra.mxu0 0
          %1379 = vmatpush.bf16.msra.mxu0 %v1363
          %1380 = vmatmul.bf16.gmra.mxu0 %v1370
          %v1381 = vpop.f32.mrf.mxu0
          %v1382 = vadd.f32 0.0, %v1381
          %v1383 = vpop.f32.mrf.mxu0
          %v1384 = vadd.f32 0.0, %v1383
          %1385 = vdwg.mxu0
          %1386 = vmatpush.bf16.msra.mxu0 0
          %1387 = vmatpush.bf16.msra.mxu0 0
          %1388 = vmatpush.bf16.msra.mxu0 0
          %1389 = vmatpush.bf16.msra.mxu0 0
          %1390 = vmatpush.bf16.msra.mxu0 0
          %1391 = vmatpush.bf16.msra.mxu0 0
          %1392 = vmatpush.bf16.msra.mxu0 0
          %1393 = vmatpush.bf16.msra.mxu0 %v1364
          %1394 = vmatmul.bf16.gmra.mxu0 %v1370
          %v1395 = vpop.f32.mrf.mxu0
          %v1396 = vadd.f32 0.0, %v1395
          %v1397 = vpop.f32.mrf.mxu0
          %v1398 = vadd.f32 0.0, %v1397
          %1399 = vdwg.mxu0
          %1400 = vmatpush.bf16.msra.mxu0 0
          %1401 = vmatpush.bf16.msra.mxu0 0
          %1402 = vmatpush.bf16.msra.mxu0 0
          %1403 = vmatpush.bf16.msra.mxu0 0
          %1404 = vmatpush.bf16.msra.mxu0 0
          %1405 = vmatpush.bf16.msra.mxu0 0
          %1406 = vmatpush.bf16.msra.mxu0 0
          %1407 = vmatpush.bf16.msra.mxu0 %v1365
          %1408 = vmatmul.bf16.gmra.mxu0 %v1370
          %v1409 = vpop.f32.mrf.mxu0
          %v1410 = vadd.f32 0.0, %v1409
          %v1411 = vpop.f32.mrf.mxu0
          %v1412 = vadd.f32 0.0, %v1411
          %1413 = vdwg.mxu0
          %v1414 = vadd.f32 %v1332, %v1382
          %v1415 = vadd.f32 %v1333, %v1396
          %v1416 = vadd.f32 %v1334, %v1410
          %v1417 = vadd.f32 %v1335, %v1384
          %v1418 = vadd.f32 %v1336, %v1398
          %v1419 = vadd.f32 %v1337, %v1412
          %s1420 = sadd.s32 %s1030, 5
          %s1421 = smul.u32 %s1420, 2
          %s1422 = smul.addr %s1421, 4
          %s1423 = scalar_lea.vmem %s1, %s1422
          %v1424 = vld [vmem:[%s1423] sm:$0xf]
          %v1425 = vld [vmem:[%s1423 + $0x4] sm:$0xf]
          %v1428 = vunpack.c.l.b16 %v1424
          %v1429 = vunpack.c.l.b16 %v1425
          %v1430 = vpack.c.b16 %v1429, %v1428
          %1431 = vrot.lane.b32.xlu0 %v1363, 127
          %v1432 = vpop.permute.xlu0 %1431
          %1433 = vrot.lane.b32.xlu0 %v1364, 127
          %v1434 = vpop.permute.xlu0 %1433
          %1435 = vrot.lane.b32.xlu0 %v1365, 127
          %v1436 = vpop.permute.xlu0 %1435
          %v1437 = vsel %vm699, %v1432, %v1434
          %v1438 = vsel %vm699, %v1434, %v1436
          %v1443 = vsel %vm335, %v1430, 0
          %1445 = vmatpush.bf16.msra.mxu0 0
          %1446 = vmatpush.bf16.msra.mxu0 0
          %1447 = vmatpush.bf16.msra.mxu0 0
          %1448 = vmatpush.bf16.msra.mxu0 0
          %1449 = vmatpush.bf16.msra.mxu0 0
          %1450 = vmatpush.bf16.msra.mxu0 0
          %1451 = vmatpush.bf16.msra.mxu0 0
          %1452 = vmatpush.bf16.msra.mxu0 %v1437
          %1453 = vmatmul.bf16.gmra.mxu0 %v1443
          %v1454 = vpop.f32.mrf.mxu0
          %v1455 = vadd.f32 0.0, %v1454
          %v1456 = vpop.f32.mrf.mxu0
          %v1457 = vadd.f32 0.0, %v1456
          %1458 = vdwg.mxu0
          %1459 = vmatpush.bf16.msra.mxu0 0
          %1460 = vmatpush.bf16.msra.mxu0 0
          %1461 = vmatpush.bf16.msra.mxu0 0
          %1462 = vmatpush.bf16.msra.mxu0 0
          %1463 = vmatpush.bf16.msra.mxu0 0
          %1464 = vmatpush.bf16.msra.mxu0 0
          %1465 = vmatpush.bf16.msra.mxu0 0
          %1466 = vmatpush.bf16.msra.mxu0 %v1438
          %1467 = vmatmul.bf16.gmra.mxu0 %v1443
          %v1468 = vpop.f32.mrf.mxu0
          %v1469 = vadd.f32 0.0, %v1468
          %v1470 = vpop.f32.mrf.mxu0
          %v1471 = vadd.f32 0.0, %v1470
          %1472 = vdwg.mxu0
          %1473 = vmatpush.bf16.msra.mxu0 0
          %1474 = vmatpush.bf16.msra.mxu0 0
          %1475 = vmatpush.bf16.msra.mxu0 0
          %1476 = vmatpush.bf16.msra.mxu0 0
          %1477 = vmatpush.bf16.msra.mxu0 0
          %1478 = vmatpush.bf16.msra.mxu0 0
          %1479 = vmatpush.bf16.msra.mxu0 0
          %1480 = vmatpush.bf16.msra.mxu0 %v1436
          %1481 = vmatmul.bf16.gmra.mxu0 %v1443
          %v1482 = vpop.f32.mrf.mxu0
          %v1483 = vadd.f32 0.0, %v1482
          %v1484 = vpop.f32.mrf.mxu0
          %v1485 = vadd.f32 0.0, %v1484
          %1486 = vdwg.mxu0
          %v1487 = vadd.f32 %v1414, %v1455
          %v1488 = vadd.f32 %v1415, %v1469
          %v1489 = vadd.f32 %v1416, %v1483
          %v1490 = vadd.f32 %v1417, %v1457
          %v1491 = vadd.f32 %v1418, %v1471
          %v1492 = vadd.f32 %v1419, %v1485
          %s1493 = sadd.s32 %s1030, 6
          %s1494 = smul.u32 %s1493, 2
          %s1495 = smul.addr %s1494, 4
          %s1496 = scalar_lea.vmem %s1, %s1495
          %v1497 = vld [vmem:[%s1496] sm:$0xf]
          %v1498 = vld [vmem:[%s1496 + $0x4] sm:$0xf]
          %v1501 = vunpack.c.l.b16 %v1497
          %v1502 = vunpack.c.l.b16 %v1498
          %v1503 = vpack.c.b16 %v1502, %v1501
          %1504 = vrot.lane.b32.xlu0 %v1363, 111
          %v1505 = vpop.permute.xlu0 %1504
          %1506 = vrot.lane.b32.xlu0 %v1364, 111
          %v1507 = vpop.permute.xlu0 %1506
          %1508 = vrot.lane.b32.xlu0 %v1365, 111
          %v1509 = vpop.permute.xlu0 %1508
          %v1510 = vsel %vm773, %v1505, %v1507
          %v1511 = vsel %vm773, %v1507, %v1509
          %v1516 = vsel %vm335, %v1503, 0
          %1518 = vmatpush.bf16.msra.mxu0 0
          %1519 = vmatpush.bf16.msra.mxu0 0
          %1520 = vmatpush.bf16.msra.mxu0 0
          %1521 = vmatpush.bf16.msra.mxu0 0
          %1522 = vmatpush.bf16.msra.mxu0 0
          %1523 = vmatpush.bf16.msra.mxu0 0
          %1524 = vmatpush.bf16.msra.mxu0 0
          %1525 = vmatpush.bf16.msra.mxu0 %v1510
          %1526 = vmatmul.bf16.gmra.mxu0 %v1516
          %v1527 = vpop.f32.mrf.mxu0
          %v1528 = vadd.f32 0.0, %v1527
          %v1529 = vpop.f32.mrf.mxu0
          %v1530 = vadd.f32 0.0, %v1529
          %1531 = vdwg.mxu0
          %1532 = vmatpush.bf16.msra.mxu0 0
          %1533 = vmatpush.bf16.msra.mxu0 0
          %1534 = vmatpush.bf16.msra.mxu0 0
          %1535 = vmatpush.bf16.msra.mxu0 0
          %1536 = vmatpush.bf16.msra.mxu0 0
          %1537 = vmatpush.bf16.msra.mxu0 0
          %1538 = vmatpush.bf16.msra.mxu0 0
          %1539 = vmatpush.bf16.msra.mxu0 %v1511
          %1540 = vmatmul.bf16.gmra.mxu0 %v1516
          %v1541 = vpop.f32.mrf.mxu0
          %v1542 = vadd.f32 0.0, %v1541
          %v1543 = vpop.f32.mrf.mxu0
          %v1544 = vadd.f32 0.0, %v1543
          %1545 = vdwg.mxu0
          %1546 = vmatpush.bf16.msra.mxu0 0
          %1547 = vmatpush.bf16.msra.mxu0 0
          %1548 = vmatpush.bf16.msra.mxu0 0
          %1549 = vmatpush.bf16.msra.mxu0 0
          %1550 = vmatpush.bf16.msra.mxu0 0
          %1551 = vmatpush.bf16.msra.mxu0 0
          %1552 = vmatpush.bf16.msra.mxu0 0
          %1553 = vmatpush.bf16.msra.mxu0 %v1509
          %1554 = vmatmul.bf16.gmra.mxu0 %v1516
          %v1555 = vpop.f32.mrf.mxu0
          %v1556 = vadd.f32 0.0, %v1555
          %v1557 = vpop.f32.mrf.mxu0
          %v1558 = vadd.f32 0.0, %v1557
          %1559 = vdwg.mxu0
          %v1560 = vadd.f32 %v1487, %v1528
          %v1561 = vadd.f32 %v1488, %v1542
          %v1562 = vadd.f32 %v1489, %v1556
          %v1563 = vadd.f32 %v1490, %v1530
          %v1564 = vadd.f32 %v1491, %v1544
          %v1565 = vadd.f32 %v1492, %v1558
          %s1566 = sadd.s32 %s1030, 7
          %s1567 = smul.u32 %s1566, 2
          %s1568 = smul.addr %s1567, 4
          %s1569 = scalar_lea.vmem %s1, %s1568
          %v1570 = vld [vmem:[%s1569] sm:$0xf]
          %v1571 = vld [vmem:[%s1569 + $0x4] sm:$0xf]
          %v1574 = vunpack.c.l.b16 %v1570
          %v1575 = vunpack.c.l.b16 %v1571
          %v1576 = vpack.c.b16 %v1575, %v1574
          %1577 = vrot.lane.b32.xlu0 %v1363, 110
          %v1578 = vpop.permute.xlu0 %1577
          %1579 = vrot.lane.b32.xlu0 %v1364, 110
          %v1580 = vpop.permute.xlu0 %1579
          %1581 = vrot.lane.b32.xlu0 %v1365, 110
          %v1582 = vpop.permute.xlu0 %1581
          %v1583 = vsel %vm847, %v1578, %v1580
          %v1584 = vsel %vm847, %v1580, %v1582
          %v1589 = vsel %vm335, %v1576, 0
          %1591 = vmatpush.bf16.msra.mxu0 0
          %1592 = vmatpush.bf16.msra.mxu0 0
          %1593 = vmatpush.bf16.msra.mxu0 0
          %1594 = vmatpush.bf16.msra.mxu0 0
          %1595 = vmatpush.bf16.msra.mxu0 0
          %1596 = vmatpush.bf16.msra.mxu0 0
          %1597 = vmatpush.bf16.msra.mxu0 0
          %1598 = vmatpush.bf16.msra.mxu0 %v1583
          %1599 = vmatmul.bf16.gmra.mxu0 %v1589
          %v1600 = vpop.f32.mrf.mxu0
          %v1601 = vadd.f32 0.0, %v1600
          %v1602 = vpop.f32.mrf.mxu0
          %v1603 = vadd.f32 0.0, %v1602
          %1604 = vdwg.mxu0
          %1605 = vmatpush.bf16.msra.mxu0 0
          %1606 = vmatpush.bf16.msra.mxu0 0
          %1607 = vmatpush.bf16.msra.mxu0 0
          %1608 = vmatpush.bf16.msra.mxu0 0
          %1609 = vmatpush.bf16.msra.mxu0 0
          %1610 = vmatpush.bf16.msra.mxu0 0
          %1611 = vmatpush.bf16.msra.mxu0 0
          %1612 = vmatpush.bf16.msra.mxu0 %v1584
          %1613 = vmatmul.bf16.gmra.mxu0 %v1589
          %v1614 = vpop.f32.mrf.mxu0
          %v1615 = vadd.f32 0.0, %v1614
          %v1616 = vpop.f32.mrf.mxu0
          %v1617 = vadd.f32 0.0, %v1616
          %1618 = vdwg.mxu0
          %1619 = vmatpush.bf16.msra.mxu0 0
          %1620 = vmatpush.bf16.msra.mxu0 0
          %1621 = vmatpush.bf16.msra.mxu0 0
          %1622 = vmatpush.bf16.msra.mxu0 0
          %1623 = vmatpush.bf16.msra.mxu0 0
          %1624 = vmatpush.bf16.msra.mxu0 0
          %1625 = vmatpush.bf16.msra.mxu0 0
          %1626 = vmatpush.bf16.msra.mxu0 %v1582
          %1627 = vmatmul.bf16.gmra.mxu0 %v1589
          %v1628 = vpop.f32.mrf.mxu0
          %v1629 = vadd.f32 0.0, %v1628
          %v1630 = vpop.f32.mrf.mxu0
          %v1631 = vadd.f32 0.0, %v1630
          %1632 = vdwg.mxu0
          %v1633 = vadd.f32 %v1560, %v1601
          %v1634 = vadd.f32 %v1561, %v1615
          %v1635 = vadd.f32 %v1562, %v1629
          %v1636 = vadd.f32 %v1563, %v1603
          %v1637 = vadd.f32 %v1564, %v1617
          %v1638 = vadd.f32 %v1565, %v1631
          %s1639 = sadd.s32 %s1030, 8
          %s1640 = smul.u32 %s1639, 2
          %s1641 = smul.addr %s1640, 4
          %s1642 = scalar_lea.vmem %s1, %s1641
          %v1643 = vld [vmem:[%s1642] sm:$0xf]
          %v1644 = vld [vmem:[%s1642 + $0x4] sm:$0xf]
          %v1647 = vunpack.c.l.b16 %v1643
          %v1648 = vunpack.c.l.b16 %v1644
          %v1649 = vpack.c.b16 %v1648, %v1647
          %1650 = vrot.lane.b32.xlu0 %v1363, 109
          %v1651 = vpop.permute.xlu0 %1650
          %1652 = vrot.lane.b32.xlu0 %v1364, 109
          %v1653 = vpop.permute.xlu0 %1652
          %1654 = vrot.lane.b32.xlu0 %v1365, 109
          %v1655 = vpop.permute.xlu0 %1654
          %v1656 = vsel %vm921, %v1651, %v1653
          %v1657 = vsel %vm921, %v1653, %v1655
          %v1662 = vsel %vm335, %v1649, 0
          %1664 = vmatpush.bf16.msra.mxu0 0
          %1665 = vmatpush.bf16.msra.mxu0 0
          %1666 = vmatpush.bf16.msra.mxu0 0
          %1667 = vmatpush.bf16.msra.mxu0 0
          %1668 = vmatpush.bf16.msra.mxu0 0
          %1669 = vmatpush.bf16.msra.mxu0 0
          %1670 = vmatpush.bf16.msra.mxu0 0
          %1671 = vmatpush.bf16.msra.mxu0 %v1656
          %1672 = vmatmul.bf16.gmra.mxu0 %v1662
          %v1673 = vpop.f32.mrf.mxu0
          %v1674 = vadd.f32 0.0, %v1673
          %v1675 = vpop.f32.mrf.mxu0
          %v1676 = vadd.f32 0.0, %v1675
          %1677 = vdwg.mxu0
          %1678 = vmatpush.bf16.msra.mxu0 0
          %1679 = vmatpush.bf16.msra.mxu0 0
          %1680 = vmatpush.bf16.msra.mxu0 0
          %1681 = vmatpush.bf16.msra.mxu0 0
          %1682 = vmatpush.bf16.msra.mxu0 0
          %1683 = vmatpush.bf16.msra.mxu0 0
          %1684 = vmatpush.bf16.msra.mxu0 0
          %1685 = vmatpush.bf16.msra.mxu0 %v1657
          %1686 = vmatmul.bf16.gmra.mxu0 %v1662
          %v1687 = vpop.f32.mrf.mxu0
          %v1688 = vadd.f32 0.0, %v1687
          %v1689 = vpop.f32.mrf.mxu0
          %v1690 = vadd.f32 0.0, %v1689
          %1691 = vdwg.mxu0
          %1692 = vmatpush.bf16.msra.mxu0 0
          %1693 = vmatpush.bf16.msra.mxu0 0
          %1694 = vmatpush.bf16.msra.mxu0 0
          %1695 = vmatpush.bf16.msra.mxu0 0
          %1696 = vmatpush.bf16.msra.mxu0 0
          %1697 = vmatpush.bf16.msra.mxu0 0
          %1698 = vmatpush.bf16.msra.mxu0 0
          %1699 = vmatpush.bf16.msra.mxu0 %v1655
          %1700 = vmatmul.bf16.gmra.mxu0 %v1662
          %v1701 = vpop.f32.mrf.mxu0
          %v1702 = vadd.f32 0.0, %v1701
          %v1703 = vpop.f32.mrf.mxu0
          %v1704 = vadd.f32 0.0, %v1703
          %1705 = vdwg.mxu0
          %v1706 = vadd.f32 %v1633, %v1674
          %v1707 = vadd.f32 %v1634, %v1688
          %v1708 = vadd.f32 %v1635, %v1702
          %v1709 = vadd.f32 %v1636, %v1676
          %v1710 = vadd.f32 %v1637, %v1690
          %v1711 = vadd.f32 %v1638, %v1704
          %s1712 = smul.u32 %s1025, 16
          %s1713 = scalar_lea.vmem %s2, %s1712
          %v1714 = vld [vmem:[%s1713] sm:$0xff]
          %v1715 = vld [vmem:[%s1713 + $0x8] sm:$0xff]
          %1717 = vset.pattern.permute.xlu0 0
          %1718 = vperm.xlu0 %1717, %v1714
          %v1719 = vpop.permute.xlu0 %1718
          %1722 = vset.pattern.permute.xlu0 0
          %1723 = vperm.xlu0 %1722, %v1715
          %v1724 = vpop.permute.xlu0 %1723
          %v1726 = vadd.f32 %v1706, %v1719
          %v1727 = vadd.f32 %v1707, %v1719
          %v1728 = vadd.f32 %v1708, %v1719
          %v1729 = vadd.f32 %v1709, %v1724
          %v1730 = vadd.f32 %v1710, %v1724
          %v1731 = vadd.f32 %v1711, %v1724
          %v1732 = vld [vmem:[#allocation3] sm:$0xff]
          %v1733 = vld [vmem:[#allocation3 + $0x8] sm:$0xff]
          %v1734 = vld [vmem:[#allocation3 + $0x10] sm:$0xff]
          %v1735 = vld [vmem:[#allocation3 + $0x18] sm:$0xff]
          %v1736 = vld [vmem:[#allocation3 + $0x20] sm:$0xff]
          %v1737 = vld [vmem:[#allocation3 + $0x28] sm:$0xff]
          %v1738 = vmul.f32 %v1726, %v1005
          %v1739 = vmul.f32 %v1727, %v1006
          %v1740 = vmul.f32 %v1728, %v1007
          %v1741 = vmul.f32 %v1729, %v1005
          %v1742 = vmul.f32 %v1730, %v1006
          %v1743 = vmul.f32 %v1731, %v1007
          %v1744 = vadd.f32 %v1732, %v1738
          %v1745 = vadd.f32 %v1733, %v1739
          %v1746 = vadd.f32 %v1734, %v1740
          %v1747 = vadd.f32 %v1735, %v1741
          %v1748 = vadd.f32 %v1736, %v1742
          %v1749 = vadd.f32 %v1737, %v1743
          %1750 = vst [vmem:[#allocation3] sm:$0xff] %v1744
          %1751 = vst [vmem:[#allocation3 + $0x8] sm:$0xff] %v1745
          %1752 = vst.msk [vmem:[#allocation3 + $0x10] sm:$0xff] %vm262, %v1746
          %1753 = vst [vmem:[#allocation3 + $0x18] sm:$0xff] %v1747
          %1754 = vst [vmem:[#allocation3 + $0x20] sm:$0xff] %v1748
          %1755 = vst.msk [vmem:[#allocation3 + $0x28] sm:$0xff] %vm262, %v1749
          %v1756 = vpack.c.bf16 %v1745, %v1744
          %v1757 = vpack.c.bf16 %v1746, %v1746
          %v1758 = vpack.c.bf16 %v1748, %v1747
          %v1759 = vpack.c.bf16 %v1749, %v1749
          %1760 = vst [vmem:[#allocation2 + $0x4] sm:$0xff] %v1756
          %1761 = vst.msk [vmem:[#allocation2 + $0xc] sm:$0xf] %vm272, %v1757
          %1762 = vst [vmem:[#allocation2 + $0x18] sm:$0xff] %v1758
          %1763 = vst.msk [vmem:[#allocation2 + $0x20] sm:$0xf] %vm272, %v1759
        $region41: #{tpu_custom_call.1} parent=35 // loop_footer
          %s281 = sadd.s32 1, %s277
        $region42: #{tpu_custom_call.1} parent=35 // loop_footer_branch
          %276 = sbr.rel target = $region38
        $region43: #{tpu_custom_call.1} parent=35 // loop_exit
          _
        %v1764 = vld [vmem:[#allocation2] sm:$0xff]
        %v1765 = vld [vmem:[#allocation2 + $0x8] sm:$0xff]
        %v1766 = vld [vmem:[#allocation2 + $0x14] sm:$0xff]
        %v1767 = vld [vmem:[#allocation2 + $0x1c] sm:$0xff]
        %s1768 = scalar_lea.vmem %s1, 288
        %v1769 = vld [vmem:[%s1768] sm:$0xf]
        %v1770 = vld [vmem:[%s1768 + $0x4] sm:$0xf]
        %s1771 = scalar_lea.vmem %s1, 296
        %v1772 = vld [vmem:[%s1771] sm:$0xf]
        %v1773 = vld [vmem:[%s1771 + $0x4] sm:$0xf]
        %v1776 = vunpack.c.l.b16 %v1772
        %v1777 = vunpack.c.l.b16 %v1773
        %v1778 = vpack.c.b16 %v1777, %v1776
        %v1783 = vunpack.c.l.b16 %v1764
        %v1784 = vunpack.c.h.b16 %v1764
        %v1785 = vunpack.c.l.b16 %v1765
        %v1786 = vunpack.c.l.b16 %v1766
        %v1787 = vunpack.c.h.b16 %v1766
        %v1788 = vunpack.c.l.b16 %v1767
        %v1789 = vpack.c.b16 %v1786, %v1783
        %v1790 = vpack.c.b16 %v1787, %v1784
        %v1791 = vpack.c.b16 %v1788, %v1785
        %1792 = vrot.lane.b32.xlu0 %v1789, 18
        %v1793 = vpop.permute.xlu0 %1792
        %1794 = vrot.lane.b32.xlu0 %v1790, 18
        %v1795 = vpop.permute.xlu0 %1794
        %1796 = vrot.lane.b32.xlu0 %v1791, 18
        %v1797 = vpop.permute.xlu0 %1796
        %vm1798 = vcmask 146432
        %v1799 = vsel %vm1798, %v1793, %v1795
        %v1800 = vsel %vm1798, %v1795, %v1797
        %vm1803 = vcmask 130048
        %v1805 = vsel %vm1803, %v1778, 0
        %1807 = vmatpush.bf16.msra.mxu0 0
        %1808 = vmatpush.bf16.msra.mxu0 0
        %1809 = vmatpush.bf16.msra.mxu0 0
        %1810 = vmatpush.bf16.msra.mxu0 0
        %1811 = vmatpush.bf16.msra.mxu0 0
        %1812 = vmatpush.bf16.msra.mxu0 0
        %1813 = vmatpush.bf16.msra.mxu0 0
        %1814 = vmatpush.bf16.msra.mxu0 %v1799
        %1815 = vmatmul.bf16.gmra.mxu0 %v1805
        %v1816 = vpop.f32.mrf.mxu0
        %v1817 = vadd.f32 0.0, %v1816
        %v1818 = vpop.f32.mrf.mxu0
        %v1819 = vadd.f32 0.0, %v1818
        %1820 = vdwg.mxu0
        %1821 = vmatpush.bf16.msra.mxu0 0
        %1822 = vmatpush.bf16.msra.mxu0 0
        %1823 = vmatpush.bf16.msra.mxu0 0
        %1824 = vmatpush.bf16.msra.mxu0 0
        %1825 = vmatpush.bf16.msra.mxu0 0
        %1826 = vmatpush.bf16.msra.mxu0 0
        %1827 = vmatpush.bf16.msra.mxu0 0
        %1828 = vmatpush.bf16.msra.mxu0 %v1800
        %1829 = vmatmul.bf16.gmra.mxu0 %v1805
        %v1830 = vpop.f32.mrf.mxu0
        %v1831 = vadd.f32 0.0, %v1830
        %v1832 = vpop.f32.mrf.mxu0
        %v1833 = vadd.f32 0.0, %v1832
        %1834 = vdwg.mxu0
        %v1837 = vunpack.c.l.b16 %v1769
        %v1838 = vunpack.c.l.b16 %v1770
        %v1839 = vpack.c.b16 %v1838, %v1837
        %1840 = vrot.lane.b32.xlu0 %v1789, 19
        %v1841 = vpop.permute.xlu0 %1840
        %1842 = vrot.lane.b32.xlu0 %v1790, 19
        %v1843 = vpop.permute.xlu0 %1842
        %1844 = vrot.lane.b32.xlu0 %v1791, 19
        %v1845 = vpop.permute.xlu0 %1844
        %vm1846 = vcmask 154624
        %v1847 = vsel %vm1846, %v1841, %v1843
        %v1848 = vsel %vm1846, %v1843, %v1845
        %v1852 = vsel %vm1803, %v1839, 0
        %1854 = vmatpush.bf16.msra.mxu0 0
        %1855 = vmatpush.bf16.msra.mxu0 0
        %1856 = vmatpush.bf16.msra.mxu0 0
        %1857 = vmatpush.bf16.msra.mxu0 0
        %1858 = vmatpush.bf16.msra.mxu0 0
        %1859 = vmatpush.bf16.msra.mxu0 0
        %1860 = vmatpush.bf16.msra.mxu0 0
        %1861 = vmatpush.bf16.msra.mxu0 %v1847
        %1862 = vmatmul.bf16.gmra.mxu0 %v1852
        %v1863 = vpop.f32.mrf.mxu0
        %v1864 = vadd.f32 %v1817, %v1863
        %v1865 = vpop.f32.mrf.mxu0
        %v1866 = vadd.f32 %v1819, %v1865
        %1867 = vdwg.mxu0
        %1868 = vmatpush.bf16.msra.mxu0 0
        %1869 = vmatpush.bf16.msra.mxu0 0
        %1870 = vmatpush.bf16.msra.mxu0 0
        %1871 = vmatpush.bf16.msra.mxu0 0
        %1872 = vmatpush.bf16.msra.mxu0 0
        %1873 = vmatpush.bf16.msra.mxu0 0
        %1874 = vmatpush.bf16.msra.mxu0 0
        %1875 = vmatpush.bf16.msra.mxu0 %v1848
        %1876 = vmatmul.bf16.gmra.mxu0 %v1852
        %v1877 = vpop.f32.mrf.mxu0
        %v1878 = vadd.f32 %v1831, %v1877
        %v1879 = vpop.f32.mrf.mxu0
        %v1880 = vadd.f32 %v1833, %v1879
        %1881 = vdwg.mxu0
        %s1882 = scalar_lea.vmem %s1, 304
        %v1883 = vld [vmem:[%s1882] sm:$0xf]
        %v1884 = vld [vmem:[%s1882 + $0x4] sm:$0xf]
        %v1887 = vunpack.c.l.b16 %v1883
        %v1888 = vunpack.c.l.b16 %v1884
        %v1889 = vpack.c.b16 %v1888, %v1887
        %1890 = vrot.lane.b32.xlu0 %v1789, 17
        %v1891 = vpop.permute.xlu0 %1890
        %1892 = vrot.lane.b32.xlu0 %v1790, 17
        %v1893 = vpop.permute.xlu0 %1892
        %1894 = vrot.lane.b32.xlu0 %v1791, 17
        %v1895 = vpop.permute.xlu0 %1894
        %vm1896 = vcmask 138240
        %v1897 = vsel %vm1896, %v1891, %v1893
        %v1898 = vsel %vm1896, %v1893, %v1895
        %v1902 = vsel %vm1803, %v1889, 0
        %1904 = vmatpush.bf16.msra.mxu0 0
        %1905 = vmatpush.bf16.msra.mxu0 0
        %1906 = vmatpush.bf16.msra.mxu0 0
        %1907 = vmatpush.bf16.msra.mxu0 0
        %1908 = vmatpush.bf16.msra.mxu0 0
        %1909 = vmatpush.bf16.msra.mxu0 0
        %1910 = vmatpush.bf16.msra.mxu0 0
        %1911 = vmatpush.bf16.msra.mxu0 %v1897
        %1912 = vmatmul.bf16.gmra.mxu0 %v1902
        %v1913 = vpop.f32.mrf.mxu0
        %v1914 = vadd.f32 0.0, %v1913
        %v1915 = vpop.f32.mrf.mxu0
        %v1916 = vadd.f32 0.0, %v1915
        %1917 = vdwg.mxu0
        %1918 = vmatpush.bf16.msra.mxu0 0
        %1919 = vmatpush.bf16.msra.mxu0 0
        %1920 = vmatpush.bf16.msra.mxu0 0
        %1921 = vmatpush.bf16.msra.mxu0 0
        %1922 = vmatpush.bf16.msra.mxu0 0
        %1923 = vmatpush.bf16.msra.mxu0 0
        %1924 = vmatpush.bf16.msra.mxu0 0
        %1925 = vmatpush.bf16.msra.mxu0 %v1898
        %1926 = vmatmul.bf16.gmra.mxu0 %v1902
        %v1927 = vpop.f32.mrf.mxu0
        %v1928 = vadd.f32 0.0, %v1927
        %v1929 = vpop.f32.mrf.mxu0
        %v1930 = vadd.f32 0.0, %v1929
        %1931 = vdwg.mxu0
        %v1932 = vadd.f32 %v1864, %v1914
        %v1933 = vadd.f32 %v1878, %v1928
        %v1934 = vadd.f32 %v1866, %v1916
        %v1935 = vadd.f32 %v1880, %v1930
        %s1936 = scalar_lea.vmem %s1, 312
        %v1937 = vld [vmem:[%s1936] sm:$0xf]
        %v1938 = vld [vmem:[%s1936 + $0x4] sm:$0xf]
        %v1941 = vunpack.c.l.b16 %v1937
        %v1942 = vunpack.c.l.b16 %v1938
        %v1943 = vpack.c.b16 %v1942, %v1941
        %1944 = vrot.lane.b32.xlu0 %v1789, 1
        %v1945 = vpop.permute.xlu0 %1944
        %1946 = vrot.lane.b32.xlu0 %v1790, 1
        %v1947 = vpop.permute.xlu0 %1946
        %1948 = vrot.lane.b32.xlu0 %v1791, 1
        %v1949 = vpop.permute.xlu0 %1948
        %vm1950 = vcmask 7168
        %v1951 = vsel %vm1950, %v1945, %v1947
        %v1952 = vsel %vm1950, %v1947, %v1949
        %v1956 = vsel %vm1803, %v1943, 0
        %1958 = vmatpush.bf16.msra.mxu0 0
        %1959 = vmatpush.bf16.msra.mxu0 0
        %1960 = vmatpush.bf16.msra.mxu0 0
        %1961 = vmatpush.bf16.msra.mxu0 0
        %1962 = vmatpush.bf16.msra.mxu0 0
        %1963 = vmatpush.bf16.msra.mxu0 0
        %1964 = vmatpush.bf16.msra.mxu0 0
        %1965 = vmatpush.bf16.msra.mxu0 %v1951
        %1966 = vmatmul.bf16.gmra.mxu0 %v1956
        %v1967 = vpop.f32.mrf.mxu0
        %v1968 = vadd.f32 0.0, %v1967
        %v1969 = vpop.f32.mrf.mxu0
        %v1970 = vadd.f32 0.0, %v1969
        %1971 = vdwg.mxu0
        %1972 = vmatpush.bf16.msra.mxu0 0
        %1973 = vmatpush.bf16.msra.mxu0 0
        %1974 = vmatpush.bf16.msra.mxu0 0
        %1975 = vmatpush.bf16.msra.mxu0 0
        %1976 = vmatpush.bf16.msra.mxu0 0
        %1977 = vmatpush.bf16.msra.mxu0 0
        %1978 = vmatpush.bf16.msra.mxu0 0
        %1979 = vmatpush.bf16.msra.mxu0 %v1952
        %1980 = vmatmul.bf16.gmra.mxu0 %v1956
        %v1981 = vpop.f32.mrf.mxu0
        %v1982 = vadd.f32 0.0, %v1981
        %v1983 = vpop.f32.mrf.mxu0
        %v1984 = vadd.f32 0.0, %v1983
        %1985 = vdwg.mxu0
        %v1986 = vadd.f32 %v1932, %v1968
        %v1987 = vadd.f32 %v1933, %v1982
        %v1988 = vadd.f32 %v1934, %v1970
        %v1989 = vadd.f32 %v1935, %v1984
        %v1990 = vld [vmem:[#allocation2 + $0x4] sm:$0xff]
        %v1991 = vld [vmem:[#allocation2 + $0x18] sm:$0xff]
        %s1992 = scalar_lea.vmem %s1, 320
        %v1993 = vld [vmem:[%s1992] sm:$0xf]
        %v1994 = vld [vmem:[%s1992 + $0x4] sm:$0xf]
        %v1997 = vunpack.c.l.b16 %v1993
        %v1998 = vunpack.c.l.b16 %v1994
        %v1999 = vpack.c.b16 %v1998, %v1997
        %v2002 = vunpack.c.l.b16 %v1990
        %v2003 = vunpack.c.h.b16 %v1990
        %v2004 = vunpack.c.l.b16 %v1991
        %v2005 = vunpack.c.h.b16 %v1991
        %v2006 = vpack.c.b16 %v2004, %v2002
        %v2007 = vpack.c.b16 %v2005, %v2003
        %v2011 = vsel %vm1803, %v1999, 0
        %2013 = vmatpush.bf16.msra.mxu0 0
        %2014 = vmatpush.bf16.msra.mxu0 0
        %2015 = vmatpush.bf16.msra.mxu0 0
        %2016 = vmatpush.bf16.msra.mxu0 0
        %2017 = vmatpush.bf16.msra.mxu0 0
        %2018 = vmatpush.bf16.msra.mxu0 0
        %2019 = vmatpush.bf16.msra.mxu0 0
        %2020 = vmatpush.bf16.msra.mxu0 %v2006
        %2021 = vmatmul.bf16.gmra.mxu0 %v2011
        %v2022 = vpop.f32.mrf.mxu0
        %v2023 = vadd.f32 0.0, %v2022
        %v2024 = vpop.f32.mrf.mxu0
        %v2025 = vadd.f32 0.0, %v2024
        %2026 = vdwg.mxu0
        %2027 = vmatpush.bf16.msra.mxu0 0
        %2028 = vmatpush.bf16.msra.mxu0 0
        %2029 = vmatpush.bf16.msra.mxu0 0
        %2030 = vmatpush.bf16.msra.mxu0 0
        %2031 = vmatpush.bf16.msra.mxu0 0
        %2032 = vmatpush.bf16.msra.mxu0 0
        %2033 = vmatpush.bf16.msra.mxu0 0
        %2034 = vmatpush.bf16.msra.mxu0 %v2007
        %2035 = vmatmul.bf16.gmra.mxu0 %v2011
        %v2036 = vpop.f32.mrf.mxu0
        %v2037 = vadd.f32 0.0, %v2036
        %v2038 = vpop.f32.mrf.mxu0
        %v2039 = vadd.f32 0.0, %v2038
        %2040 = vdwg.mxu0
        %v2041 = vadd.f32 %v1986, %v2023
        %v2042 = vadd.f32 %v1987, %v2037
        %v2043 = vadd.f32 %v1988, %v2025
        %v2044 = vadd.f32 %v1989, %v2039
        %v2045 = vld [vmem:[#allocation2 + $0xc] sm:$0xf]
        %v2046 = vld [vmem:[#allocation2 + $0x20] sm:$0xf]
        %s2047 = scalar_lea.vmem %s1, 328
        %v2048 = vld [vmem:[%s2047] sm:$0xf]
        %v2049 = vld [vmem:[%s2047 + $0x4] sm:$0xf]
        %v2052 = vunpack.c.l.b16 %v2048
        %v2053 = vunpack.c.l.b16 %v2049
        %v2054 = vpack.c.b16 %v2053, %v2052
        %v2057 = vunpack.c.l.b16 %v2045
        %v2058 = vunpack.c.l.b16 %v2046
        %v2059 = vpack.c.b16 %v2058, %v2057
        %2060 = vrot.lane.b32.xlu0 %v2006, 127
        %v2061 = vpop.permute.xlu0 %2060
        %2062 = vrot.lane.b32.xlu0 %v2007, 127
        %v2063 = vpop.permute.xlu0 %2062
        %2064 = vrot.lane.b32.xlu0 %v2059, 127
        %v2065 = vpop.permute.xlu0 %2064
        %vm2066 = vcmask 1039360
        %v2067 = vsel %vm2066, %v2061, %v2063
        %v2068 = vsel %vm2066, %v2063, %v2065
        %v2072 = vsel %vm1803, %v2054, 0
        %2074 = vmatpush.bf16.msra.mxu0 0
        %2075 = vmatpush.bf16.msra.mxu0 0
        %2076 = vmatpush.bf16.msra.mxu0 0
        %2077 = vmatpush.bf16.msra.mxu0 0
        %2078 = vmatpush.bf16.msra.mxu0 0
        %2079 = vmatpush.bf16.msra.mxu0 0
        %2080 = vmatpush.bf16.msra.mxu0 0
        %2081 = vmatpush.bf16.msra.mxu0 %v2067
        %2082 = vmatmul.bf16.gmra.mxu0 %v2072
        %v2083 = vpop.f32.mrf.mxu0
        %v2084 = vadd.f32 0.0, %v2083
        %v2085 = vpop.f32.mrf.mxu0
        %v2086 = vadd.f32 0.0, %v2085
        %2087 = vdwg.mxu0
        %2088 = vmatpush.bf16.msra.mxu0 0
        %2089 = vmatpush.bf16.msra.mxu0 0
        %2090 = vmatpush.bf16.msra.mxu0 0
        %2091 = vmatpush.bf16.msra.mxu0 0
        %2092 = vmatpush.bf16.msra.mxu0 0
        %2093 = vmatpush.bf16.msra.mxu0 0
        %2094 = vmatpush.bf16.msra.mxu0 0
        %2095 = vmatpush.bf16.msra.mxu0 %v2068
        %2096 = vmatmul.bf16.gmra.mxu0 %v2072
        %v2097 = vpop.f32.mrf.mxu0
        %v2098 = vadd.f32 0.0, %v2097
        %v2099 = vpop.f32.mrf.mxu0
        %v2100 = vadd.f32 0.0, %v2099
        %2101 = vdwg.mxu0
        %v2102 = vadd.f32 %v2041, %v2084
        %v2103 = vadd.f32 %v2042, %v2098
        %v2104 = vadd.f32 %v2043, %v2086
        %v2105 = vadd.f32 %v2044, %v2100
        %s2106 = scalar_lea.vmem %s1, 336
        %v2107 = vld [vmem:[%s2106] sm:$0xf]
        %v2108 = vld [vmem:[%s2106 + $0x4] sm:$0xf]
        %v2111 = vunpack.c.l.b16 %v2107
        %v2112 = vunpack.c.l.b16 %v2108
        %v2113 = vpack.c.b16 %v2112, %v2111
        %2114 = vrot.lane.b32.xlu0 %v2006, 111
        %v2115 = vpop.permute.xlu0 %2114
        %2116 = vrot.lane.b32.xlu0 %v2007, 111
        %v2117 = vpop.permute.xlu0 %2116
        %2118 = vrot.lane.b32.xlu0 %v2059, 111
        %v2119 = vpop.permute.xlu0 %2118
        %vm2120 = vcmask 908288
        %v2121 = vsel %vm2120, %v2115, %v2117
        %v2122 = vsel %vm2120, %v2117, %v2119
        %v2126 = vsel %vm1803, %v2113, 0
        %2128 = vmatpush.bf16.msra.mxu0 0
        %2129 = vmatpush.bf16.msra.mxu0 0
        %2130 = vmatpush.bf16.msra.mxu0 0
        %2131 = vmatpush.bf16.msra.mxu0 0
        %2132 = vmatpush.bf16.msra.mxu0 0
        %2133 = vmatpush.bf16.msra.mxu0 0
        %2134 = vmatpush.bf16.msra.mxu0 0
        %2135 = vmatpush.bf16.msra.mxu0 %v2121
        %2136 = vmatmul.bf16.gmra.mxu0 %v2126
        %v2137 = vpop.f32.mrf.mxu0
        %v2138 = vadd.f32 0.0, %v2137
        %v2139 = vpop.f32.mrf.mxu0
        %v2140 = vadd.f32 0.0, %v2139
        %2141 = vdwg.mxu0
        %2142 = vmatpush.bf16.msra.mxu0 0
        %2143 = vmatpush.bf16.msra.mxu0 0
        %2144 = vmatpush.bf16.msra.mxu0 0
        %2145 = vmatpush.bf16.msra.mxu0 0
        %2146 = vmatpush.bf16.msra.mxu0 0
        %2147 = vmatpush.bf16.msra.mxu0 0
        %2148 = vmatpush.bf16.msra.mxu0 0
        %2149 = vmatpush.bf16.msra.mxu0 %v2122
        %2150 = vmatmul.bf16.gmra.mxu0 %v2126
        %v2151 = vpop.f32.mrf.mxu0
        %v2152 = vadd.f32 0.0, %v2151
        %v2153 = vpop.f32.mrf.mxu0
        %v2154 = vadd.f32 0.0, %v2153
        %2155 = vdwg.mxu0
        %v2156 = vadd.f32 %v2102, %v2138
        %v2157 = vadd.f32 %v2103, %v2152
        %v2158 = vadd.f32 %v2104, %v2140
        %v2159 = vadd.f32 %v2105, %v2154
        %s2160 = scalar_lea.vmem %s1, 344
        %v2161 = vld [vmem:[%s2160] sm:$0xf]
        %v2162 = vld [vmem:[%s2160 + $0x4] sm:$0xf]
        %v2165 = vunpack.c.l.b16 %v2161
        %v2166 = vunpack.c.l.b16 %v2162
        %v2167 = vpack.c.b16 %v2166, %v2165
        %2168 = vrot.lane.b32.xlu0 %v2006, 110
        %v2169 = vpop.permute.xlu0 %2168
        %2170 = vrot.lane.b32.xlu0 %v2007, 110
        %v2171 = vpop.permute.xlu0 %2170
        %2172 = vrot.lane.b32.xlu0 %v2059, 110
        %v2173 = vpop.permute.xlu0 %2172
        %vm2174 = vcmask 900096
        %v2175 = vsel %vm2174, %v2169, %v2171
        %v2176 = vsel %vm2174, %v2171, %v2173
        %v2180 = vsel %vm1803, %v2167, 0
        %2182 = vmatpush.bf16.msra.mxu0 0
        %2183 = vmatpush.bf16.msra.mxu0 0
        %2184 = vmatpush.bf16.msra.mxu0 0
        %2185 = vmatpush.bf16.msra.mxu0 0
        %2186 = vmatpush.bf16.msra.mxu0 0
        %2187 = vmatpush.bf16.msra.mxu0 0
        %2188 = vmatpush.bf16.msra.mxu0 0
        %2189 = vmatpush.bf16.msra.mxu0 %v2175
        %2190 = vmatmul.bf16.gmra.mxu0 %v2180
        %v2191 = vpop.f32.mrf.mxu0
        %v2192 = vadd.f32 0.0, %v2191
        %v2193 = vpop.f32.mrf.mxu0
        %v2194 = vadd.f32 0.0, %v2193
        %2195 = vdwg.mxu0
        %2196 = vmatpush.bf16.msra.mxu0 0
        %2197 = vmatpush.bf16.msra.mxu0 0
        %2198 = vmatpush.bf16.msra.mxu0 0
        %2199 = vmatpush.bf16.msra.mxu0 0
        %2200 = vmatpush.bf16.msra.mxu0 0
        %2201 = vmatpush.bf16.msra.mxu0 0
        %2202 = vmatpush.bf16.msra.mxu0 0
        %2203 = vmatpush.bf16.msra.mxu0 %v2176
        %2204 = vmatmul.bf16.gmra.mxu0 %v2180
        %v2205 = vpop.f32.mrf.mxu0
        %v2206 = vadd.f32 0.0, %v2205
        %v2207 = vpop.f32.mrf.mxu0
        %v2208 = vadd.f32 0.0, %v2207
        %2209 = vdwg.mxu0
        %v2210 = vadd.f32 %v2156, %v2192
        %v2211 = vadd.f32 %v2157, %v2206
        %v2212 = vadd.f32 %v2158, %v2194
        %v2213 = vadd.f32 %v2159, %v2208
        %s2214 = scalar_lea.vmem %s1, 352
        %v2215 = vld [vmem:[%s2214] sm:$0xf]
        %v2216 = vld [vmem:[%s2214 + $0x4] sm:$0xf]
        %v2219 = vunpack.c.l.b16 %v2215
        %v2220 = vunpack.c.l.b16 %v2216
        %v2221 = vpack.c.b16 %v2220, %v2219
        %2222 = vrot.lane.b32.xlu0 %v2006, 109
        %v2223 = vpop.permute.xlu0 %2222
        %2224 = vrot.lane.b32.xlu0 %v2007, 109
        %v2225 = vpop.permute.xlu0 %2224
        %2226 = vrot.lane.b32.xlu0 %v2059, 109
        %v2227 = vpop.permute.xlu0 %2226
        %vm2228 = vcmask 891904
        %v2229 = vsel %vm2228, %v2223, %v2225
        %v2230 = vsel %vm2228, %v2225, %v2227
        %v2234 = vsel %vm1803, %v2221, 0
        %2236 = vmatpush.bf16.msra.mxu0 0
        %2237 = vmatpush.bf16.msra.mxu0 0
        %2238 = vmatpush.bf16.msra.mxu0 0
        %2239 = vmatpush.bf16.msra.mxu0 0
        %2240 = vmatpush.bf16.msra.mxu0 0
        %2241 = vmatpush.bf16.msra.mxu0 0
        %2242 = vmatpush.bf16.msra.mxu0 0
        %2243 = vmatpush.bf16.msra.mxu0 %v2229
        %2244 = vmatmul.bf16.gmra.mxu0 %v2234
        %v2245 = vpop.f32.mrf.mxu0
        %v2246 = vadd.f32 0.0, %v2245
        %v2247 = vpop.f32.mrf.mxu0
        %v2248 = vadd.f32 0.0, %v2247
        %2249 = vdwg.mxu0
        %2250 = vmatpush.bf16.msra.mxu0 0
        %2251 = vmatpush.bf16.msra.mxu0 0
        %2252 = vmatpush.bf16.msra.mxu0 0
        %2253 = vmatpush.bf16.msra.mxu0 0
        %2254 = vmatpush.bf16.msra.mxu0 0
        %2255 = vmatpush.bf16.msra.mxu0 0
        %2256 = vmatpush.bf16.msra.mxu0 0
        %2257 = vmatpush.bf16.msra.mxu0 %v2230
        %2258 = vmatmul.bf16.gmra.mxu0 %v2234
        %v2259 = vpop.f32.mrf.mxu0
        %v2260 = vadd.f32 0.0, %v2259
        %v2261 = vpop.f32.mrf.mxu0
        %v2262 = vadd.f32 0.0, %v2261
        %2263 = vdwg.mxu0
        %v2264 = vadd.f32 %v2210, %v2246
        %v2265 = vadd.f32 %v2211, %v2260
        %v2266 = vadd.f32 %v2212, %v2248
        %v2267 = vadd.f32 %v2213, %v2262
        %s2268 = scalar_lea.vmem %s2, 64
        %v2269 = vld [vmem:[%s2268] sm:$0xff]
        %v2270 = vld [vmem:[%s2268 + $0x8] sm:$0xff]
        %2272 = vset.pattern.permute.xlu0 0
        %2273 = vperm.xlu0 %2272, %v2269
        %v2274 = vpop.permute.xlu0 %2273
        %2277 = vset.pattern.permute.xlu0 0
        %2278 = vperm.xlu0 %2277, %v2270
        %v2279 = vpop.permute.xlu0 %2278
        %v2281 = vadd.f32 %v2264, %v2274
        %v2282 = vadd.f32 %v2265, %v2274
        %v2283 = vadd.f32 %v2266, %v2279
        %v2284 = vadd.f32 %v2267, %v2279
        %v2286 = vperm.slane %v253, 0
        %v2287 = vperm.slane %v253, 1
        %v2290 = vmul.f32 %v2281, %v2286
        %v2291 = vmul.f32 %v2282, %v2287
        %v2292 = vmul.f32 %v2283, %v2286
        %v2293 = vmul.f32 %v2284, %v2287
        %v2294 = vld [vmem:[%s236] sm:$0xff]
        %v2295 = vld [vmem:[%s236 + $0x8] sm:$0xff]
        %v2296 = vld [vmem:[%s236 + $0x18] sm:$0xff]
        %v2297 = vld [vmem:[%s236 + $0x20] sm:$0xff]
        %v2298 = vadd.f32 %v2290, %v2294
        %v2299 = vadd.f32 %v2291, %v2295
        %v2300 = vadd.f32 %v2292, %v2296
        %v2301 = vadd.f32 %v2293, %v2297
        %2306 = vrot.lane.b32.xlu0 %v2298, 38
        %v2307 = vpop.permute.xlu0 %2306
        %2308 = vrot.lane.b32.xlu0 %v2299, 38
        %v2309 = vpop.permute.xlu0 %2308
        %2310 = vrot.lane.b32.xlu0 %v2300, 38
        %v2311 = vpop.permute.xlu0 %2310
        %2312 = vrot.lane.b32.xlu0 %v2301, 38
        %v2313 = vpop.permute.xlu0 %2312
        %vm2314 = vcmask 310272
        %v2315 = vsel %vm2314, %v2307, %v2309
        %v2316 = vsel %vm2314, %v2311, %v2313
        %2321 = vst [vmem:[%s229] sm:$0xff] %v2315
        %2322 = vst.msk [vmem:[%s229 + $0x8] sm:$0xff] %vm1803, %v2309
        %2323 = vst [vmem:[%s229 + $0x10] sm:$0xff] %v2316
        %2324 = vst.msk [vmem:[%s229 + $0x18] sm:$0xff] %vm1803, %v2313
        %s2325 = sand.u32 %s140, 1
        %s2326 = scalar_lea.sflag [#allocation5], %s2325
        %s2327 = sand.u32 %s140, 1
        %s2328 = smul.addr %s2327, 32
        %s2329 = scalar_lea.vmem [#allocation4], %s2328
        // Predicated region
        $region44: #{tpu_custom_call.1} parent=35 // pred_check
          %p2330 = pneg %p150
        $region45: #{tpu_custom_call.1} parent=35 // pred_check_branch
          %2332 = sbr.rel (%p2330) target = $region47
        $region46: #{tpu_custom_call.1} parent=35 // pred_region
          %s2333 = smul.u32 %s22, 2
          %s2334 = sadd.s32 %s2333, %s23
          %2336 = vsyncadd %s2326, 0
          %s2337 = smul.addr %s2334, 4
          %s2338 = smul.addr %s2337, 8
          %s2339 = scalar_lea.hbm %s4, %s2338
          %s2340 = sshll.u32 %s2329, 4
          %s2341 = int_to_ptr.vmem [resolvable:$true] %s2340
          %s2342 = sshll.u32 %s2339, 4
          %s2343 = int_to_ptr.hbm [resolvable:$true] %s2342
          %2348 = dma.vmem_to_hbm [thread:$0]  %s2341, 512, %s2343, %s2326, 256, 256, 16
        $region47: #{tpu_custom_call.1} parent=35 // pred_fallthru
          _
      $region36: #{tpu_custom_call.1} parent=5 // pred_fallthru
        _
      %p2349 = scmp.le.s32.totalorder 2, %s13
      // Predicated region
      $region48: #{tpu_custom_call.1} parent=5 // pred_check
        %p2350 = pneg %p2349
      $region49: #{tpu_custom_call.1} parent=5 // pred_check_branch
        %2352 = sbr.rel (%p2350) target = $region51
      $region50: #{tpu_custom_call.1} parent=5 // pred_region
        %s2353 = ssub.s32 %s13, 2
        // Predicated region
        $region52: #{tpu_custom_call.1} parent=50 // pred_check
          %p2354 = pneg %p156
        $region53: #{tpu_custom_call.1} parent=50 // pred_check_branch
          %2356 = sbr.rel (%p2354) target = $region55
        $region54: #{tpu_custom_call.1} parent=50 // pred_region
          %s2357 = sand.u32 %s141, 1
          %s2358 = scalar_lea.sflag [#allocation5], %s2357
          %s2359 = sand.u32 %s141, 1
          %s2360 = smul.addr %s2359, 32
          %s2361 = scalar_lea.vmem [#allocation4], %s2360
          %2363 = dma.done %s2358, 512
        $region55: #{tpu_custom_call.1} parent=50 // pred_fallthru
          _
      $region51: #{tpu_custom_call.1} parent=5 // pred_fallthru
        _
    $region6: #{tpu_custom_call.1} parent=1 // loop_footer
      %s17 = sadd.s32 1, %s13
    $region7: #{tpu_custom_call.1} parent=1 // loop_footer_branch
      %12 = sbr.rel target = $region3
    $region8: #{tpu_custom_call.1} parent=1 // loop_exit
      _
    %2364 = vsyncpa [#allocation5], 1
    %s2365 = scalar_lea.sflag [#allocation5], 1
    %2366 = vsyncpa %s2365, 1

</llo_original>
